<compile_context>
chip_gen: v6e
topology: v6e:2x2x1
jax: 0.10.0
libtpu: 0.0.40
codegen_flags: <defaults>
</compile_context>

<pallas_src>
import functools

import jax
import jax.numpy as jnp
from jax.experimental import pallas as pl
from jax.experimental.pallas import tpu as pltpu

NSTATES = 2                # LavaScenario state dim
NTRVS = 2                  # ntrvs from the script
IN_DIM = NSTATES + NTRVS   # 4
IN_PAD = 8                 # padded input dim (row IN_DIM carries the constant 1 for b1)
HIDDEN = 512
OUT_DIM = 1
OUT_PAD = 8                # w3 row slab height (rows 1..7 are zeros)


def _elu(h):
    # ELU(alpha=1).  No clamp: jnp.where selects, so exp(h>0) overflowing to inf
    # in the unselected branch never propagates (no inf*0 / inf-inf pattern here).
    one = jnp.asarray(1.0, h.dtype)
    return jnp.where(h > 0, h, jnp.exp(h) - one)


@functools.lru_cache(maxsize=None)
def _get_kernel(ew_dtype_name):
    """Kernel specialized on the elementwise compute dtype (bf16 on v6e/v7x, f32 on v5e)."""
    ew_dtype = jnp.dtype(ew_dtype_name)

    def mine_kernel(xt_ref, w1t_ref, w2t_ref, b2_ref, w3_ref, b3_ref, o_ref):
        # Transposed layout: activations are [features, batch_tile] so batch sits
        # on the lane axis and the output block is lane-dense.

        # Layer 1 (+ folded b1): [512, 8]bf16 @ [8, BM]bf16 -> f32 acc on the MXU.
        # Row IN_DIM of xt is 1.0 and column IN_DIM of W1^T holds b1.
        h1 = jnp.dot(w1t_ref[...], xt_ref[...], preferred_element_type=jnp.float32)
        h1 = _elu(h1.astype(ew_dtype))

        # Layer 2: [512, 512]bf16 @ [512, BM]bf16 -> f32 acc on the MXU.
        h2 = jnp.dot(w2t_ref[...], h1.astype(jnp.bfloat16),
                     preferred_element_type=jnp.float32)
        h2 = _elu(h2.astype(ew_dtype) + b2_ref[...])     # b2 broadcast along lanes

        # Layer 3 (512 -> 1) on the MXU: (8, 512)bf16 @ (512, BM)bf16 -> (8, BM) f32;
        # w3 lives in row 0, rows 1..7 are zero padding (free on the MXU).
        out8 = jnp.dot(w3_ref[...], h2.astype(jnp.bfloat16),
                       preferred_element_type=jnp.float32)
        o_ref[...] = (out8[0:1, :] + b3_ref[0, 0]).astype(o_ref.dtype)

    return mine_kernel


def _default_ew_dtype():
    # bf16 VPU/EUP exists on v6e/v7x; keep f32 elementwise on v5e and older.
    try:
        kind = jax.devices()[0].device_kind.lower()
    except Exception:
        return jnp.dtype(jnp.float32)
    if any(tag in kind for tag in ("v2", "v3", "v4", "v5")):
        return jnp.dtype(jnp.float32)
    return jnp.dtype(jnp.bfloat16)


def prepare_params(params, *, ew_dtype=None):
    """One-time parameter prep (transpose / pad / cast / b1 fold). Cache the result
    in the training loop and pass it to mine_forward(prepared=...)."""
    if ew_dtype is None:
        ew_dtype = _default_ew_dtype()
    ew_dtype = jnp.dtype(ew_dtype)

    w1, b1, w2, b2, w3, b3 = params

    # W1^T padded to IN_PAD columns; b1 folded into the "ones" column.
    w1t = jnp.zeros((HIDDEN, IN_PAD), jnp.float32)
    w1t = w1t.at[:, :IN_DIM].set(w1.T)
    w1t = w1t.at[:, IN_DIM].set(b1)
    w1t = w1t.astype(jnp.bfloat16)                                 # [512, 8]  bf16

    w2t = w2.T.astype(jnp.bfloat16)                                # [512,512] bf16
    b2c = b2.reshape(HIDDEN, 1).astype(ew_dtype)                   # [512, 1]
    w3p = (jnp.zeros((OUT_PAD, HIDDEN), jnp.float32)
           .at[0, :].set(w3.reshape(HIDDEN)).astype(jnp.bfloat16)) # [8, 512]  bf16
    b3s = jnp.reshape(b3, (1, 1)).astype(jnp.float32)              # [1, 1] scalar (SMEM)

    return (w1t, w2t, b2c, w3p, b3s, ew_dtype)


def mine_forward(x, params=None, *, prepared=None, block_m=1024):
    """x: [B, 4] float32 -> [B, 1] float32 (matches nn.Sequential forward)."""
    assert x.ndim == 2 and x.shape[1] == IN_DIM, f"expected [B, {IN_DIM}] input"
    if prepared is None:
        assert params is not None, "pass raw params or prepared=prepare_params(params)"
        prepared = prepare_params(params)
    w1t, w2t, b2c, w3p, b3s, ew_dtype = prepared

    B = x.shape[0]
    # Clamp the tile so tiny batches are not padded all the way to block_m.
    # (For large B, block_m=1024 keeps nblk >= 2 so both v7x TensorCores get work;
    #  block_m is the sweep knob -- keep it a multiple of 128 and mind VMEM.)
    block_m = min(block_m, max(128, ((B + 127) // 128) * 128))
    assert block_m % 128 == 0 and block_m >= 128

    nblk = pl.cdiv(B, block_m)
    b_pad = nblk * block_m

    # Stage x^T in bf16: features on sublanes, batch on lanes; row IN_DIM = 1.0
    # (multiplies the folded b1 column of W1^T); remaining pad rows stay zero.
    xt = jnp.zeros((IN_PAD, b_pad), jnp.bfloat16)
    xt = xt.at[:IN_DIM, :B].set(x.T.astype(jnp.bfloat16))
    xt = xt.at[IN_DIM, :].set(1.0)

    kernel = _get_kernel(ew_dtype.name)

    out = pl.pallas_call(
        kernel,
        out_shape=jax.ShapeDtypeStruct((1, b_pad), jnp.float32),
        grid_spec=pltpu.PrefetchScalarGridSpec(
            num_scalar_prefetch=0,
            grid=(nblk,),
            in_specs=[
                pl.BlockSpec((IN_PAD, block_m), lambda i: (0, i)),    # x^T tile (+ ones row)
                pl.BlockSpec((HIDDEN, IN_PAD), lambda i: (0, 0)),     # W1^T (b1 folded)
                pl.BlockSpec((HIDDEN, HIDDEN), lambda i: (0, 0)),     # W2^T
                pl.BlockSpec((HIDDEN, 1), lambda i: (0, 0)),          # b2 column
                pl.BlockSpec((OUT_PAD, HIDDEN), lambda i: (0, 0)),    # w3 row slab
                pl.BlockSpec(memory_space=pltpu.MemorySpace.SMEM),    # b3 scalar
            ],
            out_specs=pl.BlockSpec((1, block_m), lambda i: (0, i)),   # lane-dense output
        ),
        compiler_params=pltpu.CompilerParams(
            dimension_semantics=("parallel",),
            vmem_limit_bytes=32 * 1024 * 1024,
        ),
    )(xt, w1t, w2t, b2c, w3p, b3s)

    return out[0, :B].reshape(B, OUT_DIM)


def init_params(key):
    """Deterministic init mimicking PyTorch nn.Linear default U[-1/sqrt(fan_in), 1/sqrt(fan_in)]."""
    ks = jax.random.split(key, 6)

    def lin(kw, kb, fan_in, fan_out):
        bound = 1.0 / (fan_in ** 0.5)
        w = jax.random.uniform(kw, (fan_in, fan_out), jnp.float32, -bound, bound)
        b = jax.random.uniform(kb, (fan_out,), jnp.float32, -bound, bound)
        return w, b

    w1, b1 = lin(ks[0], ks[1], IN_DIM, HIDDEN)
    w2, b2 = lin(ks[2], ks[3], HIDDEN, HIDDEN)
    w3, b3 = lin(ks[4], ks[5], HIDDEN, OUT_DIM)
    return (w1, b1, w2, b2, w3, b3)


def mine_forward_ref(x, params):
    w1, b1, w2, b2, w3, b3 = params

    def elu(h):
        return jnp.where(h > 0, h, jnp.exp(h) - 1.0)

    h1 = elu(x @ w1 + b1)
    h2 = elu(h1 @ w2 + b2)
    return h2 @ w3 + b3


if __name__ == "__main__":
    key = jax.random.PRNGKey(0)
    kx, kp = jax.random.split(key)

    batch = 300   # not a multiple of 128: exercises the batch padding path
    x = jax.random.normal(kx, (batch, IN_DIM), jnp.float32)
    params = init_params(kp)

    # Weight prep hoisted out of the forward call (cache this in a training loop).
    prepared = prepare_params(params)

    out = jax.block_until_ready(mine_forward(x, prepared=prepared, block_m=1024))

    ref = mine_forward_ref(x, params)
    assert out.shape == (batch, OUT_DIM)
    max_err = float(jnp.max(jnp.abs(out - ref)))
    # bf16 MXU inputs, folded bf16 b1 and (on v6e/v7x) bf16 elementwise math
    # -> loosened tolerance vs the f32 reference.
    assert jnp.allclose(out, ref, atol=2e-2, rtol=2e-2), f"mismatch vs reference: {max_err}"

    print("KERNEL_OK")
</pallas_src>

<mosaic_0001>
module attributes {stable_mosaic.version = 11 : i64} {
  func.func @mine_kernel(%arg0: i32, %arg1: memref<8x384xbf16, #tpu.memory_space<vmem>>, %arg2: memref<512x8xbf16, #tpu.memory_space<vmem>>, %arg3: memref<512x512xbf16, #tpu.memory_space<vmem>>, %arg4: memref<512x1xbf16, #tpu.memory_space<vmem>>, %arg5: memref<8x512xbf16, #tpu.memory_space<vmem>>, %arg6: memref<1x1xf32, #tpu.memory_space<smem>>, %arg7: memref<1x384xf32, #tpu.memory_space<vmem>>) attributes {dimension_semantics = [#tpu.dimension_semantics<parallel>], iteration_bounds = array<i64: 1>, scalar_prefetch = 0 : i64, scratch_operands = 0 : i64, tpu.core_type = #tpu.core_type<tc>, window_params = [{transform_indices = @transform_0, window_bounds = array<i64: 8, 384>}, {pipeline_mode = #tpu.pipeline_mode<synchronous>, transform_indices = @transform_1, window_bounds = array<i64: 512, 8>}, {pipeline_mode = #tpu.pipeline_mode<synchronous>, transform_indices = @transform_2, window_bounds = array<i64: 512, 512>}, {pipeline_mode = #tpu.pipeline_mode<synchronous>, transform_indices = @transform_3, window_bounds = array<i64: 512, 1>}, {pipeline_mode = #tpu.pipeline_mode<synchronous>, transform_indices = @transform_4, window_bounds = array<i64: 8, 512>}, {transform_indices = @transform_5, window_bounds = array<i64: 1, 1>}, {transform_indices = @transform_6, window_bounds = array<i64: 1, 384>}]} {
    %c0 = arith.constant 0 : index
    %c0_0 = arith.constant 0 : index
    %0 = vector.load %arg2[%c0, %c0_0] : memref<512x8xbf16, #tpu.memory_space<vmem>>, vector<512x8xbf16>
    %c0_1 = arith.constant 0 : index
    %c0_2 = arith.constant 0 : index
    %1 = vector.load %arg1[%c0_1, %c0_2] : memref<8x384xbf16, #tpu.memory_space<vmem>>, vector<8x384xbf16>
    %cst = arith.constant dense<0.000000e+00> : vector<512x384xf32>
    %2 = tpu.matmul %0, %1, %cst {dimension_numbers = #tpu.dot_dimension_numbers<[1], [0], [0], [1], [0, 0, 1, 1], [], []>} : vector<512x8xbf16>, vector<8x384xbf16>, vector<512x384xf32> -> vector<512x384xf32>
    %3 = arith.truncf %2 : vector<512x384xf32> to vector<512x384xbf16>
    %cst_3 = arith.constant 0.000000e+00 : bf16
    %4 = vector.broadcast %cst_3 : bf16 to vector<512x384xbf16>
    %5 = arith.cmpf ogt, %3, %4 : vector<512x384xbf16>
    %6 = math.exp %3 : vector<512x384xbf16>
    %cst_4 = arith.constant 1.000000e+00 : bf16
    %7 = vector.broadcast %cst_4 : bf16 to vector<512x384xbf16>
    %8 = arith.subf %6, %7 : vector<512x384xbf16>
    %9 = arith.select %5, %3, %8 : vector<512x384xi1>, vector<512x384xbf16>
    %c0_5 = arith.constant 0 : index
    %c0_6 = arith.constant 0 : index
    %10 = vector.load %arg3[%c0_5, %c0_6] : memref<512x512xbf16, #tpu.memory_space<vmem>>, vector<512x512xbf16>
    %cst_7 = arith.constant dense<0.000000e+00> : vector<512x384xf32>
    %11 = tpu.matmul %10, %9, %cst_7 {dimension_numbers = #tpu.dot_dimension_numbers<[1], [0], [0], [1], [0, 0, 1, 1], [], []>} : vector<512x512xbf16>, vector<512x384xbf16>, vector<512x384xf32> -> vector<512x384xf32>
    %12 = arith.truncf %11 : vector<512x384xf32> to vector<512x384xbf16>
    %c0_8 = arith.constant 0 : index
    %c0_9 = arith.constant 0 : index
    %13 = vector.load %arg4[%c0_8, %c0_9] : memref<512x1xbf16, #tpu.memory_space<vmem>>, vector<512x1xbf16>
    %14 = vector.broadcast %13 : vector<512x1xbf16> to vector<512x384xbf16>
    %15 = arith.addf %12, %14 : vector<512x384xbf16>
    %cst_10 = arith.constant 0.000000e+00 : bf16
    %16 = vector.broadcast %cst_10 : bf16 to vector<512x384xbf16>
    %17 = arith.cmpf ogt, %15, %16 : vector<512x384xbf16>
    %18 = math.exp %15 : vector<512x384xbf16>
    %cst_11 = arith.constant 1.000000e+00 : bf16
    %19 = vector.broadcast %cst_11 : bf16 to vector<512x384xbf16>
    %20 = arith.subf %18, %19 : vector<512x384xbf16>
    %21 = arith.select %17, %15, %20 : vector<512x384xi1>, vector<512x384xbf16>
    %c0_12 = arith.constant 0 : index
    %c0_13 = arith.constant 0 : index
    %22 = vector.load %arg5[%c0_12, %c0_13] : memref<8x512xbf16, #tpu.memory_space<vmem>>, vector<8x512xbf16>
    %cst_14 = arith.constant dense<0.000000e+00> : vector<8x384xf32>
    %23 = tpu.matmul %22, %21, %cst_14 {dimension_numbers = #tpu.dot_dimension_numbers<[1], [0], [0], [1], [0, 0, 1, 1], [], []>} : vector<8x512xbf16>, vector<512x384xbf16>, vector<8x384xf32> -> vector<8x384xf32>
    %24 = vector.extract_strided_slice %23 {offsets = [0, 0], sizes = [1, 384], strides = [1, 1]} : vector<8x384xf32> to vector<1x384xf32>
    %c0_15 = arith.constant 0 : index
    %c0_16 = arith.constant 0 : index
    %25 = memref.load %arg6[%c0_15, %c0_16] : memref<1x1xf32, #tpu.memory_space<smem>>
    %26 = vector.broadcast %25 : f32 to vector<1x384xf32>
    %27 = arith.addf %24, %26 : vector<1x384xf32>
    %c0_17 = arith.constant 0 : index
    %c0_18 = arith.constant 0 : index
    %28 = vector.load %arg7[%c0_17, %c0_18] : memref<1x384xf32, #tpu.memory_space<vmem>>, vector<1x384xf32>
    tpu.vector_store %arg7[%c0_17, %c0_18], %27 {strides = array<i32>} : memref<1x384xf32, #tpu.memory_space<vmem>>, vector<1x384xf32>,
    return
  }
  func.func @transform_0(%arg0: i32) -> (i32, i32) {
    %c0_i32 = arith.constant 0 : i32
    %c0_i32_0 = arith.constant 0 : i32
    return %c0_i32, %arg0 : i32, i32
  }
  func.func @transform_1(%arg0: i32) -> (i32, i32) {
    %c0_i32 = arith.constant 0 : i32
    %c0_i32_0 = arith.constant 0 : i32
    %c0_i32_1 = arith.constant 0 : i32
    return %c0_i32, %c0_i32_0 : i32, i32
  }
  func.func @transform_2(%arg0: i32) -> (i32, i32) {
    %c0_i32 = arith.constant 0 : i32
    %c0_i32_0 = arith.constant 0 : i32
    %c0_i32_1 = arith.constant 0 : i32
    return %c0_i32, %c0_i32_0 : i32, i32
  }
  func.func @transform_3(%arg0: i32) -> (i32, i32) {
    %c0_i32 = arith.constant 0 : i32
    %c0_i32_0 = arith.constant 0 : i32
    %c0_i32_1 = arith.constant 0 : i32
    return %c0_i32, %c0_i32_0 : i32, i32
  }
  func.func @transform_4(%arg0: i32) -> (i32, i32) {
    %c0_i32 = arith.constant 0 : i32
    %c0_i32_0 = arith.constant 0 : i32
    %c0_i32_1 = arith.constant 0 : i32
    return %c0_i32, %c0_i32_0 : i32, i32
  }
  func.func @transform_5(%arg0: i32) -> (i32, i32) {
    %c0_i32 = arith.constant 0 : i32
    %c0_i32_0 = arith.constant 0 : i32
    %c0_i32_1 = arith.constant 0 : i32
    return %c0_i32, %c0_i32_0 : i32, i32
  }
  func.func @transform_6(%arg0: i32) -> (i32, i32) {
    %c0_i32 = arith.constant 0 : i32
    %c0_i32_0 = arith.constant 0 : i32
    return %c0_i32, %arg0 : i32, i32
  }
}

</mosaic_0001>

<llo_original>
// kernel: tpu_custom_call.1
$region0: #{tpu_custom_call.1}
  #allocation0 [shape = 'u32[]', space=smem, size = 0x4, offset = 0x4, fixed_abs, tag = 'smem constant byte address 0x4 - core index']
  #allocation1 [shape = 'u32[144,128]{1,0:T(1,128)}', space=vmem, size = 0x12000, scoped, tag = 'internal scratch']
  #allocation2 [shape = 'f32[1,1]{1,0:T(1,128)S(6)}', space=smem, size = 0x200, scoped, tag = 'scoped memory for tpu_custom_call.1']
  %s0 = inlined_call_operand.vmem [shape: bf16[8,384], index: 0, kind: input, shape index: {}]
  %s1 = inlined_call_operand.vmem [shape: bf16[512,8], index: 1, kind: input, shape index: {}]
  %s2 = inlined_call_operand.hbm [shape: bf16[512,512], index: 2, kind: input, shape index: {}]
  %s3 = inlined_call_operand.vmem [shape: bf16[512,1], index: 3, kind: input, shape index: {}]
  %s4 = inlined_call_operand.vmem [shape: bf16[8,512], index: 4, kind: input, shape index: {}]
  %s5 = inlined_call_operand.<no memory space> [shape: f32[1,1], index: 5, kind: input, shape index: {}]
  %s6 = inlined_call_operand.hbm [shape: f32[1,384], index: 6, kind: output, shape index: {}]
  %s7 = sld [smem:[#allocation0]]
  $region38: #{tpu_custom_call.1} parent=0
    _
  %s9 = ssub.s32 1, %s7
  %s10 = scalar_select 0, %s9, %s7
  %11 = sst [smem:[#allocation2]] %s5
  $region1: #{tpu_custom_call.1} parent=0
    #allocation3 [shape = 'u8[524288]{0}', space=vmem, size = 0x80000, scoped, tag = 'input window, operand 2, single buffered']
    #allocation4 [shape = 's32[1]{0}', space=sflag, size = 0x4, scoped, tag = 'scoped memory for tpu_custom_call.1']
    #allocation5 [shape = 's32[1]{0}', space=sflag, size = 0x4, scoped, tag = 'scoped memory for tpu_custom_call.1']
    #allocation6 [shape = 'u8[1536]{0}', space=vmem, size = 0x800, scoped, tag = 'output window, operand 0, single buffered']
    %12 = vsyncpa [#allocation4], 0
    %13 = vsyncpa [#allocation5], 0
    // Predicated region
    $region2: #{tpu_custom_call.1} parent=1 // pred_check
      _
    $region3: #{tpu_custom_call.1} parent=1 // pred_check_branch
      %15 = sbr.rel (0) target = $region5
    $region4: #{tpu_custom_call.1} parent=1 // pred_region
      _
    $region5: #{tpu_custom_call.1} parent=1 // pred_fallthru
      _
    // Predicated region
    $region6: #{tpu_custom_call.1} parent=1 // pred_check
      _
    $region7: #{tpu_custom_call.1} parent=1 // pred_check_branch
      %17 = sbr.rel (0) target = $region9
    $region8: #{tpu_custom_call.1} parent=1 // pred_region
      _
    $region9: #{tpu_custom_call.1} parent=1 // pred_fallthru
      _
    // Predicated region
    $region10: #{tpu_custom_call.1} parent=1 // pred_check
      _
    $region11: #{tpu_custom_call.1} parent=1 // pred_check_branch
      %19 = sbr.rel (0) target = $region13
    $region12: #{tpu_custom_call.1} parent=1 // pred_region
      %s21 = ssub.s32 16384, 16384
      %22 = vsyncadd [#allocation4], %s21
      %s23 = sshll.u32 [#allocation3], 4
      %s24 = int_to_ptr.vmem [resolvable:$true] %s23
      %29 = dma.hbm_to_vmem [thread:$0]  %s2, 16384, %s24, [#allocation4], 256, 256, 16
    $region13: #{tpu_custom_call.1} parent=1 // pred_fallthru
      _
    // Predicated region
    $region14: #{tpu_custom_call.1} parent=1 // pred_check
      _
    $region15: #{tpu_custom_call.1} parent=1 // pred_check_branch
      %31 = sbr.rel (0) target = $region17
    $region16: #{tpu_custom_call.1} parent=1 // pred_region
      _
    $region17: #{tpu_custom_call.1} parent=1 // pred_fallthru
      _
    // Predicated region
    $region18: #{tpu_custom_call.1} parent=1 // pred_check
      _
    $region19: #{tpu_custom_call.1} parent=1 // pred_check_branch
      %33 = sbr.rel (0) target = $region21
    $region20: #{tpu_custom_call.1} parent=1 // pred_region
      _
    $region21: #{tpu_custom_call.1} parent=1 // pred_fallthru
      _
    // Predicated region
    $region22: #{tpu_custom_call.1} parent=1 // pred_check
      _
    $region23: #{tpu_custom_call.1} parent=1 // pred_check_branch
      %35 = sbr.rel (0) target = $region25
    $region24: #{tpu_custom_call.1} parent=1 // pred_region
      _
    $region25: #{tpu_custom_call.1} parent=1 // pred_fallthru
      _
    // Predicated region
    $region26: #{tpu_custom_call.1} parent=1 // pred_check
      _
    $region27: #{tpu_custom_call.1} parent=1 // pred_check_branch
      %37 = sbr.rel (0) target = $region29
    $region28: #{tpu_custom_call.1} parent=1 // pred_region
      %38 = dma.done [#allocation4], 16384
    $region29: #{tpu_custom_call.1} parent=1 // pred_fallthru
      _
    %v41 = vld [vmem:[%s1] sm:$0xf]
    %v42 = vld [vmem:[%s1 + $0x4] sm:$0xf]
    %v43 = vld [vmem:[%s1 + $0x8] sm:$0xf]
    %v44 = vld [vmem:[%s1 + $0xc] sm:$0xf]
    %v45 = vld [vmem:[%s1 + $0x10] sm:$0xf]
    %v46 = vld [vmem:[%s1 + $0x14] sm:$0xf]
    %v47 = vld [vmem:[%s1 + $0x18] sm:$0xf]
    %v48 = vld [vmem:[%s1 + $0x1c] sm:$0xf]
    %v49 = vld [vmem:[%s1 + $0x20] sm:$0xf]
    %v50 = vld [vmem:[%s1 + $0x24] sm:$0xf]
    %v51 = vld [vmem:[%s1 + $0x28] sm:$0xf]
    %v52 = vld [vmem:[%s1 + $0x2c] sm:$0xf]
    %v53 = vld [vmem:[%s1 + $0x30] sm:$0xf]
    %v54 = vld [vmem:[%s1 + $0x34] sm:$0xf]
    %v55 = vld [vmem:[%s1 + $0x38] sm:$0xf]
    %v56 = vld [vmem:[%s1 + $0x3c] sm:$0xf]
    %v57 = vld [vmem:[%s1 + $0x40] sm:$0xf]
    %v58 = vld [vmem:[%s1 + $0x44] sm:$0xf]
    %v59 = vld [vmem:[%s1 + $0x48] sm:$0xf]
    %v60 = vld [vmem:[%s1 + $0x4c] sm:$0xf]
    %v61 = vld [vmem:[%s1 + $0x50] sm:$0xf]
    %v62 = vld [vmem:[%s1 + $0x54] sm:$0xf]
    %v63 = vld [vmem:[%s1 + $0x58] sm:$0xf]
    %v64 = vld [vmem:[%s1 + $0x5c] sm:$0xf]
    %v65 = vld [vmem:[%s1 + $0x60] sm:$0xf]
    %v66 = vld [vmem:[%s1 + $0x64] sm:$0xf]
    %v67 = vld [vmem:[%s1 + $0x68] sm:$0xf]
    %v68 = vld [vmem:[%s1 + $0x6c] sm:$0xf]
    %v69 = vld [vmem:[%s1 + $0x70] sm:$0xf]
    %v70 = vld [vmem:[%s1 + $0x74] sm:$0xf]
    %v71 = vld [vmem:[%s1 + $0x78] sm:$0xf]
    %v72 = vld [vmem:[%s1 + $0x7c] sm:$0xf]
    %v73 = vld [vmem:[%s1 + $0x80] sm:$0xf]
    %v74 = vld [vmem:[%s1 + $0x84] sm:$0xf]
    %v75 = vld [vmem:[%s1 + $0x88] sm:$0xf]
    %v76 = vld [vmem:[%s1 + $0x8c] sm:$0xf]
    %v77 = vld [vmem:[%s1 + $0x90] sm:$0xf]
    %v78 = vld [vmem:[%s1 + $0x94] sm:$0xf]
    %v79 = vld [vmem:[%s1 + $0x98] sm:$0xf]
    %v80 = vld [vmem:[%s1 + $0x9c] sm:$0xf]
    %v81 = vld [vmem:[%s1 + $0xa0] sm:$0xf]
    %v82 = vld [vmem:[%s1 + $0xa4] sm:$0xf]
    %v83 = vld [vmem:[%s1 + $0xa8] sm:$0xf]
    %v84 = vld [vmem:[%s1 + $0xac] sm:$0xf]
    %v85 = vld [vmem:[%s1 + $0xb0] sm:$0xf]
    %v86 = vld [vmem:[%s1 + $0xb4] sm:$0xf]
    %v87 = vld [vmem:[%s1 + $0xb8] sm:$0xf]
    %v88 = vld [vmem:[%s1 + $0xbc] sm:$0xf]
    %v89 = vld [vmem:[%s1 + $0xc0] sm:$0xf]
    %v90 = vld [vmem:[%s1 + $0xc4] sm:$0xf]
    %v91 = vld [vmem:[%s1 + $0xc8] sm:$0xf]
    %v92 = vld [vmem:[%s1 + $0xcc] sm:$0xf]
    %v93 = vld [vmem:[%s1 + $0xd0] sm:$0xf]
    %v94 = vld [vmem:[%s1 + $0xd4] sm:$0xf]
    %v95 = vld [vmem:[%s1 + $0xd8] sm:$0xf]
    %v96 = vld [vmem:[%s1 + $0xdc] sm:$0xf]
    %v97 = vld [vmem:[%s1 + $0xe0] sm:$0xf]
    %v98 = vld [vmem:[%s1 + $0xe4] sm:$0xf]
    %v99 = vld [vmem:[%s1 + $0xe8] sm:$0xf]
    %v100 = vld [vmem:[%s1 + $0xec] sm:$0xf]
    %v101 = vld [vmem:[%s1 + $0xf0] sm:$0xf]
    %v102 = vld [vmem:[%s1 + $0xf4] sm:$0xf]
    %v103 = vld [vmem:[%s1 + $0xf8] sm:$0xf]
    %v104 = vld [vmem:[%s1 + $0xfc] sm:$0xf]
    %v105 = vld [vmem:[%s0] sm:$0xff]
    %v106 = vld [vmem:[%s0 + $0x8] sm:$0xf]
    %v171 = vunpack.c.l.b16 %v41
    %v172 = vunpack.c.l.b16 %v42
    %v173 = vunpack.c.l.b16 %v43
    %v174 = vunpack.c.l.b16 %v44
    %v175 = vunpack.c.l.b16 %v45
    %v176 = vunpack.c.l.b16 %v46
    %v177 = vunpack.c.l.b16 %v47
    %v178 = vunpack.c.l.b16 %v48
    %v179 = vunpack.c.l.b16 %v49
    %v180 = vunpack.c.l.b16 %v50
    %v181 = vunpack.c.l.b16 %v51
    %v182 = vunpack.c.l.b16 %v52
    %v183 = vunpack.c.l.b16 %v53
    %v184 = vunpack.c.l.b16 %v54
    %v185 = vunpack.c.l.b16 %v55
    %v186 = vunpack.c.l.b16 %v56
    %v187 = vunpack.c.l.b16 %v57
    %v188 = vunpack.c.l.b16 %v58
    %v189 = vunpack.c.l.b16 %v59
    %v190 = vunpack.c.l.b16 %v60
    %v191 = vunpack.c.l.b16 %v61
    %v192 = vunpack.c.l.b16 %v62
    %v193 = vunpack.c.l.b16 %v63
    %v194 = vunpack.c.l.b16 %v64
    %v195 = vunpack.c.l.b16 %v65
    %v196 = vunpack.c.l.b16 %v66
    %v197 = vunpack.c.l.b16 %v67
    %v198 = vunpack.c.l.b16 %v68
    %v199 = vunpack.c.l.b16 %v69
    %v200 = vunpack.c.l.b16 %v70
    %v201 = vunpack.c.l.b16 %v71
    %v202 = vunpack.c.l.b16 %v72
    %v203 = vunpack.c.l.b16 %v73
    %v204 = vunpack.c.l.b16 %v74
    %v205 = vunpack.c.l.b16 %v75
    %v206 = vunpack.c.l.b16 %v76
    %v207 = vunpack.c.l.b16 %v77
    %v208 = vunpack.c.l.b16 %v78
    %v209 = vunpack.c.l.b16 %v79
    %v210 = vunpack.c.l.b16 %v80
    %v211 = vunpack.c.l.b16 %v81
    %v212 = vunpack.c.l.b16 %v82
    %v213 = vunpack.c.l.b16 %v83
    %v214 = vunpack.c.l.b16 %v84
    %v215 = vunpack.c.l.b16 %v85
    %v216 = vunpack.c.l.b16 %v86
    %v217 = vunpack.c.l.b16 %v87
    %v218 = vunpack.c.l.b16 %v88
    %v219 = vunpack.c.l.b16 %v89
    %v220 = vunpack.c.l.b16 %v90
    %v221 = vunpack.c.l.b16 %v91
    %v222 = vunpack.c.l.b16 %v92
    %v223 = vunpack.c.l.b16 %v93
    %v224 = vunpack.c.l.b16 %v94
    %v225 = vunpack.c.l.b16 %v95
    %v226 = vunpack.c.l.b16 %v96
    %v227 = vunpack.c.l.b16 %v97
    %v228 = vunpack.c.l.b16 %v98
    %v229 = vunpack.c.l.b16 %v99
    %v230 = vunpack.c.l.b16 %v100
    %v231 = vunpack.c.l.b16 %v101
    %v232 = vunpack.c.l.b16 %v102
    %v233 = vunpack.c.l.b16 %v103
    %v234 = vunpack.c.l.b16 %v104
    %v235 = vpack.c.b16 %v172, %v171
    %v236 = vpack.c.b16 %v174, %v173
    %v237 = vpack.c.b16 %v176, %v175
    %v238 = vpack.c.b16 %v178, %v177
    %v239 = vpack.c.b16 %v180, %v179
    %v240 = vpack.c.b16 %v182, %v181
    %v241 = vpack.c.b16 %v184, %v183
    %v242 = vpack.c.b16 %v186, %v185
    %v243 = vpack.c.b16 %v188, %v187
    %v244 = vpack.c.b16 %v190, %v189
    %v245 = vpack.c.b16 %v192, %v191
    %v246 = vpack.c.b16 %v194, %v193
    %v247 = vpack.c.b16 %v196, %v195
    %v248 = vpack.c.b16 %v198, %v197
    %v249 = vpack.c.b16 %v200, %v199
    %v250 = vpack.c.b16 %v202, %v201
    %v251 = vpack.c.b16 %v204, %v203
    %v252 = vpack.c.b16 %v206, %v205
    %v253 = vpack.c.b16 %v208, %v207
    %v254 = vpack.c.b16 %v210, %v209
    %v255 = vpack.c.b16 %v212, %v211
    %v256 = vpack.c.b16 %v214, %v213
    %v257 = vpack.c.b16 %v216, %v215
    %v258 = vpack.c.b16 %v218, %v217
    %v259 = vpack.c.b16 %v220, %v219
    %v260 = vpack.c.b16 %v222, %v221
    %v261 = vpack.c.b16 %v224, %v223
    %v262 = vpack.c.b16 %v226, %v225
    %v263 = vpack.c.b16 %v228, %v227
    %v264 = vpack.c.b16 %v230, %v229
    %v265 = vpack.c.b16 %v232, %v231
    %v266 = vpack.c.b16 %v234, %v233
    %v269 = vunpack.c.l.b16 %v105
    %v270 = vunpack.c.h.b16 %v105
    %v271 = vunpack.c.l.b16 %v106
    %v272 = vpack.c.b16 %v269, %v269
    %v273 = vpack.c.b16 %v270, %v270
    %v274 = vpack.c.b16 %v271, %v271
    %vm275 = vcmask 64512
    %v277 = vsel %vm275, %v235, 0
    %v280 = vsel %vm275, %v236, 0
    %v283 = vsel %vm275, %v237, 0
    %v286 = vsel %vm275, %v238, 0
    %v289 = vsel %vm275, %v239, 0
    %v292 = vsel %vm275, %v240, 0
    %v295 = vsel %vm275, %v241, 0
    %v298 = vsel %vm275, %v242, 0
    %v301 = vsel %vm275, %v243, 0
    %v304 = vsel %vm275, %v244, 0
    %v307 = vsel %vm275, %v245, 0
    %v310 = vsel %vm275, %v246, 0
    %v313 = vsel %vm275, %v247, 0
    %v316 = vsel %vm275, %v248, 0
    %v319 = vsel %vm275, %v249, 0
    %v322 = vsel %vm275, %v250, 0
    %v325 = vsel %vm275, %v251, 0
    %v328 = vsel %vm275, %v252, 0
    %v331 = vsel %vm275, %v253, 0
    %v334 = vsel %vm275, %v254, 0
    %v337 = vsel %vm275, %v255, 0
    %v340 = vsel %vm275, %v256, 0
    %v343 = vsel %vm275, %v257, 0
    %v346 = vsel %vm275, %v258, 0
    %v349 = vsel %vm275, %v259, 0
    %v352 = vsel %vm275, %v260, 0
    %v355 = vsel %vm275, %v261, 0
    %v358 = vsel %vm275, %v262, 0
    %v361 = vsel %vm275, %v263, 0
    %v364 = vsel %vm275, %v264, 0
    %v367 = vsel %vm275, %v265, 0
    %v370 = vsel %vm275, %v266, 0
    %vm372 = vcmask 1043456
    %v374 = vsel %vm372, %v272, 0
    %v377 = vsel %vm372, %v273, 0
    %v380 = vsel %vm372, %v274, 0
    %382 = vmatprep.subr.bf16.mxu0 0
    %383 = vmatpush1.bf16.msra.mxu0 0
    %384 = vmatprep.subr.bf16.mxu0 0
    %385 = vmatpush1.bf16.msra.mxu0 0
    %386 = vmatprep.subr.bf16.mxu0 0
    %387 = vmatpush1.bf16.msra.mxu0 0
    %388 = vmatprep.subr.bf16.mxu0 0
    %389 = vmatpush1.bf16.msra.mxu0 0
    %390 = vmatprep.subr.bf16.mxu0 0
    %391 = vmatpush1.bf16.msra.mxu0 0
    %392 = vmatprep.subr.bf16.mxu0 0
    %393 = vmatpush1.bf16.msra.mxu0 0
    %394 = vmatprep.subr.bf16.mxu0 0
    %395 = vmatpush1.bf16.msra.mxu0 0
    %396 = vmatprep.subr.bf16.mxu0 %v377
    %397 = vmatpush1.bf16.msra.mxu0 %v374
    %398 = vmatprep.subr.bf16.mxu0 0
    %399 = vmatpush2.bf16.msra.mxu0 0
    %400 = vmatprep.subr.bf16.mxu0 0
    %401 = vmatpush2.bf16.msra.mxu0 0
    %402 = vmatprep.subr.bf16.mxu0 0
    %403 = vmatpush2.bf16.msra.mxu0 0
    %404 = vmatprep.subr.bf16.mxu0 0
    %405 = vmatpush2.bf16.msra.mxu0 0
    %406 = vmatprep.subr.bf16.mxu0 0
    %407 = vmatpush2.bf16.msra.mxu0 0
    %408 = vmatprep.subr.bf16.mxu0 0
    %409 = vmatpush2.bf16.msra.mxu0 0
    %410 = vmatprep.subr.bf16.mxu0 0
    %411 = vmatpush2.bf16.msra.mxu0 0
    %412 = vmatprep.subr.bf16.mxu0 0
    %413 = vmatpush2.bf16.msra.mxu0 0
    %414 = vmatprep.mubr.bf16.mxu0 0
    %415 = vmatmul.mubr.bf16.gmra.mxu0 %v277
    %v416 = vpop.f32.mrf.mxu0
    %v417 = vadd.f32 0.0, %v416
    %v418 = vpop.f32.mrf.mxu0
    %v419 = vadd.f32 0.0, %v418
    %v420 = vpop.f32.mrf.mxu0
    %v421 = vadd.f32 0.0, %v420
    %v422 = vpop.f32.mrf.mxu0
    %v423 = vadd.f32 0.0, %v422
    %424 = vmatprep.mubr.bf16.mxu0 0
    %425 = vmatmul.mubr.bf16.gmra.mxu0 %v280
    %v426 = vpop.f32.mrf.mxu0
    %v427 = vadd.f32 0.0, %v426
    %v428 = vpop.f32.mrf.mxu0
    %v429 = vadd.f32 0.0, %v428
    %v430 = vpop.f32.mrf.mxu0
    %v431 = vadd.f32 0.0, %v430
    %v432 = vpop.f32.mrf.mxu0
    %v433 = vadd.f32 0.0, %v432
    %434 = vmatprep.mubr.bf16.mxu0 0
    %435 = vmatmul.mubr.bf16.gmra.mxu0 %v283
    %v436 = vpop.f32.mrf.mxu0
    %v437 = vadd.f32 0.0, %v436
    %v438 = vpop.f32.mrf.mxu0
    %v439 = vadd.f32 0.0, %v438
    %v440 = vpop.f32.mrf.mxu0
    %v441 = vadd.f32 0.0, %v440
    %v442 = vpop.f32.mrf.mxu0
    %v443 = vadd.f32 0.0, %v442
    %444 = vmatprep.mubr.bf16.mxu0 0
    %445 = vmatmul.mubr.bf16.gmra.mxu0 %v286
    %v446 = vpop.f32.mrf.mxu0
    %v447 = vadd.f32 0.0, %v446
    %v448 = vpop.f32.mrf.mxu0
    %v449 = vadd.f32 0.0, %v448
    %v450 = vpop.f32.mrf.mxu0
    %v451 = vadd.f32 0.0, %v450
    %v452 = vpop.f32.mrf.mxu0
    %v453 = vadd.f32 0.0, %v452
    %454 = vmatprep.mubr.bf16.mxu0 0
    %455 = vmatmul.mubr.bf16.gmra.mxu0 %v289
    %v456 = vpop.f32.mrf.mxu0
    %v457 = vadd.f32 0.0, %v456
    %v458 = vpop.f32.mrf.mxu0
    %v459 = vadd.f32 0.0, %v458
    %v460 = vpop.f32.mrf.mxu0
    %v461 = vadd.f32 0.0, %v460
    %v462 = vpop.f32.mrf.mxu0
    %v463 = vadd.f32 0.0, %v462
    %464 = vmatprep.mubr.bf16.mxu0 0
    %465 = vmatmul.mubr.bf16.gmra.mxu0 %v292
    %v466 = vpop.f32.mrf.mxu0
    %v467 = vadd.f32 0.0, %v466
    %v468 = vpop.f32.mrf.mxu0
    %v469 = vadd.f32 0.0, %v468
    %v470 = vpop.f32.mrf.mxu0
    %v471 = vadd.f32 0.0, %v470
    %v472 = vpop.f32.mrf.mxu0
    %v473 = vadd.f32 0.0, %v472
    %474 = vmatprep.mubr.bf16.mxu0 0
    %475 = vmatmul.mubr.bf16.gmra.mxu0 %v295
    %v476 = vpop.f32.mrf.mxu0
    %v477 = vadd.f32 0.0, %v476
    %v478 = vpop.f32.mrf.mxu0
    %v479 = vadd.f32 0.0, %v478
    %v480 = vpop.f32.mrf.mxu0
    %v481 = vadd.f32 0.0, %v480
    %v482 = vpop.f32.mrf.mxu0
    %v483 = vadd.f32 0.0, %v482
    %484 = vmatprep.mubr.bf16.mxu0 0
    %485 = vmatmul.mubr.bf16.gmra.mxu0 %v298
    %v486 = vpop.f32.mrf.mxu0
    %v487 = vadd.f32 0.0, %v486
    %v488 = vpop.f32.mrf.mxu0
    %v489 = vadd.f32 0.0, %v488
    %v490 = vpop.f32.mrf.mxu0
    %v491 = vadd.f32 0.0, %v490
    %v492 = vpop.f32.mrf.mxu0
    %v493 = vadd.f32 0.0, %v492
    %494 = vmatprep.mubr.bf16.mxu0 0
    %495 = vmatmul.mubr.bf16.gmra.mxu0 %v301
    %v496 = vpop.f32.mrf.mxu0
    %v497 = vadd.f32 0.0, %v496
    %v498 = vpop.f32.mrf.mxu0
    %v499 = vadd.f32 0.0, %v498
    %v500 = vpop.f32.mrf.mxu0
    %v501 = vadd.f32 0.0, %v500
    %v502 = vpop.f32.mrf.mxu0
    %v503 = vadd.f32 0.0, %v502
    %504 = vmatprep.mubr.bf16.mxu0 0
    %505 = vmatmul.mubr.bf16.gmra.mxu0 %v304
    %v506 = vpop.f32.mrf.mxu0
    %v507 = vadd.f32 0.0, %v506
    %v508 = vpop.f32.mrf.mxu0
    %v509 = vadd.f32 0.0, %v508
    %v510 = vpop.f32.mrf.mxu0
    %v511 = vadd.f32 0.0, %v510
    %v512 = vpop.f32.mrf.mxu0
    %v513 = vadd.f32 0.0, %v512
    %514 = vmatprep.mubr.bf16.mxu0 0
    %515 = vmatmul.mubr.bf16.gmra.mxu0 %v307
    %v516 = vpop.f32.mrf.mxu0
    %v517 = vadd.f32 0.0, %v516
    %v518 = vpop.f32.mrf.mxu0
    %v519 = vadd.f32 0.0, %v518
    %v520 = vpop.f32.mrf.mxu0
    %v521 = vadd.f32 0.0, %v520
    %v522 = vpop.f32.mrf.mxu0
    %v523 = vadd.f32 0.0, %v522
    %524 = vmatprep.mubr.bf16.mxu0 0
    %525 = vmatmul.mubr.bf16.gmra.mxu0 %v310
    %v526 = vpop.f32.mrf.mxu0
    %v527 = vadd.f32 0.0, %v526
    %v528 = vpop.f32.mrf.mxu0
    %v529 = vadd.f32 0.0, %v528
    %v530 = vpop.f32.mrf.mxu0
    %v531 = vadd.f32 0.0, %v530
    %v532 = vpop.f32.mrf.mxu0
    %v533 = vadd.f32 0.0, %v532
    %534 = vmatprep.mubr.bf16.mxu0 0
    %535 = vmatmul.mubr.bf16.gmra.mxu0 %v313
    %v536 = vpop.f32.mrf.mxu0
    %v537 = vadd.f32 0.0, %v536
    %v538 = vpop.f32.mrf.mxu0
    %v539 = vadd.f32 0.0, %v538
    %v540 = vpop.f32.mrf.mxu0
    %v541 = vadd.f32 0.0, %v540
    %v542 = vpop.f32.mrf.mxu0
    %v543 = vadd.f32 0.0, %v542
    %544 = vmatprep.mubr.bf16.mxu0 0
    %545 = vmatmul.mubr.bf16.gmra.mxu0 %v316
    %v546 = vpop.f32.mrf.mxu0
    %v547 = vadd.f32 0.0, %v546
    %v548 = vpop.f32.mrf.mxu0
    %v549 = vadd.f32 0.0, %v548
    %v550 = vpop.f32.mrf.mxu0
    %v551 = vadd.f32 0.0, %v550
    %v552 = vpop.f32.mrf.mxu0
    %v553 = vadd.f32 0.0, %v552
    %554 = vmatprep.mubr.bf16.mxu0 0
    %555 = vmatmul.mubr.bf16.gmra.mxu0 %v319
    %v556 = vpop.f32.mrf.mxu0
    %v557 = vadd.f32 0.0, %v556
    %v558 = vpop.f32.mrf.mxu0
    %v559 = vadd.f32 0.0, %v558
    %v560 = vpop.f32.mrf.mxu0
    %v561 = vadd.f32 0.0, %v560
    %v562 = vpop.f32.mrf.mxu0
    %v563 = vadd.f32 0.0, %v562
    %564 = vmatprep.mubr.bf16.mxu0 0
    %565 = vmatmul.mubr.bf16.gmra.mxu0 %v322
    %v566 = vpop.f32.mrf.mxu0
    %v567 = vadd.f32 0.0, %v566
    %v568 = vpop.f32.mrf.mxu0
    %v569 = vadd.f32 0.0, %v568
    %v570 = vpop.f32.mrf.mxu0
    %v571 = vadd.f32 0.0, %v570
    %v572 = vpop.f32.mrf.mxu0
    %v573 = vadd.f32 0.0, %v572
    %574 = vmatprep.mubr.bf16.mxu0 0
    %575 = vmatmul.mubr.bf16.gmra.mxu0 %v325
    %v576 = vpop.f32.mrf.mxu0
    %v577 = vadd.f32 0.0, %v576
    %v578 = vpop.f32.mrf.mxu0
    %v579 = vadd.f32 0.0, %v578
    %v580 = vpop.f32.mrf.mxu0
    %v581 = vadd.f32 0.0, %v580
    %v582 = vpop.f32.mrf.mxu0
    %v583 = vadd.f32 0.0, %v582
    %584 = vmatprep.mubr.bf16.mxu0 0
    %585 = vmatmul.mubr.bf16.gmra.mxu0 %v328
    %v586 = vpop.f32.mrf.mxu0
    %v587 = vadd.f32 0.0, %v586
    %v588 = vpop.f32.mrf.mxu0
    %v589 = vadd.f32 0.0, %v588
    %v590 = vpop.f32.mrf.mxu0
    %v591 = vadd.f32 0.0, %v590
    %v592 = vpop.f32.mrf.mxu0
    %v593 = vadd.f32 0.0, %v592
    %594 = vmatprep.mubr.bf16.mxu0 0
    %595 = vmatmul.mubr.bf16.gmra.mxu0 %v331
    %v596 = vpop.f32.mrf.mxu0
    %v597 = vadd.f32 0.0, %v596
    %v598 = vpop.f32.mrf.mxu0
    %v599 = vadd.f32 0.0, %v598
    %v600 = vpop.f32.mrf.mxu0
    %v601 = vadd.f32 0.0, %v600
    %v602 = vpop.f32.mrf.mxu0
    %v603 = vadd.f32 0.0, %v602
    %604 = vmatprep.mubr.bf16.mxu0 0
    %605 = vmatmul.mubr.bf16.gmra.mxu0 %v334
    %v606 = vpop.f32.mrf.mxu0
    %v607 = vadd.f32 0.0, %v606
    %v608 = vpop.f32.mrf.mxu0
    %v609 = vadd.f32 0.0, %v608
    %v610 = vpop.f32.mrf.mxu0
    %v611 = vadd.f32 0.0, %v610
    %v612 = vpop.f32.mrf.mxu0
    %v613 = vadd.f32 0.0, %v612
    %614 = vmatprep.mubr.bf16.mxu0 0
    %615 = vmatmul.mubr.bf16.gmra.mxu0 %v337
    %v616 = vpop.f32.mrf.mxu0
    %v617 = vadd.f32 0.0, %v616
    %v618 = vpop.f32.mrf.mxu0
    %v619 = vadd.f32 0.0, %v618
    %v620 = vpop.f32.mrf.mxu0
    %v621 = vadd.f32 0.0, %v620
    %v622 = vpop.f32.mrf.mxu0
    %v623 = vadd.f32 0.0, %v622
    %624 = vmatprep.mubr.bf16.mxu0 0
    %625 = vmatmul.mubr.bf16.gmra.mxu0 %v340
    %v626 = vpop.f32.mrf.mxu0
    %v627 = vadd.f32 0.0, %v626
    %v628 = vpop.f32.mrf.mxu0
    %v629 = vadd.f32 0.0, %v628
    %v630 = vpop.f32.mrf.mxu0
    %v631 = vadd.f32 0.0, %v630
    %v632 = vpop.f32.mrf.mxu0
    %v633 = vadd.f32 0.0, %v632
    %634 = vmatprep.mubr.bf16.mxu0 0
    %635 = vmatmul.mubr.bf16.gmra.mxu0 %v343
    %v636 = vpop.f32.mrf.mxu0
    %v637 = vadd.f32 0.0, %v636
    %v638 = vpop.f32.mrf.mxu0
    %v639 = vadd.f32 0.0, %v638
    %v640 = vpop.f32.mrf.mxu0
    %v641 = vadd.f32 0.0, %v640
    %v642 = vpop.f32.mrf.mxu0
    %v643 = vadd.f32 0.0, %v642
    %644 = vmatprep.mubr.bf16.mxu0 0
    %645 = vmatmul.mubr.bf16.gmra.mxu0 %v346
    %v646 = vpop.f32.mrf.mxu0
    %v647 = vadd.f32 0.0, %v646
    %v648 = vpop.f32.mrf.mxu0
    %v649 = vadd.f32 0.0, %v648
    %v650 = vpop.f32.mrf.mxu0
    %v651 = vadd.f32 0.0, %v650
    %v652 = vpop.f32.mrf.mxu0
    %v653 = vadd.f32 0.0, %v652
    %654 = vmatprep.mubr.bf16.mxu0 0
    %655 = vmatmul.mubr.bf16.gmra.mxu0 %v349
    %v656 = vpop.f32.mrf.mxu0
    %v657 = vadd.f32 0.0, %v656
    %v658 = vpop.f32.mrf.mxu0
    %v659 = vadd.f32 0.0, %v658
    %v660 = vpop.f32.mrf.mxu0
    %v661 = vadd.f32 0.0, %v660
    %v662 = vpop.f32.mrf.mxu0
    %v663 = vadd.f32 0.0, %v662
    %664 = vmatprep.mubr.bf16.mxu0 0
    %665 = vmatmul.mubr.bf16.gmra.mxu0 %v352
    %v666 = vpop.f32.mrf.mxu0
    %v667 = vadd.f32 0.0, %v666
    %v668 = vpop.f32.mrf.mxu0
    %v669 = vadd.f32 0.0, %v668
    %v670 = vpop.f32.mrf.mxu0
    %v671 = vadd.f32 0.0, %v670
    %v672 = vpop.f32.mrf.mxu0
    %v673 = vadd.f32 0.0, %v672
    %674 = vmatprep.mubr.bf16.mxu0 0
    %675 = vmatmul.mubr.bf16.gmra.mxu0 %v355
    %v676 = vpop.f32.mrf.mxu0
    %v677 = vadd.f32 0.0, %v676
    %v678 = vpop.f32.mrf.mxu0
    %v679 = vadd.f32 0.0, %v678
    %v680 = vpop.f32.mrf.mxu0
    %v681 = vadd.f32 0.0, %v680
    %v682 = vpop.f32.mrf.mxu0
    %v683 = vadd.f32 0.0, %v682
    %684 = vmatprep.mubr.bf16.mxu0 0
    %685 = vmatmul.mubr.bf16.gmra.mxu0 %v358
    %v686 = vpop.f32.mrf.mxu0
    %v687 = vadd.f32 0.0, %v686
    %v688 = vpop.f32.mrf.mxu0
    %v689 = vadd.f32 0.0, %v688
    %v690 = vpop.f32.mrf.mxu0
    %v691 = vadd.f32 0.0, %v690
    %v692 = vpop.f32.mrf.mxu0
    %v693 = vadd.f32 0.0, %v692
    %694 = vmatprep.mubr.bf16.mxu0 0
    %695 = vmatmul.mubr.bf16.gmra.mxu0 %v361
    %v696 = vpop.f32.mrf.mxu0
    %v697 = vadd.f32 0.0, %v696
    %v698 = vpop.f32.mrf.mxu0
    %v699 = vadd.f32 0.0, %v698
    %v700 = vpop.f32.mrf.mxu0
    %v701 = vadd.f32 0.0, %v700
    %v702 = vpop.f32.mrf.mxu0
    %v703 = vadd.f32 0.0, %v702
    %704 = vmatprep.mubr.bf16.mxu0 0
    %705 = vmatmul.mubr.bf16.gmra.mxu0 %v364
    %v706 = vpop.f32.mrf.mxu0
    %v707 = vadd.f32 0.0, %v706
    %v708 = vpop.f32.mrf.mxu0
    %v709 = vadd.f32 0.0, %v708
    %v710 = vpop.f32.mrf.mxu0
    %v711 = vadd.f32 0.0, %v710
    %v712 = vpop.f32.mrf.mxu0
    %v713 = vadd.f32 0.0, %v712
    %714 = vmatprep.mubr.bf16.mxu0 0
    %715 = vmatmul.mubr.bf16.gmra.mxu0 %v367
    %v716 = vpop.f32.mrf.mxu0
    %v717 = vadd.f32 0.0, %v716
    %v718 = vpop.f32.mrf.mxu0
    %v719 = vadd.f32 0.0, %v718
    %v720 = vpop.f32.mrf.mxu0
    %v721 = vadd.f32 0.0, %v720
    %v722 = vpop.f32.mrf.mxu0
    %v723 = vadd.f32 0.0, %v722
    %724 = vmatprep.mubr.bf16.mxu0 0
    %725 = vmatmul.mubr.bf16.gmra.mxu0 %v370
    %v726 = vpop.f32.mrf.mxu0
    %v727 = vadd.f32 0.0, %v726
    %v728 = vpop.f32.mrf.mxu0
    %v729 = vadd.f32 0.0, %v728
    %v730 = vpop.f32.mrf.mxu0
    %v731 = vadd.f32 0.0, %v730
    %v732 = vpop.f32.mrf.mxu0
    %v733 = vadd.f32 0.0, %v732
    %734 = vdwg.mxu0
    %735 = vmatprep.subr.bf16.mxu0 0
    %736 = vmatpush1.bf16.msra.mxu0 0
    %737 = vmatprep.subr.bf16.mxu0 0
    %738 = vmatpush1.bf16.msra.mxu0 0
    %739 = vmatprep.subr.bf16.mxu0 0
    %740 = vmatpush1.bf16.msra.mxu0 0
    %741 = vmatprep.subr.bf16.mxu0 0
    %742 = vmatpush1.bf16.msra.mxu0 0
    %743 = vmatprep.subr.bf16.mxu0 0
    %744 = vmatpush1.bf16.msra.mxu0 0
    %745 = vmatprep.subr.bf16.mxu0 0
    %746 = vmatpush1.bf16.msra.mxu0 0
    %747 = vmatprep.subr.bf16.mxu0 0
    %748 = vmatpush1.bf16.msra.mxu0 0
    %749 = vmatprep.subr.bf16.mxu0 0
    %750 = vmatpush1.bf16.msra.mxu0 %v380
    %751 = vmatprep.subr.bf16.mxu0 0
    %752 = vmatpush2.bf16.msra.mxu0 0
    %753 = vmatprep.subr.bf16.mxu0 0
    %754 = vmatpush2.bf16.msra.mxu0 0
    %755 = vmatprep.subr.bf16.mxu0 0
    %756 = vmatpush2.bf16.msra.mxu0 0
    %757 = vmatprep.subr.bf16.mxu0 0
    %758 = vmatpush2.bf16.msra.mxu0 0
    %759 = vmatprep.subr.bf16.mxu0 0
    %760 = vmatpush2.bf16.msra.mxu0 0
    %761 = vmatprep.subr.bf16.mxu0 0
    %762 = vmatpush2.bf16.msra.mxu0 0
    %763 = vmatprep.subr.bf16.mxu0 0
    %764 = vmatpush2.bf16.msra.mxu0 0
    %765 = vmatprep.subr.bf16.mxu0 0
    %766 = vmatpush2.bf16.msra.mxu0 0
    %767 = vmatprep.mubr.bf16.mxu0 0
    %768 = vmatmul.mubr.bf16.gmra.mxu0 %v277
    %v769 = vpop.f32.mrf.mxu0
    %v770 = vadd.f32 0.0, %v769
    %v771 = vpop.f32.mrf.mxu0
    %v772 = vpop.f32.mrf.mxu0
    %v773 = vadd.f32 0.0, %v772
    %v774 = vpop.f32.mrf.mxu0
    %775 = vmatprep.mubr.bf16.mxu0 0
    %776 = vmatmul.mubr.bf16.gmra.mxu0 %v280
    %v777 = vpop.f32.mrf.mxu0
    %v778 = vadd.f32 0.0, %v777
    %v779 = vpop.f32.mrf.mxu0
    %v780 = vpop.f32.mrf.mxu0
    %v781 = vadd.f32 0.0, %v780
    %v782 = vpop.f32.mrf.mxu0
    %783 = vmatprep.mubr.bf16.mxu0 0
    %784 = vmatmul.mubr.bf16.gmra.mxu0 %v283
    %v785 = vpop.f32.mrf.mxu0
    %v786 = vadd.f32 0.0, %v785
    %v787 = vpop.f32.mrf.mxu0
    %v788 = vpop.f32.mrf.mxu0
    %v789 = vadd.f32 0.0, %v788
    %v790 = vpop.f32.mrf.mxu0
    %791 = vmatprep.mubr.bf16.mxu0 0
    %792 = vmatmul.mubr.bf16.gmra.mxu0 %v286
    %v793 = vpop.f32.mrf.mxu0
    %v794 = vadd.f32 0.0, %v793
    %v795 = vpop.f32.mrf.mxu0
    %v796 = vpop.f32.mrf.mxu0
    %v797 = vadd.f32 0.0, %v796
    %v798 = vpop.f32.mrf.mxu0
    %799 = vmatprep.mubr.bf16.mxu0 0
    %800 = vmatmul.mubr.bf16.gmra.mxu0 %v289
    %v801 = vpop.f32.mrf.mxu0
    %v802 = vadd.f32 0.0, %v801
    %v803 = vpop.f32.mrf.mxu0
    %v804 = vpop.f32.mrf.mxu0
    %v805 = vadd.f32 0.0, %v804
    %v806 = vpop.f32.mrf.mxu0
    %807 = vmatprep.mubr.bf16.mxu0 0
    %808 = vmatmul.mubr.bf16.gmra.mxu0 %v292
    %v809 = vpop.f32.mrf.mxu0
    %v810 = vadd.f32 0.0, %v809
    %v811 = vpop.f32.mrf.mxu0
    %v812 = vpop.f32.mrf.mxu0
    %v813 = vadd.f32 0.0, %v812
    %v814 = vpop.f32.mrf.mxu0
    %815 = vmatprep.mubr.bf16.mxu0 0
    %816 = vmatmul.mubr.bf16.gmra.mxu0 %v295
    %v817 = vpop.f32.mrf.mxu0
    %v818 = vadd.f32 0.0, %v817
    %v819 = vpop.f32.mrf.mxu0
    %v820 = vpop.f32.mrf.mxu0
    %v821 = vadd.f32 0.0, %v820
    %v822 = vpop.f32.mrf.mxu0
    %823 = vmatprep.mubr.bf16.mxu0 0
    %824 = vmatmul.mubr.bf16.gmra.mxu0 %v298
    %v825 = vpop.f32.mrf.mxu0
    %v826 = vadd.f32 0.0, %v825
    %v827 = vpop.f32.mrf.mxu0
    %v828 = vpop.f32.mrf.mxu0
    %v829 = vadd.f32 0.0, %v828
    %v830 = vpop.f32.mrf.mxu0
    %831 = vmatprep.mubr.bf16.mxu0 0
    %832 = vmatmul.mubr.bf16.gmra.mxu0 %v301
    %v833 = vpop.f32.mrf.mxu0
    %v834 = vadd.f32 0.0, %v833
    %v835 = vpop.f32.mrf.mxu0
    %v836 = vpop.f32.mrf.mxu0
    %v837 = vadd.f32 0.0, %v836
    %v838 = vpop.f32.mrf.mxu0
    %839 = vmatprep.mubr.bf16.mxu0 0
    %840 = vmatmul.mubr.bf16.gmra.mxu0 %v304
    %v841 = vpop.f32.mrf.mxu0
    %v842 = vadd.f32 0.0, %v841
    %v843 = vpop.f32.mrf.mxu0
    %v844 = vpop.f32.mrf.mxu0
    %v845 = vadd.f32 0.0, %v844
    %v846 = vpop.f32.mrf.mxu0
    %847 = vmatprep.mubr.bf16.mxu0 0
    %848 = vmatmul.mubr.bf16.gmra.mxu0 %v307
    %v849 = vpop.f32.mrf.mxu0
    %v850 = vadd.f32 0.0, %v849
    %v851 = vpop.f32.mrf.mxu0
    %v852 = vpop.f32.mrf.mxu0
    %v853 = vadd.f32 0.0, %v852
    %v854 = vpop.f32.mrf.mxu0
    %855 = vmatprep.mubr.bf16.mxu0 0
    %856 = vmatmul.mubr.bf16.gmra.mxu0 %v310
    %v857 = vpop.f32.mrf.mxu0
    %v858 = vadd.f32 0.0, %v857
    %v859 = vpop.f32.mrf.mxu0
    %v860 = vpop.f32.mrf.mxu0
    %v861 = vadd.f32 0.0, %v860
    %v862 = vpop.f32.mrf.mxu0
    %863 = vmatprep.mubr.bf16.mxu0 0
    %864 = vmatmul.mubr.bf16.gmra.mxu0 %v313
    %v865 = vpop.f32.mrf.mxu0
    %v866 = vadd.f32 0.0, %v865
    %v867 = vpop.f32.mrf.mxu0
    %v868 = vpop.f32.mrf.mxu0
    %v869 = vadd.f32 0.0, %v868
    %v870 = vpop.f32.mrf.mxu0
    %871 = vmatprep.mubr.bf16.mxu0 0
    %872 = vmatmul.mubr.bf16.gmra.mxu0 %v316
    %v873 = vpop.f32.mrf.mxu0
    %v874 = vadd.f32 0.0, %v873
    %v875 = vpop.f32.mrf.mxu0
    %v876 = vpop.f32.mrf.mxu0
    %v877 = vadd.f32 0.0, %v876
    %v878 = vpop.f32.mrf.mxu0
    %879 = vmatprep.mubr.bf16.mxu0 0
    %880 = vmatmul.mubr.bf16.gmra.mxu0 %v319
    %v881 = vpop.f32.mrf.mxu0
    %v882 = vadd.f32 0.0, %v881
    %v883 = vpop.f32.mrf.mxu0
    %v884 = vpop.f32.mrf.mxu0
    %v885 = vadd.f32 0.0, %v884
    %v886 = vpop.f32.mrf.mxu0
    %887 = vmatprep.mubr.bf16.mxu0 0
    %888 = vmatmul.mubr.bf16.gmra.mxu0 %v322
    %v889 = vpop.f32.mrf.mxu0
    %v890 = vadd.f32 0.0, %v889
    %v891 = vpop.f32.mrf.mxu0
    %v892 = vpop.f32.mrf.mxu0
    %v893 = vadd.f32 0.0, %v892
    %v894 = vpop.f32.mrf.mxu0
    %895 = vmatprep.mubr.bf16.mxu0 0
    %896 = vmatmul.mubr.bf16.gmra.mxu0 %v325
    %v897 = vpop.f32.mrf.mxu0
    %v898 = vadd.f32 0.0, %v897
    %v899 = vpop.f32.mrf.mxu0
    %v900 = vpop.f32.mrf.mxu0
    %v901 = vadd.f32 0.0, %v900
    %v902 = vpop.f32.mrf.mxu0
    %903 = vmatprep.mubr.bf16.mxu0 0
    %904 = vmatmul.mubr.bf16.gmra.mxu0 %v328
    %v905 = vpop.f32.mrf.mxu0
    %v906 = vadd.f32 0.0, %v905
    %v907 = vpop.f32.mrf.mxu0
    %v908 = vpop.f32.mrf.mxu0
    %v909 = vadd.f32 0.0, %v908
    %v910 = vpop.f32.mrf.mxu0
    %911 = vmatprep.mubr.bf16.mxu0 0
    %912 = vmatmul.mubr.bf16.gmra.mxu0 %v331
    %v913 = vpop.f32.mrf.mxu0
    %v914 = vadd.f32 0.0, %v913
    %v915 = vpop.f32.mrf.mxu0
    %v916 = vpop.f32.mrf.mxu0
    %v917 = vadd.f32 0.0, %v916
    %v918 = vpop.f32.mrf.mxu0
    %919 = vmatprep.mubr.bf16.mxu0 0
    %920 = vmatmul.mubr.bf16.gmra.mxu0 %v334
    %v921 = vpop.f32.mrf.mxu0
    %v922 = vadd.f32 0.0, %v921
    %v923 = vpop.f32.mrf.mxu0
    %v924 = vpop.f32.mrf.mxu0
    %v925 = vadd.f32 0.0, %v924
    %v926 = vpop.f32.mrf.mxu0
    %927 = vmatprep.mubr.bf16.mxu0 0
    %928 = vmatmul.mubr.bf16.gmra.mxu0 %v337
    %v929 = vpop.f32.mrf.mxu0
    %v930 = vadd.f32 0.0, %v929
    %v931 = vpop.f32.mrf.mxu0
    %v932 = vpop.f32.mrf.mxu0
    %v933 = vadd.f32 0.0, %v932
    %v934 = vpop.f32.mrf.mxu0
    %935 = vmatprep.mubr.bf16.mxu0 0
    %936 = vmatmul.mubr.bf16.gmra.mxu0 %v340
    %v937 = vpop.f32.mrf.mxu0
    %v938 = vadd.f32 0.0, %v937
    %v939 = vpop.f32.mrf.mxu0
    %v940 = vpop.f32.mrf.mxu0
    %v941 = vadd.f32 0.0, %v940
    %v942 = vpop.f32.mrf.mxu0
    %943 = vmatprep.mubr.bf16.mxu0 0
    %944 = vmatmul.mubr.bf16.gmra.mxu0 %v343
    %v945 = vpop.f32.mrf.mxu0
    %v946 = vadd.f32 0.0, %v945
    %v947 = vpop.f32.mrf.mxu0
    %v948 = vpop.f32.mrf.mxu0
    %v949 = vadd.f32 0.0, %v948
    %v950 = vpop.f32.mrf.mxu0
    %951 = vmatprep.mubr.bf16.mxu0 0
    %952 = vmatmul.mubr.bf16.gmra.mxu0 %v346
    %v953 = vpop.f32.mrf.mxu0
    %v954 = vadd.f32 0.0, %v953
    %v955 = vpop.f32.mrf.mxu0
    %v956 = vpop.f32.mrf.mxu0
    %v957 = vadd.f32 0.0, %v956
    %v958 = vpop.f32.mrf.mxu0
    %959 = vmatprep.mubr.bf16.mxu0 0
    %960 = vmatmul.mubr.bf16.gmra.mxu0 %v349
    %v961 = vpop.f32.mrf.mxu0
    %v962 = vadd.f32 0.0, %v961
    %v963 = vpop.f32.mrf.mxu0
    %v964 = vpop.f32.mrf.mxu0
    %v965 = vadd.f32 0.0, %v964
    %v966 = vpop.f32.mrf.mxu0
    %967 = vmatprep.mubr.bf16.mxu0 0
    %968 = vmatmul.mubr.bf16.gmra.mxu0 %v352
    %v969 = vpop.f32.mrf.mxu0
    %v970 = vadd.f32 0.0, %v969
    %v971 = vpop.f32.mrf.mxu0
    %v972 = vpop.f32.mrf.mxu0
    %v973 = vadd.f32 0.0, %v972
    %v974 = vpop.f32.mrf.mxu0
    %975 = vmatprep.mubr.bf16.mxu0 0
    %976 = vmatmul.mubr.bf16.gmra.mxu0 %v355
    %v977 = vpop.f32.mrf.mxu0
    %v978 = vadd.f32 0.0, %v977
    %v979 = vpop.f32.mrf.mxu0
    %v980 = vpop.f32.mrf.mxu0
    %v981 = vadd.f32 0.0, %v980
    %v982 = vpop.f32.mrf.mxu0
    %983 = vmatprep.mubr.bf16.mxu0 0
    %984 = vmatmul.mubr.bf16.gmra.mxu0 %v358
    %v985 = vpop.f32.mrf.mxu0
    %v986 = vadd.f32 0.0, %v985
    %v987 = vpop.f32.mrf.mxu0
    %v988 = vpop.f32.mrf.mxu0
    %v989 = vadd.f32 0.0, %v988
    %v990 = vpop.f32.mrf.mxu0
    %991 = vmatprep.mubr.bf16.mxu0 0
    %992 = vmatmul.mubr.bf16.gmra.mxu0 %v361
    %v993 = vpop.f32.mrf.mxu0
    %v994 = vadd.f32 0.0, %v993
    %v995 = vpop.f32.mrf.mxu0
    %v996 = vpop.f32.mrf.mxu0
    %v997 = vadd.f32 0.0, %v996
    %v998 = vpop.f32.mrf.mxu0
    %999 = vmatprep.mubr.bf16.mxu0 0
    %1000 = vmatmul.mubr.bf16.gmra.mxu0 %v364
    %v1001 = vpop.f32.mrf.mxu0
    %v1002 = vadd.f32 0.0, %v1001
    %v1003 = vpop.f32.mrf.mxu0
    %v1004 = vpop.f32.mrf.mxu0
    %v1005 = vadd.f32 0.0, %v1004
    %v1006 = vpop.f32.mrf.mxu0
    %1007 = vmatprep.mubr.bf16.mxu0 0
    %1008 = vmatmul.mubr.bf16.gmra.mxu0 %v367
    %v1009 = vpop.f32.mrf.mxu0
    %v1010 = vadd.f32 0.0, %v1009
    %v1011 = vpop.f32.mrf.mxu0
    %v1012 = vpop.f32.mrf.mxu0
    %v1013 = vadd.f32 0.0, %v1012
    %v1014 = vpop.f32.mrf.mxu0
    %1015 = vmatprep.mubr.bf16.mxu0 0
    %1016 = vmatmul.mubr.bf16.gmra.mxu0 %v370
    %v1017 = vpop.f32.mrf.mxu0
    %v1018 = vadd.f32 0.0, %v1017
    %v1019 = vpop.f32.mrf.mxu0
    %v1020 = vpop.f32.mrf.mxu0
    %v1021 = vadd.f32 0.0, %v1020
    %v1022 = vpop.f32.mrf.mxu0
    %1023 = vdwg.mxu0
    %v1024 = vpack.c.bf16 %v421, %v417
    %v1025 = vpack.c.bf16 %v423, %v419
    %v1026 = vpack.c.bf16 %v773, %v770
    %v1027 = vpack.c.bf16 %v431, %v427
    %v1028 = vpack.c.bf16 %v433, %v429
    %v1029 = vpack.c.bf16 %v781, %v778
    %v1030 = vpack.c.bf16 %v441, %v437
    %v1031 = vpack.c.bf16 %v443, %v439
    %v1032 = vpack.c.bf16 %v789, %v786
    %v1033 = vpack.c.bf16 %v451, %v447
    %v1034 = vpack.c.bf16 %v453, %v449
    %v1035 = vpack.c.bf16 %v797, %v794
    %v1036 = vpack.c.bf16 %v461, %v457
    %v1037 = vpack.c.bf16 %v463, %v459
    %v1038 = vpack.c.bf16 %v805, %v802
    %v1039 = vpack.c.bf16 %v471, %v467
    %v1040 = vpack.c.bf16 %v473, %v469
    %v1041 = vpack.c.bf16 %v813, %v810
    %v1042 = vpack.c.bf16 %v481, %v477
    %v1043 = vpack.c.bf16 %v483, %v479
    %v1044 = vpack.c.bf16 %v821, %v818
    %v1045 = vpack.c.bf16 %v491, %v487
    %v1046 = vpack.c.bf16 %v493, %v489
    %v1047 = vpack.c.bf16 %v829, %v826
    %v1048 = vpack.c.bf16 %v501, %v497
    %v1049 = vpack.c.bf16 %v503, %v499
    %v1050 = vpack.c.bf16 %v837, %v834
    %v1051 = vpack.c.bf16 %v511, %v507
    %v1052 = vpack.c.bf16 %v513, %v509
    %v1053 = vpack.c.bf16 %v845, %v842
    %v1054 = vpack.c.bf16 %v521, %v517
    %v1055 = vpack.c.bf16 %v523, %v519
    %v1056 = vpack.c.bf16 %v853, %v850
    %v1057 = vpack.c.bf16 %v531, %v527
    %v1058 = vpack.c.bf16 %v533, %v529
    %v1059 = vpack.c.bf16 %v861, %v858
    %v1060 = vpack.c.bf16 %v541, %v537
    %v1061 = vpack.c.bf16 %v543, %v539
    %v1062 = vpack.c.bf16 %v869, %v866
    %v1063 = vpack.c.bf16 %v551, %v547
    %v1064 = vpack.c.bf16 %v553, %v549
    %v1065 = vpack.c.bf16 %v877, %v874
    %v1066 = vpack.c.bf16 %v561, %v557
    %v1067 = vpack.c.bf16 %v563, %v559
    %v1068 = vpack.c.bf16 %v885, %v882
    %v1069 = vpack.c.bf16 %v571, %v567
    %v1070 = vpack.c.bf16 %v573, %v569
    %v1071 = vpack.c.bf16 %v893, %v890
    %v1072 = vpack.c.bf16 %v581, %v577
    %v1073 = vpack.c.bf16 %v583, %v579
    %v1074 = vpack.c.bf16 %v901, %v898
    %v1075 = vpack.c.bf16 %v591, %v587
    %v1076 = vpack.c.bf16 %v593, %v589
    %v1077 = vpack.c.bf16 %v909, %v906
    %v1078 = vpack.c.bf16 %v601, %v597
    %v1079 = vpack.c.bf16 %v603, %v599
    %v1080 = vpack.c.bf16 %v917, %v914
    %v1081 = vpack.c.bf16 %v611, %v607
    %v1082 = vpack.c.bf16 %v613, %v609
    %v1083 = vpack.c.bf16 %v925, %v922
    %v1084 = vpack.c.bf16 %v621, %v617
    %v1085 = vpack.c.bf16 %v623, %v619
    %v1086 = vpack.c.bf16 %v933, %v930
    %v1087 = vpack.c.bf16 %v631, %v627
    %v1088 = vpack.c.bf16 %v633, %v629
    %v1089 = vpack.c.bf16 %v941, %v938
    %v1090 = vpack.c.bf16 %v641, %v637
    %v1091 = vpack.c.bf16 %v643, %v639
    %v1092 = vpack.c.bf16 %v949, %v946
    %v1093 = vpack.c.bf16 %v651, %v647
    %v1094 = vpack.c.bf16 %v653, %v649
    %v1095 = vpack.c.bf16 %v957, %v954
    %v1096 = vpack.c.bf16 %v661, %v657
    %v1097 = vpack.c.bf16 %v663, %v659
    %v1098 = vpack.c.bf16 %v965, %v962
    %v1099 = vpack.c.bf16 %v671, %v667
    %v1100 = vpack.c.bf16 %v673, %v669
    %v1101 = vpack.c.bf16 %v973, %v970
    %v1102 = vpack.c.bf16 %v681, %v677
    %v1103 = vpack.c.bf16 %v683, %v679
    %v1104 = vpack.c.bf16 %v981, %v978
    %v1105 = vpack.c.bf16 %v691, %v687
    %v1106 = vpack.c.bf16 %v693, %v689
    %v1107 = vpack.c.bf16 %v989, %v986
    %v1108 = vpack.c.bf16 %v701, %v697
    %v1109 = vpack.c.bf16 %v703, %v699
    %v1110 = vpack.c.bf16 %v997, %v994
    %v1111 = vpack.c.bf16 %v711, %v707
    %v1112 = vpack.c.bf16 %v713, %v709
    %v1113 = vpack.c.bf16 %v1005, %v1002
    %v1114 = vpack.c.bf16 %v721, %v717
    %v1115 = vpack.c.bf16 %v723, %v719
    %v1116 = vpack.c.bf16 %v1013, %v1010
    %v1117 = vpack.c.bf16 %v731, %v727
    %v1118 = vpack.c.bf16 %v733, %v729
    %v1119 = vpack.c.bf16 %v1021, %v1018
    %vm1120 = vcmp.gt.bf16.partialorder %v1024, 0
    %vm1121 = vcmp.gt.bf16.partialorder %v1025, 0
    %vm1122 = vcmp.gt.bf16.partialorder %v1026, 0
    %vm1123 = vcmp.gt.bf16.partialorder %v1027, 0
    %vm1124 = vcmp.gt.bf16.partialorder %v1028, 0
    %vm1125 = vcmp.gt.bf16.partialorder %v1029, 0
    %vm1126 = vcmp.gt.bf16.partialorder %v1030, 0
    %vm1127 = vcmp.gt.bf16.partialorder %v1031, 0
    %vm1128 = vcmp.gt.bf16.partialorder %v1032, 0
    %vm1129 = vcmp.gt.bf16.partialorder %v1033, 0
    %vm1130 = vcmp.gt.bf16.partialorder %v1034, 0
    %vm1131 = vcmp.gt.bf16.partialorder %v1035, 0
    %vm1132 = vcmp.gt.bf16.partialorder %v1036, 0
    %vm1133 = vcmp.gt.bf16.partialorder %v1037, 0
    %vm1134 = vcmp.gt.bf16.partialorder %v1038, 0
    %vm1135 = vcmp.gt.bf16.partialorder %v1039, 0
    %vm1136 = vcmp.gt.bf16.partialorder %v1040, 0
    %vm1137 = vcmp.gt.bf16.partialorder %v1041, 0
    %vm1138 = vcmp.gt.bf16.partialorder %v1042, 0
    %vm1139 = vcmp.gt.bf16.partialorder %v1043, 0
    %vm1140 = vcmp.gt.bf16.partialorder %v1044, 0
    %vm1141 = vcmp.gt.bf16.partialorder %v1045, 0
    %vm1142 = vcmp.gt.bf16.partialorder %v1046, 0
    %vm1143 = vcmp.gt.bf16.partialorder %v1047, 0
    %vm1144 = vcmp.gt.bf16.partialorder %v1048, 0
    %vm1145 = vcmp.gt.bf16.partialorder %v1049, 0
    %vm1146 = vcmp.gt.bf16.partialorder %v1050, 0
    %vm1147 = vcmp.gt.bf16.partialorder %v1051, 0
    %vm1148 = vcmp.gt.bf16.partialorder %v1052, 0
    %vm1149 = vcmp.gt.bf16.partialorder %v1053, 0
    %vm1150 = vcmp.gt.bf16.partialorder %v1054, 0
    %vm1151 = vcmp.gt.bf16.partialorder %v1055, 0
    %vm1152 = vcmp.gt.bf16.partialorder %v1056, 0
    %vm1153 = vcmp.gt.bf16.partialorder %v1057, 0
    %vm1154 = vcmp.gt.bf16.partialorder %v1058, 0
    %vm1155 = vcmp.gt.bf16.partialorder %v1059, 0
    %vm1156 = vcmp.gt.bf16.partialorder %v1060, 0
    %vm1157 = vcmp.gt.bf16.partialorder %v1061, 0
    %vm1158 = vcmp.gt.bf16.partialorder %v1062, 0
    %vm1159 = vcmp.gt.bf16.partialorder %v1063, 0
    %vm1160 = vcmp.gt.bf16.partialorder %v1064, 0
    %vm1161 = vcmp.gt.bf16.partialorder %v1065, 0
    %vm1162 = vcmp.gt.bf16.partialorder %v1066, 0
    %vm1163 = vcmp.gt.bf16.partialorder %v1067, 0
    %vm1164 = vcmp.gt.bf16.partialorder %v1068, 0
    %vm1165 = vcmp.gt.bf16.partialorder %v1069, 0
    %vm1166 = vcmp.gt.bf16.partialorder %v1070, 0
    %vm1167 = vcmp.gt.bf16.partialorder %v1071, 0
    %vm1168 = vcmp.gt.bf16.partialorder %v1072, 0
    %vm1169 = vcmp.gt.bf16.partialorder %v1073, 0
    %vm1170 = vcmp.gt.bf16.partialorder %v1074, 0
    %vm1171 = vcmp.gt.bf16.partialorder %v1075, 0
    %vm1172 = vcmp.gt.bf16.partialorder %v1076, 0
    %vm1173 = vcmp.gt.bf16.partialorder %v1077, 0
    %vm1174 = vcmp.gt.bf16.partialorder %v1078, 0
    %vm1175 = vcmp.gt.bf16.partialorder %v1079, 0
    %vm1176 = vcmp.gt.bf16.partialorder %v1080, 0
    %vm1177 = vcmp.gt.bf16.partialorder %v1081, 0
    %vm1178 = vcmp.gt.bf16.partialorder %v1082, 0
    %vm1179 = vcmp.gt.bf16.partialorder %v1083, 0
    %vm1180 = vcmp.gt.bf16.partialorder %v1084, 0
    %vm1181 = vcmp.gt.bf16.partialorder %v1085, 0
    %vm1182 = vcmp.gt.bf16.partialorder %v1086, 0
    %vm1183 = vcmp.gt.bf16.partialorder %v1087, 0
    %vm1184 = vcmp.gt.bf16.partialorder %v1088, 0
    %vm1185 = vcmp.gt.bf16.partialorder %v1089, 0
    %vm1186 = vcmp.gt.bf16.partialorder %v1090, 0
    %vm1187 = vcmp.gt.bf16.partialorder %v1091, 0
    %vm1188 = vcmp.gt.bf16.partialorder %v1092, 0
    %vm1189 = vcmp.gt.bf16.partialorder %v1093, 0
    %vm1190 = vcmp.gt.bf16.partialorder %v1094, 0
    %vm1191 = vcmp.gt.bf16.partialorder %v1095, 0
    %vm1192 = vcmp.gt.bf16.partialorder %v1096, 0
    %vm1193 = vcmp.gt.bf16.partialorder %v1097, 0
    %vm1194 = vcmp.gt.bf16.partialorder %v1098, 0
    %vm1195 = vcmp.gt.bf16.partialorder %v1099, 0
    %vm1196 = vcmp.gt.bf16.partialorder %v1100, 0
    %vm1197 = vcmp.gt.bf16.partialorder %v1101, 0
    %vm1198 = vcmp.gt.bf16.partialorder %v1102, 0
    %vm1199 = vcmp.gt.bf16.partialorder %v1103, 0
    %vm1200 = vcmp.gt.bf16.partialorder %v1104, 0
    %vm1201 = vcmp.gt.bf16.partialorder %v1105, 0
    %vm1202 = vcmp.gt.bf16.partialorder %v1106, 0
    %vm1203 = vcmp.gt.bf16.partialorder %v1107, 0
    %vm1204 = vcmp.gt.bf16.partialorder %v1108, 0
    %vm1205 = vcmp.gt.bf16.partialorder %v1109, 0
    %vm1206 = vcmp.gt.bf16.partialorder %v1110, 0
    %vm1207 = vcmp.gt.bf16.partialorder %v1111, 0
    %vm1208 = vcmp.gt.bf16.partialorder %v1112, 0
    %vm1209 = vcmp.gt.bf16.partialorder %v1113, 0
    %vm1210 = vcmp.gt.bf16.partialorder %v1114, 0
    %vm1211 = vcmp.gt.bf16.partialorder %v1115, 0
    %vm1212 = vcmp.gt.bf16.partialorder %v1116, 0
    %vm1213 = vcmp.gt.bf16.partialorder %v1117, 0
    %vm1214 = vcmp.gt.bf16.partialorder %v1118, 0
    %vm1215 = vcmp.gt.bf16.partialorder %v1119, 0
    %v1217 = vmul.bf16 %v1024, 1069105081
    %v1218 = vpow.bf16.pop %v1217
    %v1220 = vmul.bf16 %v1025, 1069105081
    %v1221 = vpow.bf16.pop %v1220
    %v1223 = vmul.bf16 %v1026, 1069105081
    %v1224 = vpow.bf16.pop %v1223
    %v1226 = vmul.bf16 %v1027, 1069105081
    %v1227 = vpow.bf16.pop %v1226
    %v1229 = vmul.bf16 %v1028, 1069105081
    %v1230 = vpow.bf16.pop %v1229
    %v1232 = vmul.bf16 %v1029, 1069105081
    %v1233 = vpow.bf16.pop %v1232
    %v1235 = vmul.bf16 %v1030, 1069105081
    %v1236 = vpow.bf16.pop %v1235
    %v1238 = vmul.bf16 %v1031, 1069105081
    %v1239 = vpow.bf16.pop %v1238
    %v1241 = vmul.bf16 %v1032, 1069105081
    %v1242 = vpow.bf16.pop %v1241
    %v1244 = vmul.bf16 %v1033, 1069105081
    %v1245 = vpow.bf16.pop %v1244
    %v1247 = vmul.bf16 %v1034, 1069105081
    %v1248 = vpow.bf16.pop %v1247
    %v1250 = vmul.bf16 %v1035, 1069105081
    %v1251 = vpow.bf16.pop %v1250
    %v1253 = vmul.bf16 %v1036, 1069105081
    %v1254 = vpow.bf16.pop %v1253
    %v1256 = vmul.bf16 %v1037, 1069105081
    %v1257 = vpow.bf16.pop %v1256
    %v1259 = vmul.bf16 %v1038, 1069105081
    %v1260 = vpow.bf16.pop %v1259
    %v1262 = vmul.bf16 %v1039, 1069105081
    %v1263 = vpow.bf16.pop %v1262
    %v1265 = vmul.bf16 %v1040, 1069105081
    %v1266 = vpow.bf16.pop %v1265
    %v1268 = vmul.bf16 %v1041, 1069105081
    %v1269 = vpow.bf16.pop %v1268
    %v1271 = vmul.bf16 %v1042, 1069105081
    %v1272 = vpow.bf16.pop %v1271
    %v1274 = vmul.bf16 %v1043, 1069105081
    %v1275 = vpow.bf16.pop %v1274
    %v1277 = vmul.bf16 %v1044, 1069105081
    %v1278 = vpow.bf16.pop %v1277
    %v1280 = vmul.bf16 %v1045, 1069105081
    %v1281 = vpow.bf16.pop %v1280
    %v1283 = vmul.bf16 %v1046, 1069105081
    %v1284 = vpow.bf16.pop %v1283
    %v1286 = vmul.bf16 %v1047, 1069105081
    %v1287 = vpow.bf16.pop %v1286
    %v1289 = vmul.bf16 %v1048, 1069105081
    %v1290 = vpow.bf16.pop %v1289
    %v1292 = vmul.bf16 %v1049, 1069105081
    %v1293 = vpow.bf16.pop %v1292
    %v1295 = vmul.bf16 %v1050, 1069105081
    %v1296 = vpow.bf16.pop %v1295
    %v1298 = vmul.bf16 %v1051, 1069105081
    %v1299 = vpow.bf16.pop %v1298
    %v1301 = vmul.bf16 %v1052, 1069105081
    %v1302 = vpow.bf16.pop %v1301
    %v1304 = vmul.bf16 %v1053, 1069105081
    %v1305 = vpow.bf16.pop %v1304
    %v1307 = vmul.bf16 %v1054, 1069105081
    %v1308 = vpow.bf16.pop %v1307
    %v1310 = vmul.bf16 %v1055, 1069105081
    %v1311 = vpow.bf16.pop %v1310
    %v1313 = vmul.bf16 %v1056, 1069105081
    %v1314 = vpow.bf16.pop %v1313
    %v1316 = vmul.bf16 %v1057, 1069105081
    %v1317 = vpow.bf16.pop %v1316
    %v1319 = vmul.bf16 %v1058, 1069105081
    %v1320 = vpow.bf16.pop %v1319
    %v1322 = vmul.bf16 %v1059, 1069105081
    %v1323 = vpow.bf16.pop %v1322
    %v1325 = vmul.bf16 %v1060, 1069105081
    %v1326 = vpow.bf16.pop %v1325
    %v1328 = vmul.bf16 %v1061, 1069105081
    %v1329 = vpow.bf16.pop %v1328
    %v1331 = vmul.bf16 %v1062, 1069105081
    %v1332 = vpow.bf16.pop %v1331
    %v1334 = vmul.bf16 %v1063, 1069105081
    %v1335 = vpow.bf16.pop %v1334
    %v1337 = vmul.bf16 %v1064, 1069105081
    %v1338 = vpow.bf16.pop %v1337
    %v1340 = vmul.bf16 %v1065, 1069105081
    %v1341 = vpow.bf16.pop %v1340
    %v1343 = vmul.bf16 %v1066, 1069105081
    %v1344 = vpow.bf16.pop %v1343
    %v1346 = vmul.bf16 %v1067, 1069105081
    %v1347 = vpow.bf16.pop %v1346
    %v1349 = vmul.bf16 %v1068, 1069105081
    %v1350 = vpow.bf16.pop %v1349
    %v1352 = vmul.bf16 %v1069, 1069105081
    %v1353 = vpow.bf16.pop %v1352
    %v1355 = vmul.bf16 %v1070, 1069105081
    %v1356 = vpow.bf16.pop %v1355
    %v1358 = vmul.bf16 %v1071, 1069105081
    %v1359 = vpow.bf16.pop %v1358
    %v1361 = vmul.bf16 %v1072, 1069105081
    %v1362 = vpow.bf16.pop %v1361
    %v1364 = vmul.bf16 %v1073, 1069105081
    %v1365 = vpow.bf16.pop %v1364
    %v1367 = vmul.bf16 %v1074, 1069105081
    %v1368 = vpow.bf16.pop %v1367
    %v1370 = vmul.bf16 %v1075, 1069105081
    %v1371 = vpow.bf16.pop %v1370
    %v1373 = vmul.bf16 %v1076, 1069105081
    %v1374 = vpow.bf16.pop %v1373
    %v1376 = vmul.bf16 %v1077, 1069105081
    %v1377 = vpow.bf16.pop %v1376
    %v1379 = vmul.bf16 %v1078, 1069105081
    %v1380 = vpow.bf16.pop %v1379
    %v1382 = vmul.bf16 %v1079, 1069105081
    %v1383 = vpow.bf16.pop %v1382
    %v1385 = vmul.bf16 %v1080, 1069105081
    %v1386 = vpow.bf16.pop %v1385
    %v1388 = vmul.bf16 %v1081, 1069105081
    %v1389 = vpow.bf16.pop %v1388
    %v1391 = vmul.bf16 %v1082, 1069105081
    %v1392 = vpow.bf16.pop %v1391
    %v1394 = vmul.bf16 %v1083, 1069105081
    %v1395 = vpow.bf16.pop %v1394
    %v1397 = vmul.bf16 %v1084, 1069105081
    %v1398 = vpow.bf16.pop %v1397
    %v1400 = vmul.bf16 %v1085, 1069105081
    %v1401 = vpow.bf16.pop %v1400
    %v1403 = vmul.bf16 %v1086, 1069105081
    %v1404 = vpow.bf16.pop %v1403
    %v1406 = vmul.bf16 %v1087, 1069105081
    %v1407 = vpow.bf16.pop %v1406
    %v1409 = vmul.bf16 %v1088, 1069105081
    %v1410 = vpow.bf16.pop %v1409
    %v1412 = vmul.bf16 %v1089, 1069105081
    %v1413 = vpow.bf16.pop %v1412
    %v1415 = vmul.bf16 %v1090, 1069105081
    %v1416 = vpow.bf16.pop %v1415
    %v1418 = vmul.bf16 %v1091, 1069105081
    %v1419 = vpow.bf16.pop %v1418
    %v1421 = vmul.bf16 %v1092, 1069105081
    %v1422 = vpow.bf16.pop %v1421
    %v1424 = vmul.bf16 %v1093, 1069105081
    %v1425 = vpow.bf16.pop %v1424
    %v1427 = vmul.bf16 %v1094, 1069105081
    %v1428 = vpow.bf16.pop %v1427
    %v1430 = vmul.bf16 %v1095, 1069105081
    %v1431 = vpow.bf16.pop %v1430
    %v1433 = vmul.bf16 %v1096, 1069105081
    %v1434 = vpow.bf16.pop %v1433
    %v1436 = vmul.bf16 %v1097, 1069105081
    %v1437 = vpow.bf16.pop %v1436
    %v1439 = vmul.bf16 %v1098, 1069105081
    %v1440 = vpow.bf16.pop %v1439
    %v1442 = vmul.bf16 %v1099, 1069105081
    %v1443 = vpow.bf16.pop %v1442
    %v1445 = vmul.bf16 %v1100, 1069105081
    %v1446 = vpow.bf16.pop %v1445
    %v1448 = vmul.bf16 %v1101, 1069105081
    %v1449 = vpow.bf16.pop %v1448
    %v1451 = vmul.bf16 %v1102, 1069105081
    %v1452 = vpow.bf16.pop %v1451
    %v1454 = vmul.bf16 %v1103, 1069105081
    %v1455 = vpow.bf16.pop %v1454
    %v1457 = vmul.bf16 %v1104, 1069105081
    %v1458 = vpow.bf16.pop %v1457
    %v1460 = vmul.bf16 %v1105, 1069105081
    %v1461 = vpow.bf16.pop %v1460
    %v1463 = vmul.bf16 %v1106, 1069105081
    %v1464 = vpow.bf16.pop %v1463
    %v1466 = vmul.bf16 %v1107, 1069105081
    %v1467 = vpow.bf16.pop %v1466
    %v1469 = vmul.bf16 %v1108, 1069105081
    %v1470 = vpow.bf16.pop %v1469
    %v1472 = vmul.bf16 %v1109, 1069105081
    %v1473 = vpow.bf16.pop %v1472
    %v1475 = vmul.bf16 %v1110, 1069105081
    %v1476 = vpow.bf16.pop %v1475
    %v1478 = vmul.bf16 %v1111, 1069105081
    %v1479 = vpow.bf16.pop %v1478
    %v1481 = vmul.bf16 %v1112, 1069105081
    %v1482 = vpow.bf16.pop %v1481
    %v1484 = vmul.bf16 %v1113, 1069105081
    %v1485 = vpow.bf16.pop %v1484
    %v1487 = vmul.bf16 %v1114, 1069105081
    %v1488 = vpow.bf16.pop %v1487
    %v1490 = vmul.bf16 %v1115, 1069105081
    %v1491 = vpow.bf16.pop %v1490
    %v1493 = vmul.bf16 %v1116, 1069105081
    %v1494 = vpow.bf16.pop %v1493
    %v1496 = vmul.bf16 %v1117, 1069105081
    %v1497 = vpow.bf16.pop %v1496
    %v1499 = vmul.bf16 %v1118, 1069105081
    %v1500 = vpow.bf16.pop %v1499
    %v1502 = vmul.bf16 %v1119, 1069105081
    %v1503 = vpow.bf16.pop %v1502
    %v1504 = vsub.bf16 %v1218, 1065369472
    %v1505 = vsub.bf16 %v1221, 1065369472
    %v1506 = vsub.bf16 %v1224, 1065369472
    %v1507 = vsub.bf16 %v1227, 1065369472
    %v1508 = vsub.bf16 %v1230, 1065369472
    %v1509 = vsub.bf16 %v1233, 1065369472
    %v1510 = vsub.bf16 %v1236, 1065369472
    %v1511 = vsub.bf16 %v1239, 1065369472
    %v1512 = vsub.bf16 %v1242, 1065369472
    %v1513 = vsub.bf16 %v1245, 1065369472
    %v1514 = vsub.bf16 %v1248, 1065369472
    %v1515 = vsub.bf16 %v1251, 1065369472
    %v1516 = vsub.bf16 %v1254, 1065369472
    %v1517 = vsub.bf16 %v1257, 1065369472
    %v1518 = vsub.bf16 %v1260, 1065369472
    %v1519 = vsub.bf16 %v1263, 1065369472
    %v1520 = vsub.bf16 %v1266, 1065369472
    %v1521 = vsub.bf16 %v1269, 1065369472
    %v1522 = vsub.bf16 %v1272, 1065369472
    %v1523 = vsub.bf16 %v1275, 1065369472
    %v1524 = vsub.bf16 %v1278, 1065369472
    %v1525 = vsub.bf16 %v1281, 1065369472
    %v1526 = vsub.bf16 %v1284, 1065369472
    %v1527 = vsub.bf16 %v1287, 1065369472
    %v1528 = vsub.bf16 %v1290, 1065369472
    %v1529 = vsub.bf16 %v1293, 1065369472
    %v1530 = vsub.bf16 %v1296, 1065369472
    %v1531 = vsub.bf16 %v1299, 1065369472
    %v1532 = vsub.bf16 %v1302, 1065369472
    %v1533 = vsub.bf16 %v1305, 1065369472
    %v1534 = vsub.bf16 %v1308, 1065369472
    %v1535 = vsub.bf16 %v1311, 1065369472
    %v1536 = vsub.bf16 %v1314, 1065369472
    %v1537 = vsub.bf16 %v1317, 1065369472
    %v1538 = vsub.bf16 %v1320, 1065369472
    %v1539 = vsub.bf16 %v1323, 1065369472
    %v1540 = vsub.bf16 %v1326, 1065369472
    %v1541 = vsub.bf16 %v1329, 1065369472
    %v1542 = vsub.bf16 %v1332, 1065369472
    %v1543 = vsub.bf16 %v1335, 1065369472
    %v1544 = vsub.bf16 %v1338, 1065369472
    %v1545 = vsub.bf16 %v1341, 1065369472
    %v1546 = vsub.bf16 %v1344, 1065369472
    %v1547 = vsub.bf16 %v1347, 1065369472
    %v1548 = vsub.bf16 %v1350, 1065369472
    %v1549 = vsub.bf16 %v1353, 1065369472
    %v1550 = vsub.bf16 %v1356, 1065369472
    %v1551 = vsub.bf16 %v1359, 1065369472
    %v1552 = vsub.bf16 %v1362, 1065369472
    %v1553 = vsub.bf16 %v1365, 1065369472
    %v1554 = vsub.bf16 %v1368, 1065369472
    %v1555 = vsub.bf16 %v1371, 1065369472
    %v1556 = vsub.bf16 %v1374, 1065369472
    %v1557 = vsub.bf16 %v1377, 1065369472
    %v1558 = vsub.bf16 %v1380, 1065369472
    %v1559 = vsub.bf16 %v1383, 1065369472
    %v1560 = vsub.bf16 %v1386, 1065369472
    %v1561 = vsub.bf16 %v1389, 1065369472
    %v1562 = vsub.bf16 %v1392, 1065369472
    %v1563 = vsub.bf16 %v1395, 1065369472
    %v1564 = vsub.bf16 %v1398, 1065369472
    %v1565 = vsub.bf16 %v1401, 1065369472
    %v1566 = vsub.bf16 %v1404, 1065369472
    %v1567 = vsub.bf16 %v1407, 1065369472
    %v1568 = vsub.bf16 %v1410, 1065369472
    %v1569 = vsub.bf16 %v1413, 1065369472
    %v1570 = vsub.bf16 %v1416, 1065369472
    %v1571 = vsub.bf16 %v1419, 1065369472
    %v1572 = vsub.bf16 %v1422, 1065369472
    %v1573 = vsub.bf16 %v1425, 1065369472
    %v1574 = vsub.bf16 %v1428, 1065369472
    %v1575 = vsub.bf16 %v1431, 1065369472
    %v1576 = vsub.bf16 %v1434, 1065369472
    %v1577 = vsub.bf16 %v1437, 1065369472
    %v1578 = vsub.bf16 %v1440, 1065369472
    %v1579 = vsub.bf16 %v1443, 1065369472
    %v1580 = vsub.bf16 %v1446, 1065369472
    %v1581 = vsub.bf16 %v1449, 1065369472
    %v1582 = vsub.bf16 %v1452, 1065369472
    %v1583 = vsub.bf16 %v1455, 1065369472
    %v1584 = vsub.bf16 %v1458, 1065369472
    %v1585 = vsub.bf16 %v1461, 1065369472
    %v1586 = vsub.bf16 %v1464, 1065369472
    %v1587 = vsub.bf16 %v1467, 1065369472
    %v1588 = vsub.bf16 %v1470, 1065369472
    %v1589 = vsub.bf16 %v1473, 1065369472
    %v1590 = vsub.bf16 %v1476, 1065369472
    %v1591 = vsub.bf16 %v1479, 1065369472
    %v1592 = vsub.bf16 %v1482, 1065369472
    %v1593 = vsub.bf16 %v1485, 1065369472
    %v1594 = vsub.bf16 %v1488, 1065369472
    %v1595 = vsub.bf16 %v1491, 1065369472
    %v1596 = vsub.bf16 %v1494, 1065369472
    %v1597 = vsub.bf16 %v1497, 1065369472
    %v1598 = vsub.bf16 %v1500, 1065369472
    %v1599 = vsub.bf16 %v1503, 1065369472
    %v1600 = vsel %vm1120, %v1024, %v1504
    %v1601 = vsel %vm1121, %v1025, %v1505
    %v1602 = vsel %vm1122, %v1026, %v1506
    %v1603 = vsel %vm1123, %v1027, %v1507
    %v1604 = vsel %vm1124, %v1028, %v1508
    %v1605 = vsel %vm1125, %v1029, %v1509
    %v1606 = vsel %vm1126, %v1030, %v1510
    %v1607 = vsel %vm1127, %v1031, %v1511
    %v1608 = vsel %vm1128, %v1032, %v1512
    %v1609 = vsel %vm1129, %v1033, %v1513
    %v1610 = vsel %vm1130, %v1034, %v1514
    %v1611 = vsel %vm1131, %v1035, %v1515
    %v1612 = vsel %vm1132, %v1036, %v1516
    %v1613 = vsel %vm1133, %v1037, %v1517
    %v1614 = vsel %vm1134, %v1038, %v1518
    %v1615 = vsel %vm1135, %v1039, %v1519
    %v1616 = vsel %vm1136, %v1040, %v1520
    %v1617 = vsel %vm1137, %v1041, %v1521
    %v1618 = vsel %vm1138, %v1042, %v1522
    %v1619 = vsel %vm1139, %v1043, %v1523
    %v1620 = vsel %vm1140, %v1044, %v1524
    %v1621 = vsel %vm1141, %v1045, %v1525
    %v1622 = vsel %vm1142, %v1046, %v1526
    %v1623 = vsel %vm1143, %v1047, %v1527
    %v1624 = vsel %vm1144, %v1048, %v1528
    %v1625 = vsel %vm1145, %v1049, %v1529
    %v1626 = vsel %vm1146, %v1050, %v1530
    %v1627 = vsel %vm1147, %v1051, %v1531
    %v1628 = vsel %vm1148, %v1052, %v1532
    %v1629 = vsel %vm1149, %v1053, %v1533
    %v1630 = vsel %vm1150, %v1054, %v1534
    %v1631 = vsel %vm1151, %v1055, %v1535
    %v1632 = vsel %vm1152, %v1056, %v1536
    %v1633 = vsel %vm1153, %v1057, %v1537
    %v1634 = vsel %vm1154, %v1058, %v1538
    %v1635 = vsel %vm1155, %v1059, %v1539
    %v1636 = vsel %vm1156, %v1060, %v1540
    %v1637 = vsel %vm1157, %v1061, %v1541
    %v1638 = vsel %vm1158, %v1062, %v1542
    %v1639 = vsel %vm1159, %v1063, %v1543
    %v1640 = vsel %vm1160, %v1064, %v1544
    %v1641 = vsel %vm1161, %v1065, %v1545
    %v1642 = vsel %vm1162, %v1066, %v1546
    %v1643 = vsel %vm1163, %v1067, %v1547
    %v1644 = vsel %vm1164, %v1068, %v1548
    %v1645 = vsel %vm1165, %v1069, %v1549
    %v1646 = vsel %vm1166, %v1070, %v1550
    %v1647 = vsel %vm1167, %v1071, %v1551
    %v1648 = vsel %vm1168, %v1072, %v1552
    %v1649 = vsel %vm1169, %v1073, %v1553
    %v1650 = vsel %vm1170, %v1074, %v1554
    %v1651 = vsel %vm1171, %v1075, %v1555
    %v1652 = vsel %vm1172, %v1076, %v1556
    %v1653 = vsel %vm1173, %v1077, %v1557
    %v1654 = vsel %vm1174, %v1078, %v1558
    %v1655 = vsel %vm1175, %v1079, %v1559
    %v1656 = vsel %vm1176, %v1080, %v1560
    %v1657 = vsel %vm1177, %v1081, %v1561
    %v1658 = vsel %vm1178, %v1082, %v1562
    %v1659 = vsel %vm1179, %v1083, %v1563
    %v1660 = vsel %vm1180, %v1084, %v1564
    %v1661 = vsel %vm1181, %v1085, %v1565
    %v1662 = vsel %vm1182, %v1086, %v1566
    %v1663 = vsel %vm1183, %v1087, %v1567
    %v1664 = vsel %vm1184, %v1088, %v1568
    %v1665 = vsel %vm1185, %v1089, %v1569
    %v1666 = vsel %vm1186, %v1090, %v1570
    %v1667 = vsel %vm1187, %v1091, %v1571
    %v1668 = vsel %vm1188, %v1092, %v1572
    %v1669 = vsel %vm1189, %v1093, %v1573
    %v1670 = vsel %vm1190, %v1094, %v1574
    %v1671 = vsel %vm1191, %v1095, %v1575
    %v1672 = vsel %vm1192, %v1096, %v1576
    %v1673 = vsel %vm1193, %v1097, %v1577
    %v1674 = vsel %vm1194, %v1098, %v1578
    %v1675 = vsel %vm1195, %v1099, %v1579
    %v1676 = vsel %vm1196, %v1100, %v1580
    %v1677 = vsel %vm1197, %v1101, %v1581
    %v1678 = vsel %vm1198, %v1102, %v1582
    %v1679 = vsel %vm1199, %v1103, %v1583
    %v1680 = vsel %vm1200, %v1104, %v1584
    %v1681 = vsel %vm1201, %v1105, %v1585
    %v1682 = vsel %vm1202, %v1106, %v1586
    %v1683 = vsel %vm1203, %v1107, %v1587
    %v1684 = vsel %vm1204, %v1108, %v1588
    %v1685 = vsel %vm1205, %v1109, %v1589
    %v1686 = vsel %vm1206, %v1110, %v1590
    %v1687 = vsel %vm1207, %v1111, %v1591
    %v1688 = vsel %vm1208, %v1112, %v1592
    %v1689 = vsel %vm1209, %v1113, %v1593
    %v1690 = vsel %vm1210, %v1114, %v1594
    %v1691 = vsel %vm1211, %v1115, %v1595
    %v1692 = vsel %vm1212, %v1116, %v1596
    %v1693 = vsel %vm1213, %v1117, %v1597
    %v1694 = vsel %vm1214, %v1118, %v1598
    %v1695 = vsel %vm1215, %v1119, %v1599
    %v1696 = vld [vmem:[#allocation3] sm:$0xff]
    %v1697 = vld [vmem:[#allocation3 + $0x8] sm:$0xff]
    %v1698 = vld [vmem:[#allocation3 + $0x10] sm:$0xff]
    %v1699 = vld [vmem:[#allocation3 + $0x18] sm:$0xff]
    %v1700 = vld [vmem:[#allocation3 + $0x20] sm:$0xff]
    %v1701 = vld [vmem:[#allocation3 + $0x28] sm:$0xff]
    %v1702 = vld [vmem:[#allocation3 + $0x30] sm:$0xff]
    %v1703 = vld [vmem:[#allocation3 + $0x38] sm:$0xff]
    %v1704 = vld [vmem:[#allocation3 + $0x40] sm:$0xff]
    %v1705 = vld [vmem:[#allocation3 + $0x48] sm:$0xff]
    %v1706 = vld [vmem:[#allocation3 + $0x50] sm:$0xff]
    %v1707 = vld [vmem:[#allocation3 + $0x58] sm:$0xff]
    %v1708 = vld [vmem:[#allocation3 + $0x60] sm:$0xff]
    %v1709 = vld [vmem:[#allocation3 + $0x68] sm:$0xff]
    %v1710 = vld [vmem:[#allocation3 + $0x70] sm:$0xff]
    %v1711 = vld [vmem:[#allocation3 + $0x78] sm:$0xff]
    %v1712 = vld [vmem:[#allocation3 + $0x80] sm:$0xff]
    %v1713 = vld [vmem:[#allocation3 + $0x88] sm:$0xff]
    %v1714 = vld [vmem:[#allocation3 + $0x90] sm:$0xff]
    %v1715 = vld [vmem:[#allocation3 + $0x98] sm:$0xff]
    %v1716 = vld [vmem:[#allocation3 + $0xa0] sm:$0xff]
    %v1717 = vld [vmem:[#allocation3 + $0xa8] sm:$0xff]
    %v1718 = vld [vmem:[#allocation3 + $0xb0] sm:$0xff]
    %v1719 = vld [vmem:[#allocation3 + $0xb8] sm:$0xff]
    %v1720 = vld [vmem:[#allocation3 + $0xc0] sm:$0xff]
    %v1721 = vld [vmem:[#allocation3 + $0xc8] sm:$0xff]
    %v1722 = vld [vmem:[#allocation3 + $0xd0] sm:$0xff]
    %v1723 = vld [vmem:[#allocation3 + $0xd8] sm:$0xff]
    %v1724 = vld [vmem:[#allocation3 + $0xe0] sm:$0xff]
    %v1725 = vld [vmem:[#allocation3 + $0xe8] sm:$0xff]
    %v1726 = vld [vmem:[#allocation3 + $0xf0] sm:$0xff]
    %v1727 = vld [vmem:[#allocation3 + $0xf8] sm:$0xff]
    %v1728 = vld [vmem:[#allocation3 + $0x100] sm:$0xff]
    %v1729 = vld [vmem:[#allocation3 + $0x108] sm:$0xff]
    %v1730 = vld [vmem:[#allocation3 + $0x110] sm:$0xff]
    %v1731 = vld [vmem:[#allocation3 + $0x118] sm:$0xff]
    %v1732 = vld [vmem:[#allocation3 + $0x120] sm:$0xff]
    %v1733 = vld [vmem:[#allocation3 + $0x128] sm:$0xff]
    %v1734 = vld [vmem:[#allocation3 + $0x130] sm:$0xff]
    %v1735 = vld [vmem:[#allocation3 + $0x138] sm:$0xff]
    %v1736 = vld [vmem:[#allocation3 + $0x140] sm:$0xff]
    %v1737 = vld [vmem:[#allocation3 + $0x148] sm:$0xff]
    %v1738 = vld [vmem:[#allocation3 + $0x150] sm:$0xff]
    %v1739 = vld [vmem:[#allocation3 + $0x158] sm:$0xff]
    %v1740 = vld [vmem:[#allocation3 + $0x160] sm:$0xff]
    %v1741 = vld [vmem:[#allocation3 + $0x168] sm:$0xff]
    %v1742 = vld [vmem:[#allocation3 + $0x170] sm:$0xff]
    %v1743 = vld [vmem:[#allocation3 + $0x178] sm:$0xff]
    %v1744 = vld [vmem:[#allocation3 + $0x180] sm:$0xff]
    %v1745 = vld [vmem:[#allocation3 + $0x188] sm:$0xff]
    %v1746 = vld [vmem:[#allocation3 + $0x190] sm:$0xff]
    %v1747 = vld [vmem:[#allocation3 + $0x198] sm:$0xff]
    %v1748 = vld [vmem:[#allocation3 + $0x1a0] sm:$0xff]
    %v1749 = vld [vmem:[#allocation3 + $0x1a8] sm:$0xff]
    %v1750 = vld [vmem:[#allocation3 + $0x1b0] sm:$0xff]
    %v1751 = vld [vmem:[#allocation3 + $0x1b8] sm:$0xff]
    %v1752 = vld [vmem:[#allocation3 + $0x1c0] sm:$0xff]
    %v1753 = vld [vmem:[#allocation3 + $0x1c8] sm:$0xff]
    %v1754 = vld [vmem:[#allocation3 + $0x1d0] sm:$0xff]
    %v1755 = vld [vmem:[#allocation3 + $0x1d8] sm:$0xff]
    %v1756 = vld [vmem:[#allocation3 + $0x1e0] sm:$0xff]
    %v1757 = vld [vmem:[#allocation3 + $0x1e8] sm:$0xff]
    %v1758 = vld [vmem:[#allocation3 + $0x1f0] sm:$0xff]
    %v1759 = vld [vmem:[#allocation3 + $0x1f8] sm:$0xff]
    %v1760 = vld [vmem:[#allocation3 + $0x200] sm:$0xff]
    %v1761 = vld [vmem:[#allocation3 + $0x208] sm:$0xff]
    %v1762 = vld [vmem:[#allocation3 + $0x210] sm:$0xff]
    %v1763 = vld [vmem:[#allocation3 + $0x218] sm:$0xff]
    %v1764 = vld [vmem:[#allocation3 + $0x220] sm:$0xff]
    %v1765 = vld [vmem:[#allocation3 + $0x228] sm:$0xff]
    %v1766 = vld [vmem:[#allocation3 + $0x230] sm:$0xff]
    %v1767 = vld [vmem:[#allocation3 + $0x238] sm:$0xff]
    %v1768 = vld [vmem:[#allocation3 + $0x240] sm:$0xff]
    %v1769 = vld [vmem:[#allocation3 + $0x248] sm:$0xff]
    %v1770 = vld [vmem:[#allocation3 + $0x250] sm:$0xff]
    %v1771 = vld [vmem:[#allocation3 + $0x258] sm:$0xff]
    %v1772 = vld [vmem:[#allocation3 + $0x260] sm:$0xff]
    %v1773 = vld [vmem:[#allocation3 + $0x268] sm:$0xff]
    %v1774 = vld [vmem:[#allocation3 + $0x270] sm:$0xff]
    %v1775 = vld [vmem:[#allocation3 + $0x278] sm:$0xff]
    %v1776 = vld [vmem:[#allocation3 + $0x280] sm:$0xff]
    %v1777 = vld [vmem:[#allocation3 + $0x288] sm:$0xff]
    %v1778 = vld [vmem:[#allocation3 + $0x290] sm:$0xff]
    %v1779 = vld [vmem:[#allocation3 + $0x298] sm:$0xff]
    %v1780 = vld [vmem:[#allocation3 + $0x2a0] sm:$0xff]
    %v1781 = vld [vmem:[#allocation3 + $0x2a8] sm:$0xff]
    %v1782 = vld [vmem:[#allocation3 + $0x2b0] sm:$0xff]
    %v1783 = vld [vmem:[#allocation3 + $0x2b8] sm:$0xff]
    %v1784 = vld [vmem:[#allocation3 + $0x2c0] sm:$0xff]
    %v1785 = vld [vmem:[#allocation3 + $0x2c8] sm:$0xff]
    %v1786 = vld [vmem:[#allocation3 + $0x2d0] sm:$0xff]
    %v1787 = vld [vmem:[#allocation3 + $0x2d8] sm:$0xff]
    %v1788 = vld [vmem:[#allocation3 + $0x2e0] sm:$0xff]
    %v1789 = vld [vmem:[#allocation3 + $0x2e8] sm:$0xff]
    %v1790 = vld [vmem:[#allocation3 + $0x2f0] sm:$0xff]
    %v1791 = vld [vmem:[#allocation3 + $0x2f8] sm:$0xff]
    %v1792 = vld [vmem:[#allocation3 + $0x300] sm:$0xff]
    %v1793 = vld [vmem:[#allocation3 + $0x308] sm:$0xff]
    %v1794 = vld [vmem:[#allocation3 + $0x310] sm:$0xff]
    %v1795 = vld [vmem:[#allocation3 + $0x318] sm:$0xff]
    %v1796 = vld [vmem:[#allocation3 + $0x320] sm:$0xff]
    %v1797 = vld [vmem:[#allocation3 + $0x328] sm:$0xff]
    %v1798 = vld [vmem:[#allocation3 + $0x330] sm:$0xff]
    %v1799 = vld [vmem:[#allocation3 + $0x338] sm:$0xff]
    %v1800 = vld [vmem:[#allocation3 + $0x340] sm:$0xff]
    %v1801 = vld [vmem:[#allocation3 + $0x348] sm:$0xff]
    %v1802 = vld [vmem:[#allocation3 + $0x350] sm:$0xff]
    %v1803 = vld [vmem:[#allocation3 + $0x358] sm:$0xff]
    %v1804 = vld [vmem:[#allocation3 + $0x360] sm:$0xff]
    %v1805 = vld [vmem:[#allocation3 + $0x368] sm:$0xff]
    %v1806 = vld [vmem:[#allocation3 + $0x370] sm:$0xff]
    %v1807 = vld [vmem:[#allocation3 + $0x378] sm:$0xff]
    %v1808 = vld [vmem:[#allocation3 + $0x380] sm:$0xff]
    %v1809 = vld [vmem:[#allocation3 + $0x388] sm:$0xff]
    %v1810 = vld [vmem:[#allocation3 + $0x390] sm:$0xff]
    %v1811 = vld [vmem:[#allocation3 + $0x398] sm:$0xff]
    %v1812 = vld [vmem:[#allocation3 + $0x3a0] sm:$0xff]
    %v1813 = vld [vmem:[#allocation3 + $0x3a8] sm:$0xff]
    %v1814 = vld [vmem:[#allocation3 + $0x3b0] sm:$0xff]
    %v1815 = vld [vmem:[#allocation3 + $0x3b8] sm:$0xff]
    %v1816 = vld [vmem:[#allocation3 + $0x3c0] sm:$0xff]
    %v1817 = vld [vmem:[#allocation3 + $0x3c8] sm:$0xff]
    %v1818 = vld [vmem:[#allocation3 + $0x3d0] sm:$0xff]
    %v1819 = vld [vmem:[#allocation3 + $0x3d8] sm:$0xff]
    %v1820 = vld [vmem:[#allocation3 + $0x3e0] sm:$0xff]
    %v1821 = vld [vmem:[#allocation3 + $0x3e8] sm:$0xff]
    %v1822 = vld [vmem:[#allocation3 + $0x3f0] sm:$0xff]
    %v1823 = vld [vmem:[#allocation3 + $0x3f8] sm:$0xff]
    %v1952 = vunpack.c.l.b16 %v1696
    %v1953 = vunpack.c.h.b16 %v1696
    %v1954 = vunpack.c.l.b16 %v1697
    %v1955 = vunpack.c.h.b16 %v1697
    %v1956 = vunpack.c.l.b16 %v1698
    %v1957 = vunpack.c.h.b16 %v1698
    %v1958 = vunpack.c.l.b16 %v1699
    %v1959 = vunpack.c.h.b16 %v1699
    %v1960 = vunpack.c.l.b16 %v1700
    %v1961 = vunpack.c.h.b16 %v1700
    %v1962 = vunpack.c.l.b16 %v1701
    %v1963 = vunpack.c.h.b16 %v1701
    %v1964 = vunpack.c.l.b16 %v1702
    %v1965 = vunpack.c.h.b16 %v1702
    %v1966 = vunpack.c.l.b16 %v1703
    %v1967 = vunpack.c.h.b16 %v1703
    %v1968 = vunpack.c.l.b16 %v1704
    %v1969 = vunpack.c.h.b16 %v1704
    %v1970 = vunpack.c.l.b16 %v1705
    %v1971 = vunpack.c.h.b16 %v1705
    %v1972 = vunpack.c.l.b16 %v1706
    %v1973 = vunpack.c.h.b16 %v1706
    %v1974 = vunpack.c.l.b16 %v1707
    %v1975 = vunpack.c.h.b16 %v1707
    %v1976 = vunpack.c.l.b16 %v1708
    %v1977 = vunpack.c.h.b16 %v1708
    %v1978 = vunpack.c.l.b16 %v1709
    %v1979 = vunpack.c.h.b16 %v1709
    %v1980 = vunpack.c.l.b16 %v1710
    %v1981 = vunpack.c.h.b16 %v1710
    %v1982 = vunpack.c.l.b16 %v1711
    %v1983 = vunpack.c.h.b16 %v1711
    %v1984 = vunpack.c.l.b16 %v1712
    %v1985 = vunpack.c.h.b16 %v1712
    %v1986 = vunpack.c.l.b16 %v1713
    %v1987 = vunpack.c.h.b16 %v1713
    %v1988 = vunpack.c.l.b16 %v1714
    %v1989 = vunpack.c.h.b16 %v1714
    %v1990 = vunpack.c.l.b16 %v1715
    %v1991 = vunpack.c.h.b16 %v1715
    %v1992 = vunpack.c.l.b16 %v1716
    %v1993 = vunpack.c.h.b16 %v1716
    %v1994 = vunpack.c.l.b16 %v1717
    %v1995 = vunpack.c.h.b16 %v1717
    %v1996 = vunpack.c.l.b16 %v1718
    %v1997 = vunpack.c.h.b16 %v1718
    %v1998 = vunpack.c.l.b16 %v1719
    %v1999 = vunpack.c.h.b16 %v1719
    %v2000 = vunpack.c.l.b16 %v1720
    %v2001 = vunpack.c.h.b16 %v1720
    %v2002 = vunpack.c.l.b16 %v1721
    %v2003 = vunpack.c.h.b16 %v1721
    %v2004 = vunpack.c.l.b16 %v1722
    %v2005 = vunpack.c.h.b16 %v1722
    %v2006 = vunpack.c.l.b16 %v1723
    %v2007 = vunpack.c.h.b16 %v1723
    %v2008 = vunpack.c.l.b16 %v1724
    %v2009 = vunpack.c.h.b16 %v1724
    %v2010 = vunpack.c.l.b16 %v1725
    %v2011 = vunpack.c.h.b16 %v1725
    %v2012 = vunpack.c.l.b16 %v1726
    %v2013 = vunpack.c.h.b16 %v1726
    %v2014 = vunpack.c.l.b16 %v1727
    %v2015 = vunpack.c.h.b16 %v1727
    %v2016 = vunpack.c.l.b16 %v1728
    %v2017 = vunpack.c.h.b16 %v1728
    %v2018 = vunpack.c.l.b16 %v1729
    %v2019 = vunpack.c.h.b16 %v1729
    %v2020 = vunpack.c.l.b16 %v1730
    %v2021 = vunpack.c.h.b16 %v1730
    %v2022 = vunpack.c.l.b16 %v1731
    %v2023 = vunpack.c.h.b16 %v1731
    %v2024 = vunpack.c.l.b16 %v1732
    %v2025 = vunpack.c.h.b16 %v1732
    %v2026 = vunpack.c.l.b16 %v1733
    %v2027 = vunpack.c.h.b16 %v1733
    %v2028 = vunpack.c.l.b16 %v1734
    %v2029 = vunpack.c.h.b16 %v1734
    %v2030 = vunpack.c.l.b16 %v1735
    %v2031 = vunpack.c.h.b16 %v1735
    %v2032 = vunpack.c.l.b16 %v1736
    %v2033 = vunpack.c.h.b16 %v1736
    %v2034 = vunpack.c.l.b16 %v1737
    %v2035 = vunpack.c.h.b16 %v1737
    %v2036 = vunpack.c.l.b16 %v1738
    %v2037 = vunpack.c.h.b16 %v1738
    %v2038 = vunpack.c.l.b16 %v1739
    %v2039 = vunpack.c.h.b16 %v1739
    %v2040 = vunpack.c.l.b16 %v1740
    %v2041 = vunpack.c.h.b16 %v1740
    %v2042 = vunpack.c.l.b16 %v1741
    %v2043 = vunpack.c.h.b16 %v1741
    %v2044 = vunpack.c.l.b16 %v1742
    %v2045 = vunpack.c.h.b16 %v1742
    %v2046 = vunpack.c.l.b16 %v1743
    %v2047 = vunpack.c.h.b16 %v1743
    %v2048 = vunpack.c.l.b16 %v1744
    %v2049 = vunpack.c.h.b16 %v1744
    %v2050 = vunpack.c.l.b16 %v1745
    %v2051 = vunpack.c.h.b16 %v1745
    %v2052 = vunpack.c.l.b16 %v1746
    %v2053 = vunpack.c.h.b16 %v1746
    %v2054 = vunpack.c.l.b16 %v1747
    %v2055 = vunpack.c.h.b16 %v1747
    %v2056 = vunpack.c.l.b16 %v1748
    %v2057 = vunpack.c.h.b16 %v1748
    %v2058 = vunpack.c.l.b16 %v1749
    %v2059 = vunpack.c.h.b16 %v1749
    %v2060 = vunpack.c.l.b16 %v1750
    %v2061 = vunpack.c.h.b16 %v1750
    %v2062 = vunpack.c.l.b16 %v1751
    %v2063 = vunpack.c.h.b16 %v1751
    %v2064 = vunpack.c.l.b16 %v1752
    %v2065 = vunpack.c.h.b16 %v1752
    %v2066 = vunpack.c.l.b16 %v1753
    %v2067 = vunpack.c.h.b16 %v1753
    %v2068 = vunpack.c.l.b16 %v1754
    %v2069 = vunpack.c.h.b16 %v1754
    %v2070 = vunpack.c.l.b16 %v1755
    %v2071 = vunpack.c.h.b16 %v1755
    %v2072 = vunpack.c.l.b16 %v1756
    %v2073 = vunpack.c.h.b16 %v1756
    %v2074 = vunpack.c.l.b16 %v1757
    %v2075 = vunpack.c.h.b16 %v1757
    %v2076 = vunpack.c.l.b16 %v1758
    %v2077 = vunpack.c.h.b16 %v1758
    %v2078 = vunpack.c.l.b16 %v1759
    %v2079 = vunpack.c.h.b16 %v1759
    %v2080 = vunpack.c.l.b16 %v1760
    %v2081 = vunpack.c.h.b16 %v1760
    %v2082 = vunpack.c.l.b16 %v1761
    %v2083 = vunpack.c.h.b16 %v1761
    %v2084 = vunpack.c.l.b16 %v1762
    %v2085 = vunpack.c.h.b16 %v1762
    %v2086 = vunpack.c.l.b16 %v1763
    %v2087 = vunpack.c.h.b16 %v1763
    %v2088 = vunpack.c.l.b16 %v1764
    %v2089 = vunpack.c.h.b16 %v1764
    %v2090 = vunpack.c.l.b16 %v1765
    %v2091 = vunpack.c.h.b16 %v1765
    %v2092 = vunpack.c.l.b16 %v1766
    %v2093 = vunpack.c.h.b16 %v1766
    %v2094 = vunpack.c.l.b16 %v1767
    %v2095 = vunpack.c.h.b16 %v1767
    %v2096 = vunpack.c.l.b16 %v1768
    %v2097 = vunpack.c.h.b16 %v1768
    %v2098 = vunpack.c.l.b16 %v1769
    %v2099 = vunpack.c.h.b16 %v1769
    %v2100 = vunpack.c.l.b16 %v1770
    %v2101 = vunpack.c.h.b16 %v1770
    %v2102 = vunpack.c.l.b16 %v1771
    %v2103 = vunpack.c.h.b16 %v1771
    %v2104 = vunpack.c.l.b16 %v1772
    %v2105 = vunpack.c.h.b16 %v1772
    %v2106 = vunpack.c.l.b16 %v1773
    %v2107 = vunpack.c.h.b16 %v1773
    %v2108 = vunpack.c.l.b16 %v1774
    %v2109 = vunpack.c.h.b16 %v1774
    %v2110 = vunpack.c.l.b16 %v1775
    %v2111 = vunpack.c.h.b16 %v1775
    %v2112 = vunpack.c.l.b16 %v1776
    %v2113 = vunpack.c.h.b16 %v1776
    %v2114 = vunpack.c.l.b16 %v1777
    %v2115 = vunpack.c.h.b16 %v1777
    %v2116 = vunpack.c.l.b16 %v1778
    %v2117 = vunpack.c.h.b16 %v1778
    %v2118 = vunpack.c.l.b16 %v1779
    %v2119 = vunpack.c.h.b16 %v1779
    %v2120 = vunpack.c.l.b16 %v1780
    %v2121 = vunpack.c.h.b16 %v1780
    %v2122 = vunpack.c.l.b16 %v1781
    %v2123 = vunpack.c.h.b16 %v1781
    %v2124 = vunpack.c.l.b16 %v1782
    %v2125 = vunpack.c.h.b16 %v1782
    %v2126 = vunpack.c.l.b16 %v1783
    %v2127 = vunpack.c.h.b16 %v1783
    %v2128 = vunpack.c.l.b16 %v1784
    %v2129 = vunpack.c.h.b16 %v1784
    %v2130 = vunpack.c.l.b16 %v1785
    %v2131 = vunpack.c.h.b16 %v1785
    %v2132 = vunpack.c.l.b16 %v1786
    %v2133 = vunpack.c.h.b16 %v1786
    %v2134 = vunpack.c.l.b16 %v1787
    %v2135 = vunpack.c.h.b16 %v1787
    %v2136 = vunpack.c.l.b16 %v1788
    %v2137 = vunpack.c.h.b16 %v1788
    %v2138 = vunpack.c.l.b16 %v1789
    %v2139 = vunpack.c.h.b16 %v1789
    %v2140 = vunpack.c.l.b16 %v1790
    %v2141 = vunpack.c.h.b16 %v1790
    %v2142 = vunpack.c.l.b16 %v1791
    %v2143 = vunpack.c.h.b16 %v1791
    %v2144 = vunpack.c.l.b16 %v1792
    %v2145 = vunpack.c.h.b16 %v1792
    %v2146 = vunpack.c.l.b16 %v1793
    %v2147 = vunpack.c.h.b16 %v1793
    %v2148 = vunpack.c.l.b16 %v1794
    %v2149 = vunpack.c.h.b16 %v1794
    %v2150 = vunpack.c.l.b16 %v1795
    %v2151 = vunpack.c.h.b16 %v1795
    %v2152 = vunpack.c.l.b16 %v1796
    %v2153 = vunpack.c.h.b16 %v1796
    %v2154 = vunpack.c.l.b16 %v1797
    %v2155 = vunpack.c.h.b16 %v1797
    %v2156 = vunpack.c.l.b16 %v1798
    %v2157 = vunpack.c.h.b16 %v1798
    %v2158 = vunpack.c.l.b16 %v1799
    %v2159 = vunpack.c.h.b16 %v1799
    %v2160 = vunpack.c.l.b16 %v1800
    %v2161 = vunpack.c.h.b16 %v1800
    %v2162 = vunpack.c.l.b16 %v1801
    %v2163 = vunpack.c.h.b16 %v1801
    %v2164 = vunpack.c.l.b16 %v1802
    %v2165 = vunpack.c.h.b16 %v1802
    %v2166 = vunpack.c.l.b16 %v1803
    %v2167 = vunpack.c.h.b16 %v1803
    %v2168 = vunpack.c.l.b16 %v1804
    %v2169 = vunpack.c.h.b16 %v1804
    %v2170 = vunpack.c.l.b16 %v1805
    %v2171 = vunpack.c.h.b16 %v1805
    %v2172 = vunpack.c.l.b16 %v1806
    %v2173 = vunpack.c.h.b16 %v1806
    %v2174 = vunpack.c.l.b16 %v1807
    %v2175 = vunpack.c.h.b16 %v1807
    %v2176 = vunpack.c.l.b16 %v1808
    %v2177 = vunpack.c.h.b16 %v1808
    %v2178 = vunpack.c.l.b16 %v1809
    %v2179 = vunpack.c.h.b16 %v1809
    %v2180 = vunpack.c.l.b16 %v1810
    %v2181 = vunpack.c.h.b16 %v1810
    %v2182 = vunpack.c.l.b16 %v1811
    %v2183 = vunpack.c.h.b16 %v1811
    %v2184 = vunpack.c.l.b16 %v1812
    %v2185 = vunpack.c.h.b16 %v1812
    %v2186 = vunpack.c.l.b16 %v1813
    %v2187 = vunpack.c.h.b16 %v1813
    %v2188 = vunpack.c.l.b16 %v1814
    %v2189 = vunpack.c.h.b16 %v1814
    %v2190 = vunpack.c.l.b16 %v1815
    %v2191 = vunpack.c.h.b16 %v1815
    %v2192 = vunpack.c.l.b16 %v1816
    %v2193 = vunpack.c.h.b16 %v1816
    %v2194 = vunpack.c.l.b16 %v1817
    %v2195 = vunpack.c.h.b16 %v1817
    %v2196 = vunpack.c.l.b16 %v1818
    %v2197 = vunpack.c.h.b16 %v1818
    %v2198 = vunpack.c.l.b16 %v1819
    %v2199 = vunpack.c.h.b16 %v1819
    %v2200 = vunpack.c.l.b16 %v1820
    %v2201 = vunpack.c.h.b16 %v1820
    %v2202 = vunpack.c.l.b16 %v1821
    %v2203 = vunpack.c.h.b16 %v1821
    %v2204 = vunpack.c.l.b16 %v1822
    %v2205 = vunpack.c.h.b16 %v1822
    %v2206 = vunpack.c.l.b16 %v1823
    %v2207 = vunpack.c.h.b16 %v1823
    %v2208 = vpack.c.b16 %v1956, %v1952
    %v2209 = vpack.c.b16 %v1957, %v1953
    %v2210 = vpack.c.b16 %v1958, %v1954
    %v2211 = vpack.c.b16 %v1959, %v1955
    %v2212 = vpack.c.b16 %v1964, %v1960
    %v2213 = vpack.c.b16 %v1965, %v1961
    %v2214 = vpack.c.b16 %v1966, %v1962
    %v2215 = vpack.c.b16 %v1967, %v1963
    %v2216 = vpack.c.b16 %v1972, %v1968
    %v2217 = vpack.c.b16 %v1973, %v1969
    %v2218 = vpack.c.b16 %v1974, %v1970
    %v2219 = vpack.c.b16 %v1975, %v1971
    %v2220 = vpack.c.b16 %v1980, %v1976
    %v2221 = vpack.c.b16 %v1981, %v1977
    %v2222 = vpack.c.b16 %v1982, %v1978
    %v2223 = vpack.c.b16 %v1983, %v1979
    %v2224 = vpack.c.b16 %v1988, %v1984
    %v2225 = vpack.c.b16 %v1989, %v1985
    %v2226 = vpack.c.b16 %v1990, %v1986
    %v2227 = vpack.c.b16 %v1991, %v1987
    %v2228 = vpack.c.b16 %v1996, %v1992
    %v2229 = vpack.c.b16 %v1997, %v1993
    %v2230 = vpack.c.b16 %v1998, %v1994
    %v2231 = vpack.c.b16 %v1999, %v1995
    %v2232 = vpack.c.b16 %v2004, %v2000
    %v2233 = vpack.c.b16 %v2005, %v2001
    %v2234 = vpack.c.b16 %v2006, %v2002
    %v2235 = vpack.c.b16 %v2007, %v2003
    %v2236 = vpack.c.b16 %v2012, %v2008
    %v2237 = vpack.c.b16 %v2013, %v2009
    %v2238 = vpack.c.b16 %v2014, %v2010
    %v2239 = vpack.c.b16 %v2015, %v2011
    %v2240 = vpack.c.b16 %v2020, %v2016
    %v2241 = vpack.c.b16 %v2021, %v2017
    %v2242 = vpack.c.b16 %v2022, %v2018
    %v2243 = vpack.c.b16 %v2023, %v2019
    %v2244 = vpack.c.b16 %v2028, %v2024
    %v2245 = vpack.c.b16 %v2029, %v2025
    %v2246 = vpack.c.b16 %v2030, %v2026
    %v2247 = vpack.c.b16 %v2031, %v2027
    %v2248 = vpack.c.b16 %v2036, %v2032
    %v2249 = vpack.c.b16 %v2037, %v2033
    %v2250 = vpack.c.b16 %v2038, %v2034
    %v2251 = vpack.c.b16 %v2039, %v2035
    %v2252 = vpack.c.b16 %v2044, %v2040
    %v2253 = vpack.c.b16 %v2045, %v2041
    %v2254 = vpack.c.b16 %v2046, %v2042
    %v2255 = vpack.c.b16 %v2047, %v2043
    %v2256 = vpack.c.b16 %v2052, %v2048
    %v2257 = vpack.c.b16 %v2053, %v2049
    %v2258 = vpack.c.b16 %v2054, %v2050
    %v2259 = vpack.c.b16 %v2055, %v2051
    %v2260 = vpack.c.b16 %v2060, %v2056
    %v2261 = vpack.c.b16 %v2061, %v2057
    %v2262 = vpack.c.b16 %v2062, %v2058
    %v2263 = vpack.c.b16 %v2063, %v2059
    %v2264 = vpack.c.b16 %v2068, %v2064
    %v2265 = vpack.c.b16 %v2069, %v2065
    %v2266 = vpack.c.b16 %v2070, %v2066
    %v2267 = vpack.c.b16 %v2071, %v2067
    %v2268 = vpack.c.b16 %v2076, %v2072
    %v2269 = vpack.c.b16 %v2077, %v2073
    %v2270 = vpack.c.b16 %v2078, %v2074
    %v2271 = vpack.c.b16 %v2079, %v2075
    %v2272 = vpack.c.b16 %v2084, %v2080
    %v2273 = vpack.c.b16 %v2085, %v2081
    %v2274 = vpack.c.b16 %v2086, %v2082
    %v2275 = vpack.c.b16 %v2087, %v2083
    %v2276 = vpack.c.b16 %v2092, %v2088
    %v2277 = vpack.c.b16 %v2093, %v2089
    %v2278 = vpack.c.b16 %v2094, %v2090
    %v2279 = vpack.c.b16 %v2095, %v2091
    %v2280 = vpack.c.b16 %v2100, %v2096
    %v2281 = vpack.c.b16 %v2101, %v2097
    %v2282 = vpack.c.b16 %v2102, %v2098
    %v2283 = vpack.c.b16 %v2103, %v2099
    %v2284 = vpack.c.b16 %v2108, %v2104
    %v2285 = vpack.c.b16 %v2109, %v2105
    %v2286 = vpack.c.b16 %v2110, %v2106
    %v2287 = vpack.c.b16 %v2111, %v2107
    %v2288 = vpack.c.b16 %v2116, %v2112
    %v2289 = vpack.c.b16 %v2117, %v2113
    %v2290 = vpack.c.b16 %v2118, %v2114
    %v2291 = vpack.c.b16 %v2119, %v2115
    %v2292 = vpack.c.b16 %v2124, %v2120
    %v2293 = vpack.c.b16 %v2125, %v2121
    %v2294 = vpack.c.b16 %v2126, %v2122
    %v2295 = vpack.c.b16 %v2127, %v2123
    %v2296 = vpack.c.b16 %v2132, %v2128
    %v2297 = vpack.c.b16 %v2133, %v2129
    %v2298 = vpack.c.b16 %v2134, %v2130
    %v2299 = vpack.c.b16 %v2135, %v2131
    %v2300 = vpack.c.b16 %v2140, %v2136
    %v2301 = vpack.c.b16 %v2141, %v2137
    %v2302 = vpack.c.b16 %v2142, %v2138
    %v2303 = vpack.c.b16 %v2143, %v2139
    %v2304 = vpack.c.b16 %v2148, %v2144
    %v2305 = vpack.c.b16 %v2149, %v2145
    %v2306 = vpack.c.b16 %v2150, %v2146
    %v2307 = vpack.c.b16 %v2151, %v2147
    %v2308 = vpack.c.b16 %v2156, %v2152
    %v2309 = vpack.c.b16 %v2157, %v2153
    %v2310 = vpack.c.b16 %v2158, %v2154
    %v2311 = vpack.c.b16 %v2159, %v2155
    %v2312 = vpack.c.b16 %v2164, %v2160
    %v2313 = vpack.c.b16 %v2165, %v2161
    %v2314 = vpack.c.b16 %v2166, %v2162
    %v2315 = vpack.c.b16 %v2167, %v2163
    %v2316 = vpack.c.b16 %v2172, %v2168
    %v2317 = vpack.c.b16 %v2173, %v2169
    %v2318 = vpack.c.b16 %v2174, %v2170
    %v2319 = vpack.c.b16 %v2175, %v2171
    %v2320 = vpack.c.b16 %v2180, %v2176
    %v2321 = vpack.c.b16 %v2181, %v2177
    %v2322 = vpack.c.b16 %v2182, %v2178
    %v2323 = vpack.c.b16 %v2183, %v2179
    %v2324 = vpack.c.b16 %v2188, %v2184
    %v2325 = vpack.c.b16 %v2189, %v2185
    %v2326 = vpack.c.b16 %v2190, %v2186
    %v2327 = vpack.c.b16 %v2191, %v2187
    %v2328 = vpack.c.b16 %v2196, %v2192
    %v2329 = vpack.c.b16 %v2197, %v2193
    %v2330 = vpack.c.b16 %v2198, %v2194
    %v2331 = vpack.c.b16 %v2199, %v2195
    %v2332 = vpack.c.b16 %v2204, %v2200
    %v2333 = vpack.c.b16 %v2205, %v2201
    %v2334 = vpack.c.b16 %v2206, %v2202
    %v2335 = vpack.c.b16 %v2207, %v2203
    %2464 = vmatprep.subr.bf16.mxu0 %v1622
    %2465 = vmatpush1.bf16.msra.mxu0 %v1621
    %2466 = vmatprep.subr.bf16.mxu0 %v1619
    %2467 = vmatpush1.bf16.msra.mxu0 %v1618
    %2468 = vmatprep.subr.bf16.mxu0 %v1616
    %2469 = vmatpush1.bf16.msra.mxu0 %v1615
    %2470 = vmatprep.subr.bf16.mxu0 %v1613
    %2471 = vmatpush1.bf16.msra.mxu0 %v1612
    %2472 = vmatprep.subr.bf16.mxu0 %v1610
    %2473 = vmatpush1.bf16.msra.mxu0 %v1609
    %2474 = vmatprep.subr.bf16.mxu0 %v1607
    %2475 = vmatpush1.bf16.msra.mxu0 %v1606
    %2476 = vmatprep.subr.bf16.mxu0 %v1604
    %2477 = vmatpush1.bf16.msra.mxu0 %v1603
    %2478 = vmatprep.subr.bf16.mxu0 %v1601
    %2479 = vmatpush1.bf16.msra.mxu0 %v1600
    %2480 = vmatprep.subr.bf16.mxu0 %v1646
    %2481 = vmatpush2.bf16.msra.mxu0 %v1645
    %2482 = vmatprep.subr.bf16.mxu0 %v1643
    %2483 = vmatpush2.bf16.msra.mxu0 %v1642
    %2484 = vmatprep.subr.bf16.mxu0 %v1640
    %2485 = vmatpush2.bf16.msra.mxu0 %v1639
    %2486 = vmatprep.subr.bf16.mxu0 %v1637
    %2487 = vmatpush2.bf16.msra.mxu0 %v1636
    %2488 = vmatprep.subr.bf16.mxu0 %v1634
    %2489 = vmatpush2.bf16.msra.mxu0 %v1633
    %2490 = vmatprep.subr.bf16.mxu0 %v1631
    %2491 = vmatpush2.bf16.msra.mxu0 %v1630
    %2492 = vmatprep.subr.bf16.mxu0 %v1628
    %2493 = vmatpush2.bf16.msra.mxu0 %v1627
    %2494 = vmatprep.subr.bf16.mxu0 %v1625
    %2495 = vmatpush2.bf16.msra.mxu0 %v1624
    %2496 = vmatprep.mubr.bf16.mxu0 %v2209
    %2497 = vmatmul.mubr.bf16.gmra.mxu0 %v2208
    %v2498 = vpop.f32.mrf.mxu0
    %v2499 = vadd.f32 0.0, %v2498
    %v2500 = vpop.f32.mrf.mxu0
    %v2501 = vadd.f32 0.0, %v2500
    %v2502 = vpop.f32.mrf.mxu0
    %v2503 = vadd.f32 0.0, %v2502
    %v2504 = vpop.f32.mrf.mxu0
    %v2505 = vadd.f32 0.0, %v2504
    %2506 = vmatprep.mubr.bf16.mxu0 %v2213
    %2507 = vmatmul.mubr.bf16.gmra.mxu0 %v2212
    %v2508 = vpop.f32.mrf.mxu0
    %v2509 = vadd.f32 0.0, %v2508
    %v2510 = vpop.f32.mrf.mxu0
    %v2511 = vadd.f32 0.0, %v2510
    %v2512 = vpop.f32.mrf.mxu0
    %v2513 = vadd.f32 0.0, %v2512
    %v2514 = vpop.f32.mrf.mxu0
    %v2515 = vadd.f32 0.0, %v2514
    %2516 = vmatprep.mubr.bf16.mxu0 %v2217
    %2517 = vmatmul.mubr.bf16.gmra.mxu0 %v2216
    %v2518 = vpop.f32.mrf.mxu0
    %v2519 = vadd.f32 0.0, %v2518
    %v2520 = vpop.f32.mrf.mxu0
    %v2521 = vadd.f32 0.0, %v2520
    %v2522 = vpop.f32.mrf.mxu0
    %v2523 = vadd.f32 0.0, %v2522
    %v2524 = vpop.f32.mrf.mxu0
    %v2525 = vadd.f32 0.0, %v2524
    %2526 = vmatprep.mubr.bf16.mxu0 %v2221
    %2527 = vmatmul.mubr.bf16.gmra.mxu0 %v2220
    %v2528 = vpop.f32.mrf.mxu0
    %v2529 = vadd.f32 0.0, %v2528
    %v2530 = vpop.f32.mrf.mxu0
    %v2531 = vadd.f32 0.0, %v2530
    %v2532 = vpop.f32.mrf.mxu0
    %v2533 = vadd.f32 0.0, %v2532
    %v2534 = vpop.f32.mrf.mxu0
    %v2535 = vadd.f32 0.0, %v2534
    %2536 = vmatprep.mubr.bf16.mxu0 %v2225
    %2537 = vmatmul.mubr.bf16.gmra.mxu0 %v2224
    %v2538 = vpop.f32.mrf.mxu0
    %v2539 = vadd.f32 0.0, %v2538
    %v2540 = vpop.f32.mrf.mxu0
    %v2541 = vadd.f32 0.0, %v2540
    %v2542 = vpop.f32.mrf.mxu0
    %v2543 = vadd.f32 0.0, %v2542
    %v2544 = vpop.f32.mrf.mxu0
    %v2545 = vadd.f32 0.0, %v2544
    %2546 = vmatprep.mubr.bf16.mxu0 %v2229
    %2547 = vmatmul.mubr.bf16.gmra.mxu0 %v2228
    %v2548 = vpop.f32.mrf.mxu0
    %v2549 = vadd.f32 0.0, %v2548
    %v2550 = vpop.f32.mrf.mxu0
    %v2551 = vadd.f32 0.0, %v2550
    %v2552 = vpop.f32.mrf.mxu0
    %v2553 = vadd.f32 0.0, %v2552
    %v2554 = vpop.f32.mrf.mxu0
    %v2555 = vadd.f32 0.0, %v2554
    %2556 = vmatprep.mubr.bf16.mxu0 %v2233
    %2557 = vmatmul.mubr.bf16.gmra.mxu0 %v2232
    %v2558 = vpop.f32.mrf.mxu0
    %v2559 = vadd.f32 0.0, %v2558
    %v2560 = vpop.f32.mrf.mxu0
    %v2561 = vadd.f32 0.0, %v2560
    %v2562 = vpop.f32.mrf.mxu0
    %v2563 = vadd.f32 0.0, %v2562
    %v2564 = vpop.f32.mrf.mxu0
    %v2565 = vadd.f32 0.0, %v2564
    %2566 = vmatprep.mubr.bf16.mxu0 %v2237
    %2567 = vmatmul.mubr.bf16.gmra.mxu0 %v2236
    %v2568 = vpop.f32.mrf.mxu0
    %v2569 = vadd.f32 0.0, %v2568
    %v2570 = vpop.f32.mrf.mxu0
    %v2571 = vadd.f32 0.0, %v2570
    %v2572 = vpop.f32.mrf.mxu0
    %v2573 = vadd.f32 0.0, %v2572
    %v2574 = vpop.f32.mrf.mxu0
    %v2575 = vadd.f32 0.0, %v2574
    %2576 = vmatprep.mubr.bf16.mxu0 %v2241
    %2577 = vmatmul.mubr.bf16.gmra.mxu0 %v2240
    %v2578 = vpop.f32.mrf.mxu0
    %v2579 = vadd.f32 0.0, %v2578
    %v2580 = vpop.f32.mrf.mxu0
    %v2581 = vadd.f32 0.0, %v2580
    %v2582 = vpop.f32.mrf.mxu0
    %v2583 = vadd.f32 0.0, %v2582
    %v2584 = vpop.f32.mrf.mxu0
    %v2585 = vadd.f32 0.0, %v2584
    %2586 = vmatprep.mubr.bf16.mxu0 %v2245
    %2587 = vmatmul.mubr.bf16.gmra.mxu0 %v2244
    %v2588 = vpop.f32.mrf.mxu0
    %v2589 = vadd.f32 0.0, %v2588
    %v2590 = vpop.f32.mrf.mxu0
    %v2591 = vadd.f32 0.0, %v2590
    %v2592 = vpop.f32.mrf.mxu0
    %v2593 = vadd.f32 0.0, %v2592
    %v2594 = vpop.f32.mrf.mxu0
    %v2595 = vadd.f32 0.0, %v2594
    %2596 = vmatprep.mubr.bf16.mxu0 %v2249
    %2597 = vmatmul.mubr.bf16.gmra.mxu0 %v2248
    %v2598 = vpop.f32.mrf.mxu0
    %v2599 = vadd.f32 0.0, %v2598
    %v2600 = vpop.f32.mrf.mxu0
    %v2601 = vadd.f32 0.0, %v2600
    %v2602 = vpop.f32.mrf.mxu0
    %v2603 = vadd.f32 0.0, %v2602
    %v2604 = vpop.f32.mrf.mxu0
    %v2605 = vadd.f32 0.0, %v2604
    %2606 = vmatprep.mubr.bf16.mxu0 %v2253
    %2607 = vmatmul.mubr.bf16.gmra.mxu0 %v2252
    %v2608 = vpop.f32.mrf.mxu0
    %v2609 = vadd.f32 0.0, %v2608
    %v2610 = vpop.f32.mrf.mxu0
    %v2611 = vadd.f32 0.0, %v2610
    %v2612 = vpop.f32.mrf.mxu0
    %v2613 = vadd.f32 0.0, %v2612
    %v2614 = vpop.f32.mrf.mxu0
    %v2615 = vadd.f32 0.0, %v2614
    %2616 = vmatprep.mubr.bf16.mxu0 %v2257
    %2617 = vmatmul.mubr.bf16.gmra.mxu0 %v2256
    %v2618 = vpop.f32.mrf.mxu0
    %v2619 = vadd.f32 0.0, %v2618
    %v2620 = vpop.f32.mrf.mxu0
    %v2621 = vadd.f32 0.0, %v2620
    %v2622 = vpop.f32.mrf.mxu0
    %v2623 = vadd.f32 0.0, %v2622
    %v2624 = vpop.f32.mrf.mxu0
    %v2625 = vadd.f32 0.0, %v2624
    %2626 = vmatprep.mubr.bf16.mxu0 %v2261
    %2627 = vmatmul.mubr.bf16.gmra.mxu0 %v2260
    %v2628 = vpop.f32.mrf.mxu0
    %v2629 = vadd.f32 0.0, %v2628
    %v2630 = vpop.f32.mrf.mxu0
    %v2631 = vadd.f32 0.0, %v2630
    %v2632 = vpop.f32.mrf.mxu0
    %v2633 = vadd.f32 0.0, %v2632
    %v2634 = vpop.f32.mrf.mxu0
    %v2635 = vadd.f32 0.0, %v2634
    %2636 = vmatprep.mubr.bf16.mxu0 %v2265
    %2637 = vmatmul.mubr.bf16.gmra.mxu0 %v2264
    %v2638 = vpop.f32.mrf.mxu0
    %v2639 = vadd.f32 0.0, %v2638
    %v2640 = vpop.f32.mrf.mxu0
    %v2641 = vadd.f32 0.0, %v2640
    %v2642 = vpop.f32.mrf.mxu0
    %v2643 = vadd.f32 0.0, %v2642
    %v2644 = vpop.f32.mrf.mxu0
    %v2645 = vadd.f32 0.0, %v2644
    %2646 = vmatprep.mubr.bf16.mxu0 %v2269
    %2647 = vmatmul.mubr.bf16.gmra.mxu0 %v2268
    %v2648 = vpop.f32.mrf.mxu0
    %v2649 = vadd.f32 0.0, %v2648
    %v2650 = vpop.f32.mrf.mxu0
    %v2651 = vadd.f32 0.0, %v2650
    %v2652 = vpop.f32.mrf.mxu0
    %v2653 = vadd.f32 0.0, %v2652
    %v2654 = vpop.f32.mrf.mxu0
    %v2655 = vadd.f32 0.0, %v2654
    %2656 = vmatprep.mubr.bf16.mxu0 %v2273
    %2657 = vmatmul.mubr.bf16.gmra.mxu0 %v2272
    %v2658 = vpop.f32.mrf.mxu0
    %v2659 = vadd.f32 0.0, %v2658
    %v2660 = vpop.f32.mrf.mxu0
    %v2661 = vadd.f32 0.0, %v2660
    %v2662 = vpop.f32.mrf.mxu0
    %v2663 = vadd.f32 0.0, %v2662
    %v2664 = vpop.f32.mrf.mxu0
    %v2665 = vadd.f32 0.0, %v2664
    %2666 = vmatprep.mubr.bf16.mxu0 %v2277
    %2667 = vmatmul.mubr.bf16.gmra.mxu0 %v2276
    %v2668 = vpop.f32.mrf.mxu0
    %v2669 = vadd.f32 0.0, %v2668
    %v2670 = vpop.f32.mrf.mxu0
    %v2671 = vadd.f32 0.0, %v2670
    %v2672 = vpop.f32.mrf.mxu0
    %v2673 = vadd.f32 0.0, %v2672
    %v2674 = vpop.f32.mrf.mxu0
    %v2675 = vadd.f32 0.0, %v2674
    %2676 = vmatprep.mubr.bf16.mxu0 %v2281
    %2677 = vmatmul.mubr.bf16.gmra.mxu0 %v2280
    %v2678 = vpop.f32.mrf.mxu0
    %v2679 = vadd.f32 0.0, %v2678
    %v2680 = vpop.f32.mrf.mxu0
    %v2681 = vadd.f32 0.0, %v2680
    %v2682 = vpop.f32.mrf.mxu0
    %v2683 = vadd.f32 0.0, %v2682
    %v2684 = vpop.f32.mrf.mxu0
    %v2685 = vadd.f32 0.0, %v2684
    %2686 = vmatprep.mubr.bf16.mxu0 %v2285
    %2687 = vmatmul.mubr.bf16.gmra.mxu0 %v2284
    %v2688 = vpop.f32.mrf.mxu0
    %v2689 = vadd.f32 0.0, %v2688
    %v2690 = vpop.f32.mrf.mxu0
    %v2691 = vadd.f32 0.0, %v2690
    %v2692 = vpop.f32.mrf.mxu0
    %v2693 = vadd.f32 0.0, %v2692
    %v2694 = vpop.f32.mrf.mxu0
    %v2695 = vadd.f32 0.0, %v2694
    %2696 = vmatprep.mubr.bf16.mxu0 %v2289
    %2697 = vmatmul.mubr.bf16.gmra.mxu0 %v2288
    %v2698 = vpop.f32.mrf.mxu0
    %v2699 = vadd.f32 0.0, %v2698
    %v2700 = vpop.f32.mrf.mxu0
    %v2701 = vadd.f32 0.0, %v2700
    %v2702 = vpop.f32.mrf.mxu0
    %v2703 = vadd.f32 0.0, %v2702
    %v2704 = vpop.f32.mrf.mxu0
    %v2705 = vadd.f32 0.0, %v2704
    %2706 = vmatprep.mubr.bf16.mxu0 %v2293
    %2707 = vmatmul.mubr.bf16.gmra.mxu0 %v2292
    %v2708 = vpop.f32.mrf.mxu0
    %v2709 = vadd.f32 0.0, %v2708
    %v2710 = vpop.f32.mrf.mxu0
    %v2711 = vadd.f32 0.0, %v2710
    %v2712 = vpop.f32.mrf.mxu0
    %v2713 = vadd.f32 0.0, %v2712
    %v2714 = vpop.f32.mrf.mxu0
    %v2715 = vadd.f32 0.0, %v2714
    %2716 = vmatprep.mubr.bf16.mxu0 %v2297
    %2717 = vmatmul.mubr.bf16.gmra.mxu0 %v2296
    %v2718 = vpop.f32.mrf.mxu0
    %v2719 = vadd.f32 0.0, %v2718
    %v2720 = vpop.f32.mrf.mxu0
    %v2721 = vadd.f32 0.0, %v2720
    %v2722 = vpop.f32.mrf.mxu0
    %v2723 = vadd.f32 0.0, %v2722
    %v2724 = vpop.f32.mrf.mxu0
    %v2725 = vadd.f32 0.0, %v2724
    %2726 = vmatprep.mubr.bf16.mxu0 %v2301
    %2727 = vmatmul.mubr.bf16.gmra.mxu0 %v2300
    %v2728 = vpop.f32.mrf.mxu0
    %v2729 = vadd.f32 0.0, %v2728
    %v2730 = vpop.f32.mrf.mxu0
    %v2731 = vadd.f32 0.0, %v2730
    %v2732 = vpop.f32.mrf.mxu0
    %v2733 = vadd.f32 0.0, %v2732
    %v2734 = vpop.f32.mrf.mxu0
    %v2735 = vadd.f32 0.0, %v2734
    %2736 = vmatprep.mubr.bf16.mxu0 %v2305
    %2737 = vmatmul.mubr.bf16.gmra.mxu0 %v2304
    %v2738 = vpop.f32.mrf.mxu0
    %v2739 = vadd.f32 0.0, %v2738
    %v2740 = vpop.f32.mrf.mxu0
    %v2741 = vadd.f32 0.0, %v2740
    %v2742 = vpop.f32.mrf.mxu0
    %v2743 = vadd.f32 0.0, %v2742
    %v2744 = vpop.f32.mrf.mxu0
    %v2745 = vadd.f32 0.0, %v2744
    %2746 = vmatprep.mubr.bf16.mxu0 %v2309
    %2747 = vmatmul.mubr.bf16.gmra.mxu0 %v2308
    %v2748 = vpop.f32.mrf.mxu0
    %v2749 = vadd.f32 0.0, %v2748
    %v2750 = vpop.f32.mrf.mxu0
    %v2751 = vadd.f32 0.0, %v2750
    %v2752 = vpop.f32.mrf.mxu0
    %v2753 = vadd.f32 0.0, %v2752
    %v2754 = vpop.f32.mrf.mxu0
    %v2755 = vadd.f32 0.0, %v2754
    %2756 = vmatprep.mubr.bf16.mxu0 %v2313
    %2757 = vmatmul.mubr.bf16.gmra.mxu0 %v2312
    %v2758 = vpop.f32.mrf.mxu0
    %v2759 = vadd.f32 0.0, %v2758
    %v2760 = vpop.f32.mrf.mxu0
    %v2761 = vadd.f32 0.0, %v2760
    %v2762 = vpop.f32.mrf.mxu0
    %v2763 = vadd.f32 0.0, %v2762
    %v2764 = vpop.f32.mrf.mxu0
    %v2765 = vadd.f32 0.0, %v2764
    %2766 = vmatprep.mubr.bf16.mxu0 %v2317
    %2767 = vmatmul.mubr.bf16.gmra.mxu0 %v2316
    %v2768 = vpop.f32.mrf.mxu0
    %v2769 = vadd.f32 0.0, %v2768
    %v2770 = vpop.f32.mrf.mxu0
    %v2771 = vadd.f32 0.0, %v2770
    %v2772 = vpop.f32.mrf.mxu0
    %v2773 = vadd.f32 0.0, %v2772
    %v2774 = vpop.f32.mrf.mxu0
    %v2775 = vadd.f32 0.0, %v2774
    %2776 = vmatprep.mubr.bf16.mxu0 %v2321
    %2777 = vmatmul.mubr.bf16.gmra.mxu0 %v2320
    %v2778 = vpop.f32.mrf.mxu0
    %v2779 = vadd.f32 0.0, %v2778
    %v2780 = vpop.f32.mrf.mxu0
    %v2781 = vadd.f32 0.0, %v2780
    %v2782 = vpop.f32.mrf.mxu0
    %v2783 = vadd.f32 0.0, %v2782
    %v2784 = vpop.f32.mrf.mxu0
    %v2785 = vadd.f32 0.0, %v2784
    %2786 = vmatprep.mubr.bf16.mxu0 %v2325
    %2787 = vmatmul.mubr.bf16.gmra.mxu0 %v2324
    %v2788 = vpop.f32.mrf.mxu0
    %v2789 = vadd.f32 0.0, %v2788
    %v2790 = vpop.f32.mrf.mxu0
    %v2791 = vadd.f32 0.0, %v2790
    %v2792 = vpop.f32.mrf.mxu0
    %v2793 = vadd.f32 0.0, %v2792
    %v2794 = vpop.f32.mrf.mxu0
    %v2795 = vadd.f32 0.0, %v2794
    %2796 = vmatprep.mubr.bf16.mxu0 %v2329
    %2797 = vmatmul.mubr.bf16.gmra.mxu0 %v2328
    %v2798 = vpop.f32.mrf.mxu0
    %v2799 = vadd.f32 0.0, %v2798
    %v2800 = vpop.f32.mrf.mxu0
    %v2801 = vadd.f32 0.0, %v2800
    %v2802 = vpop.f32.mrf.mxu0
    %v2803 = vadd.f32 0.0, %v2802
    %v2804 = vpop.f32.mrf.mxu0
    %v2805 = vadd.f32 0.0, %v2804
    %2806 = vmatprep.mubr.bf16.mxu0 %v2333
    %2807 = vmatmul.mubr.bf16.gmra.mxu0 %v2332
    %v2808 = vpop.f32.mrf.mxu0
    %v2809 = vadd.f32 0.0, %v2808
    %v2810 = vpop.f32.mrf.mxu0
    %v2811 = vadd.f32 0.0, %v2810
    %v2812 = vpop.f32.mrf.mxu0
    %v2813 = vadd.f32 0.0, %v2812
    %v2814 = vpop.f32.mrf.mxu0
    %v2815 = vadd.f32 0.0, %v2814
    %2816 = vdwg.mxu0
    %2817 = vmatprep.subr.bf16.mxu0 %v1670
    %2818 = vmatpush1.bf16.msra.mxu0 %v1669
    %2819 = vmatprep.subr.bf16.mxu0 %v1667
    %2820 = vmatpush1.bf16.msra.mxu0 %v1666
    %2821 = vmatprep.subr.bf16.mxu0 %v1664
    %2822 = vmatpush1.bf16.msra.mxu0 %v1663
    %2823 = vmatprep.subr.bf16.mxu0 %v1661
    %2824 = vmatpush1.bf16.msra.mxu0 %v1660
    %2825 = vmatprep.subr.bf16.mxu0 %v1658
    %2826 = vmatpush1.bf16.msra.mxu0 %v1657
    %2827 = vmatprep.subr.bf16.mxu0 %v1655
    %2828 = vmatpush1.bf16.msra.mxu0 %v1654
    %2829 = vmatprep.subr.bf16.mxu0 %v1652
    %2830 = vmatpush1.bf16.msra.mxu0 %v1651
    %2831 = vmatprep.subr.bf16.mxu0 %v1649
    %2832 = vmatpush1.bf16.msra.mxu0 %v1648
    %2833 = vmatprep.subr.bf16.mxu0 %v1694
    %2834 = vmatpush2.bf16.msra.mxu0 %v1693
    %2835 = vmatprep.subr.bf16.mxu0 %v1691
    %2836 = vmatpush2.bf16.msra.mxu0 %v1690
    %2837 = vmatprep.subr.bf16.mxu0 %v1688
    %2838 = vmatpush2.bf16.msra.mxu0 %v1687
    %2839 = vmatprep.subr.bf16.mxu0 %v1685
    %2840 = vmatpush2.bf16.msra.mxu0 %v1684
    %2841 = vmatprep.subr.bf16.mxu0 %v1682
    %2842 = vmatpush2.bf16.msra.mxu0 %v1681
    %2843 = vmatprep.subr.bf16.mxu0 %v1679
    %2844 = vmatpush2.bf16.msra.mxu0 %v1678
    %2845 = vmatprep.subr.bf16.mxu0 %v1676
    %2846 = vmatpush2.bf16.msra.mxu0 %v1675
    %2847 = vmatprep.subr.bf16.mxu0 %v1673
    %2848 = vmatpush2.bf16.msra.mxu0 %v1672
    %2849 = vmatprep.mubr.bf16.mxu0 %v2211
    %2850 = vmatmul.mubr.bf16.gmra.mxu0 %v2210
    %v2851 = vpop.f32.mrf.mxu0
    %v2852 = vadd.f32 %v2499, %v2851
    %v2853 = vpop.f32.mrf.mxu0
    %v2854 = vadd.f32 %v2501, %v2853
    %v2855 = vpop.f32.mrf.mxu0
    %v2856 = vadd.f32 %v2503, %v2855
    %v2857 = vpop.f32.mrf.mxu0
    %v2858 = vadd.f32 %v2505, %v2857
    %2859 = vmatprep.mubr.bf16.mxu0 %v2215
    %2860 = vmatmul.mubr.bf16.gmra.mxu0 %v2214
    %v2861 = vpop.f32.mrf.mxu0
    %v2862 = vadd.f32 %v2509, %v2861
    %v2863 = vpop.f32.mrf.mxu0
    %v2864 = vadd.f32 %v2511, %v2863
    %v2865 = vpop.f32.mrf.mxu0
    %v2866 = vadd.f32 %v2513, %v2865
    %v2867 = vpop.f32.mrf.mxu0
    %v2868 = vadd.f32 %v2515, %v2867
    %2869 = vmatprep.mubr.bf16.mxu0 %v2219
    %2870 = vmatmul.mubr.bf16.gmra.mxu0 %v2218
    %v2871 = vpop.f32.mrf.mxu0
    %v2872 = vadd.f32 %v2519, %v2871
    %v2873 = vpop.f32.mrf.mxu0
    %v2874 = vadd.f32 %v2521, %v2873
    %v2875 = vpop.f32.mrf.mxu0
    %v2876 = vadd.f32 %v2523, %v2875
    %v2877 = vpop.f32.mrf.mxu0
    %v2878 = vadd.f32 %v2525, %v2877
    %2879 = vmatprep.mubr.bf16.mxu0 %v2223
    %2880 = vmatmul.mubr.bf16.gmra.mxu0 %v2222
    %v2881 = vpop.f32.mrf.mxu0
    %v2882 = vadd.f32 %v2529, %v2881
    %v2883 = vpop.f32.mrf.mxu0
    %v2884 = vadd.f32 %v2531, %v2883
    %v2885 = vpop.f32.mrf.mxu0
    %v2886 = vadd.f32 %v2533, %v2885
    %v2887 = vpop.f32.mrf.mxu0
    %v2888 = vadd.f32 %v2535, %v2887
    %2889 = vmatprep.mubr.bf16.mxu0 %v2227
    %2890 = vmatmul.mubr.bf16.gmra.mxu0 %v2226
    %v2891 = vpop.f32.mrf.mxu0
    %v2892 = vadd.f32 %v2539, %v2891
    %v2893 = vpop.f32.mrf.mxu0
    %v2894 = vadd.f32 %v2541, %v2893
    %v2895 = vpop.f32.mrf.mxu0
    %v2896 = vadd.f32 %v2543, %v2895
    %v2897 = vpop.f32.mrf.mxu0
    %v2898 = vadd.f32 %v2545, %v2897
    %2899 = vmatprep.mubr.bf16.mxu0 %v2231
    %2900 = vmatmul.mubr.bf16.gmra.mxu0 %v2230
    %v2901 = vpop.f32.mrf.mxu0
    %v2902 = vadd.f32 %v2549, %v2901
    %v2903 = vpop.f32.mrf.mxu0
    %v2904 = vadd.f32 %v2551, %v2903
    %v2905 = vpop.f32.mrf.mxu0
    %v2906 = vadd.f32 %v2553, %v2905
    %v2907 = vpop.f32.mrf.mxu0
    %v2908 = vadd.f32 %v2555, %v2907
    %2909 = vmatprep.mubr.bf16.mxu0 %v2235
    %2910 = vmatmul.mubr.bf16.gmra.mxu0 %v2234
    %v2911 = vpop.f32.mrf.mxu0
    %v2912 = vadd.f32 %v2559, %v2911
    %v2913 = vpop.f32.mrf.mxu0
    %v2914 = vadd.f32 %v2561, %v2913
    %v2915 = vpop.f32.mrf.mxu0
    %v2916 = vadd.f32 %v2563, %v2915
    %v2917 = vpop.f32.mrf.mxu0
    %v2918 = vadd.f32 %v2565, %v2917
    %2919 = vmatprep.mubr.bf16.mxu0 %v2239
    %2920 = vmatmul.mubr.bf16.gmra.mxu0 %v2238
    %v2921 = vpop.f32.mrf.mxu0
    %v2922 = vadd.f32 %v2569, %v2921
    %v2923 = vpop.f32.mrf.mxu0
    %v2924 = vadd.f32 %v2571, %v2923
    %v2925 = vpop.f32.mrf.mxu0
    %v2926 = vadd.f32 %v2573, %v2925
    %v2927 = vpop.f32.mrf.mxu0
    %v2928 = vadd.f32 %v2575, %v2927
    %2929 = vmatprep.mubr.bf16.mxu0 %v2243
    %2930 = vmatmul.mubr.bf16.gmra.mxu0 %v2242
    %v2931 = vpop.f32.mrf.mxu0
    %v2932 = vadd.f32 %v2579, %v2931
    %v2933 = vpop.f32.mrf.mxu0
    %v2934 = vadd.f32 %v2581, %v2933
    %v2935 = vpop.f32.mrf.mxu0
    %v2936 = vadd.f32 %v2583, %v2935
    %v2937 = vpop.f32.mrf.mxu0
    %v2938 = vadd.f32 %v2585, %v2937
    %2939 = vmatprep.mubr.bf16.mxu0 %v2247
    %2940 = vmatmul.mubr.bf16.gmra.mxu0 %v2246
    %v2941 = vpop.f32.mrf.mxu0
    %v2942 = vadd.f32 %v2589, %v2941
    %v2943 = vpop.f32.mrf.mxu0
    %v2944 = vadd.f32 %v2591, %v2943
    %v2945 = vpop.f32.mrf.mxu0
    %v2946 = vadd.f32 %v2593, %v2945
    %v2947 = vpop.f32.mrf.mxu0
    %v2948 = vadd.f32 %v2595, %v2947
    %2949 = vmatprep.mubr.bf16.mxu0 %v2251
    %2950 = vmatmul.mubr.bf16.gmra.mxu0 %v2250
    %v2951 = vpop.f32.mrf.mxu0
    %v2952 = vadd.f32 %v2599, %v2951
    %v2953 = vpop.f32.mrf.mxu0
    %v2954 = vadd.f32 %v2601, %v2953
    %v2955 = vpop.f32.mrf.mxu0
    %v2956 = vadd.f32 %v2603, %v2955
    %v2957 = vpop.f32.mrf.mxu0
    %v2958 = vadd.f32 %v2605, %v2957
    %2959 = vmatprep.mubr.bf16.mxu0 %v2255
    %2960 = vmatmul.mubr.bf16.gmra.mxu0 %v2254
    %v2961 = vpop.f32.mrf.mxu0
    %v2962 = vadd.f32 %v2609, %v2961
    %v2963 = vpop.f32.mrf.mxu0
    %v2964 = vadd.f32 %v2611, %v2963
    %v2965 = vpop.f32.mrf.mxu0
    %v2966 = vadd.f32 %v2613, %v2965
    %v2967 = vpop.f32.mrf.mxu0
    %v2968 = vadd.f32 %v2615, %v2967
    %2969 = vmatprep.mubr.bf16.mxu0 %v2259
    %2970 = vmatmul.mubr.bf16.gmra.mxu0 %v2258
    %v2971 = vpop.f32.mrf.mxu0
    %v2972 = vadd.f32 %v2619, %v2971
    %v2973 = vpop.f32.mrf.mxu0
    %v2974 = vadd.f32 %v2621, %v2973
    %v2975 = vpop.f32.mrf.mxu0
    %v2976 = vadd.f32 %v2623, %v2975
    %v2977 = vpop.f32.mrf.mxu0
    %v2978 = vadd.f32 %v2625, %v2977
    %2979 = vmatprep.mubr.bf16.mxu0 %v2263
    %2980 = vmatmul.mubr.bf16.gmra.mxu0 %v2262
    %v2981 = vpop.f32.mrf.mxu0
    %v2982 = vadd.f32 %v2629, %v2981
    %v2983 = vpop.f32.mrf.mxu0
    %v2984 = vadd.f32 %v2631, %v2983
    %v2985 = vpop.f32.mrf.mxu0
    %v2986 = vadd.f32 %v2633, %v2985
    %v2987 = vpop.f32.mrf.mxu0
    %v2988 = vadd.f32 %v2635, %v2987
    %2989 = vmatprep.mubr.bf16.mxu0 %v2267
    %2990 = vmatmul.mubr.bf16.gmra.mxu0 %v2266
    %v2991 = vpop.f32.mrf.mxu0
    %v2992 = vadd.f32 %v2639, %v2991
    %v2993 = vpop.f32.mrf.mxu0
    %v2994 = vadd.f32 %v2641, %v2993
    %v2995 = vpop.f32.mrf.mxu0
    %v2996 = vadd.f32 %v2643, %v2995
    %v2997 = vpop.f32.mrf.mxu0
    %v2998 = vadd.f32 %v2645, %v2997
    %2999 = vmatprep.mubr.bf16.mxu0 %v2271
    %3000 = vmatmul.mubr.bf16.gmra.mxu0 %v2270
    %v3001 = vpop.f32.mrf.mxu0
    %v3002 = vadd.f32 %v2649, %v3001
    %v3003 = vpop.f32.mrf.mxu0
    %v3004 = vadd.f32 %v2651, %v3003
    %v3005 = vpop.f32.mrf.mxu0
    %v3006 = vadd.f32 %v2653, %v3005
    %v3007 = vpop.f32.mrf.mxu0
    %v3008 = vadd.f32 %v2655, %v3007
    %3009 = vmatprep.mubr.bf16.mxu0 %v2275
    %3010 = vmatmul.mubr.bf16.gmra.mxu0 %v2274
    %v3011 = vpop.f32.mrf.mxu0
    %v3012 = vadd.f32 %v2659, %v3011
    %v3013 = vpop.f32.mrf.mxu0
    %v3014 = vadd.f32 %v2661, %v3013
    %v3015 = vpop.f32.mrf.mxu0
    %v3016 = vadd.f32 %v2663, %v3015
    %v3017 = vpop.f32.mrf.mxu0
    %v3018 = vadd.f32 %v2665, %v3017
    %3019 = vmatprep.mubr.bf16.mxu0 %v2279
    %3020 = vmatmul.mubr.bf16.gmra.mxu0 %v2278
    %v3021 = vpop.f32.mrf.mxu0
    %v3022 = vadd.f32 %v2669, %v3021
    %v3023 = vpop.f32.mrf.mxu0
    %v3024 = vadd.f32 %v2671, %v3023
    %v3025 = vpop.f32.mrf.mxu0
    %v3026 = vadd.f32 %v2673, %v3025
    %v3027 = vpop.f32.mrf.mxu0
    %v3028 = vadd.f32 %v2675, %v3027
    %3029 = vmatprep.mubr.bf16.mxu0 %v2283
    %3030 = vmatmul.mubr.bf16.gmra.mxu0 %v2282
    %v3031 = vpop.f32.mrf.mxu0
    %v3032 = vadd.f32 %v2679, %v3031
    %v3033 = vpop.f32.mrf.mxu0
    %v3034 = vadd.f32 %v2681, %v3033
    %v3035 = vpop.f32.mrf.mxu0
    %v3036 = vadd.f32 %v2683, %v3035
    %v3037 = vpop.f32.mrf.mxu0
    %v3038 = vadd.f32 %v2685, %v3037
    %3039 = vmatprep.mubr.bf16.mxu0 %v2287
    %3040 = vmatmul.mubr.bf16.gmra.mxu0 %v2286
    %v3041 = vpop.f32.mrf.mxu0
    %v3042 = vadd.f32 %v2689, %v3041
    %v3043 = vpop.f32.mrf.mxu0
    %v3044 = vadd.f32 %v2691, %v3043
    %v3045 = vpop.f32.mrf.mxu0
    %v3046 = vadd.f32 %v2693, %v3045
    %v3047 = vpop.f32.mrf.mxu0
    %v3048 = vadd.f32 %v2695, %v3047
    %3049 = vmatprep.mubr.bf16.mxu0 %v2291
    %3050 = vmatmul.mubr.bf16.gmra.mxu0 %v2290
    %v3051 = vpop.f32.mrf.mxu0
    %v3052 = vadd.f32 %v2699, %v3051
    %v3053 = vpop.f32.mrf.mxu0
    %v3054 = vadd.f32 %v2701, %v3053
    %v3055 = vpop.f32.mrf.mxu0
    %v3056 = vadd.f32 %v2703, %v3055
    %v3057 = vpop.f32.mrf.mxu0
    %v3058 = vadd.f32 %v2705, %v3057
    %3059 = vmatprep.mubr.bf16.mxu0 %v2295
    %3060 = vmatmul.mubr.bf16.gmra.mxu0 %v2294
    %v3061 = vpop.f32.mrf.mxu0
    %v3062 = vadd.f32 %v2709, %v3061
    %v3063 = vpop.f32.mrf.mxu0
    %v3064 = vadd.f32 %v2711, %v3063
    %v3065 = vpop.f32.mrf.mxu0
    %v3066 = vadd.f32 %v2713, %v3065
    %v3067 = vpop.f32.mrf.mxu0
    %v3068 = vadd.f32 %v2715, %v3067
    %3069 = vmatprep.mubr.bf16.mxu0 %v2299
    %3070 = vmatmul.mubr.bf16.gmra.mxu0 %v2298
    %v3071 = vpop.f32.mrf.mxu0
    %v3072 = vadd.f32 %v2719, %v3071
    %v3073 = vpop.f32.mrf.mxu0
    %v3074 = vadd.f32 %v2721, %v3073
    %v3075 = vpop.f32.mrf.mxu0
    %v3076 = vadd.f32 %v2723, %v3075
    %v3077 = vpop.f32.mrf.mxu0
    %v3078 = vadd.f32 %v2725, %v3077
    %3079 = vmatprep.mubr.bf16.mxu0 %v2303
    %3080 = vmatmul.mubr.bf16.gmra.mxu0 %v2302
    %v3081 = vpop.f32.mrf.mxu0
    %v3082 = vadd.f32 %v2729, %v3081
    %v3083 = vpop.f32.mrf.mxu0
    %v3084 = vadd.f32 %v2731, %v3083
    %v3085 = vpop.f32.mrf.mxu0
    %v3086 = vadd.f32 %v2733, %v3085
    %v3087 = vpop.f32.mrf.mxu0
    %v3088 = vadd.f32 %v2735, %v3087
    %3089 = vmatprep.mubr.bf16.mxu0 %v2307
    %3090 = vmatmul.mubr.bf16.gmra.mxu0 %v2306
    %v3091 = vpop.f32.mrf.mxu0
    %v3092 = vadd.f32 %v2739, %v3091
    %v3093 = vpop.f32.mrf.mxu0
    %v3094 = vadd.f32 %v2741, %v3093
    %v3095 = vpop.f32.mrf.mxu0
    %v3096 = vadd.f32 %v2743, %v3095
    %v3097 = vpop.f32.mrf.mxu0
    %v3098 = vadd.f32 %v2745, %v3097
    %3099 = vmatprep.mubr.bf16.mxu0 %v2311
    %3100 = vmatmul.mubr.bf16.gmra.mxu0 %v2310
    %v3101 = vpop.f32.mrf.mxu0
    %v3102 = vadd.f32 %v2749, %v3101
    %v3103 = vpop.f32.mrf.mxu0
    %v3104 = vadd.f32 %v2751, %v3103
    %v3105 = vpop.f32.mrf.mxu0
    %v3106 = vadd.f32 %v2753, %v3105
    %v3107 = vpop.f32.mrf.mxu0
    %v3108 = vadd.f32 %v2755, %v3107
    %3109 = vmatprep.mubr.bf16.mxu0 %v2315
    %3110 = vmatmul.mubr.bf16.gmra.mxu0 %v2314
    %v3111 = vpop.f32.mrf.mxu0
    %v3112 = vadd.f32 %v2759, %v3111
    %v3113 = vpop.f32.mrf.mxu0
    %v3114 = vadd.f32 %v2761, %v3113
    %v3115 = vpop.f32.mrf.mxu0
    %v3116 = vadd.f32 %v2763, %v3115
    %v3117 = vpop.f32.mrf.mxu0
    %v3118 = vadd.f32 %v2765, %v3117
    %3119 = vmatprep.mubr.bf16.mxu0 %v2319
    %3120 = vmatmul.mubr.bf16.gmra.mxu0 %v2318
    %v3121 = vpop.f32.mrf.mxu0
    %v3122 = vadd.f32 %v2769, %v3121
    %v3123 = vpop.f32.mrf.mxu0
    %v3124 = vadd.f32 %v2771, %v3123
    %v3125 = vpop.f32.mrf.mxu0
    %v3126 = vadd.f32 %v2773, %v3125
    %v3127 = vpop.f32.mrf.mxu0
    %v3128 = vadd.f32 %v2775, %v3127
    %3129 = vmatprep.mubr.bf16.mxu0 %v2323
    %3130 = vmatmul.mubr.bf16.gmra.mxu0 %v2322
    %v3131 = vpop.f32.mrf.mxu0
    %v3132 = vadd.f32 %v2779, %v3131
    %v3133 = vpop.f32.mrf.mxu0
    %v3134 = vadd.f32 %v2781, %v3133
    %v3135 = vpop.f32.mrf.mxu0
    %v3136 = vadd.f32 %v2783, %v3135
    %v3137 = vpop.f32.mrf.mxu0
    %v3138 = vadd.f32 %v2785, %v3137
    %3139 = vmatprep.mubr.bf16.mxu0 %v2327
    %3140 = vmatmul.mubr.bf16.gmra.mxu0 %v2326
    %v3141 = vpop.f32.mrf.mxu0
    %v3142 = vadd.f32 %v2789, %v3141
    %v3143 = vpop.f32.mrf.mxu0
    %v3144 = vadd.f32 %v2791, %v3143
    %v3145 = vpop.f32.mrf.mxu0
    %v3146 = vadd.f32 %v2793, %v3145
    %v3147 = vpop.f32.mrf.mxu0
    %v3148 = vadd.f32 %v2795, %v3147
    %3149 = vmatprep.mubr.bf16.mxu0 %v2331
    %3150 = vmatmul.mubr.bf16.gmra.mxu0 %v2330
    %v3151 = vpop.f32.mrf.mxu0
    %v3152 = vadd.f32 %v2799, %v3151
    %v3153 = vpop.f32.mrf.mxu0
    %v3154 = vadd.f32 %v2801, %v3153
    %v3155 = vpop.f32.mrf.mxu0
    %v3156 = vadd.f32 %v2803, %v3155
    %v3157 = vpop.f32.mrf.mxu0
    %v3158 = vadd.f32 %v2805, %v3157
    %3159 = vmatprep.mubr.bf16.mxu0 %v2335
    %3160 = vmatmul.mubr.bf16.gmra.mxu0 %v2334
    %v3161 = vpop.f32.mrf.mxu0
    %v3162 = vadd.f32 %v2809, %v3161
    %v3163 = vpop.f32.mrf.mxu0
    %v3164 = vadd.f32 %v2811, %v3163
    %v3165 = vpop.f32.mrf.mxu0
    %v3166 = vadd.f32 %v2813, %v3165
    %v3167 = vpop.f32.mrf.mxu0
    %v3168 = vadd.f32 %v2815, %v3167
    %3169 = vdwg.mxu0
    %3170 = vmatprep.subr.bf16.mxu0 0
    %3171 = vmatpush1.bf16.msra.mxu0 %v1623
    %3172 = vmatprep.subr.bf16.mxu0 0
    %3173 = vmatpush1.bf16.msra.mxu0 %v1620
    %3174 = vmatprep.subr.bf16.mxu0 0
    %3175 = vmatpush1.bf16.msra.mxu0 %v1617
    %3176 = vmatprep.subr.bf16.mxu0 0
    %3177 = vmatpush1.bf16.msra.mxu0 %v1614
    %3178 = vmatprep.subr.bf16.mxu0 0
    %3179 = vmatpush1.bf16.msra.mxu0 %v1611
    %3180 = vmatprep.subr.bf16.mxu0 0
    %3181 = vmatpush1.bf16.msra.mxu0 %v1608
    %3182 = vmatprep.subr.bf16.mxu0 0
    %3183 = vmatpush1.bf16.msra.mxu0 %v1605
    %3184 = vmatprep.subr.bf16.mxu0 0
    %3185 = vmatpush1.bf16.msra.mxu0 %v1602
    %3186 = vmatprep.subr.bf16.mxu0 0
    %3187 = vmatpush2.bf16.msra.mxu0 %v1647
    %3188 = vmatprep.subr.bf16.mxu0 0
    %3189 = vmatpush2.bf16.msra.mxu0 %v1644
    %3190 = vmatprep.subr.bf16.mxu0 0
    %3191 = vmatpush2.bf16.msra.mxu0 %v1641
    %3192 = vmatprep.subr.bf16.mxu0 0
    %3193 = vmatpush2.bf16.msra.mxu0 %v1638
    %3194 = vmatprep.subr.bf16.mxu0 0
    %3195 = vmatpush2.bf16.msra.mxu0 %v1635
    %3196 = vmatprep.subr.bf16.mxu0 0
    %3197 = vmatpush2.bf16.msra.mxu0 %v1632
    %3198 = vmatprep.subr.bf16.mxu0 0
    %3199 = vmatpush2.bf16.msra.mxu0 %v1629
    %3200 = vmatprep.subr.bf16.mxu0 0
    %3201 = vmatpush2.bf16.msra.mxu0 %v1626
    %3202 = vmatprep.mubr.bf16.mxu0 %v2209
    %3203 = vmatmul.mubr.bf16.gmra.mxu0 %v2208
    %v3204 = vpop.f32.mrf.mxu0
    %v3205 = vadd.f32 0.0, %v3204
    %v3206 = vpop.f32.mrf.mxu0
    %v3207 = vpop.f32.mrf.mxu0
    %v3208 = vadd.f32 0.0, %v3207
    %v3209 = vpop.f32.mrf.mxu0
    %3210 = vmatprep.mubr.bf16.mxu0 %v2213
    %3211 = vmatmul.mubr.bf16.gmra.mxu0 %v2212
    %v3212 = vpop.f32.mrf.mxu0
    %v3213 = vadd.f32 0.0, %v3212
    %v3214 = vpop.f32.mrf.mxu0
    %v3215 = vpop.f32.mrf.mxu0
    %v3216 = vadd.f32 0.0, %v3215
    %v3217 = vpop.f32.mrf.mxu0
    %3218 = vmatprep.mubr.bf16.mxu0 %v2217
    %3219 = vmatmul.mubr.bf16.gmra.mxu0 %v2216
    %v3220 = vpop.f32.mrf.mxu0
    %v3221 = vadd.f32 0.0, %v3220
    %v3222 = vpop.f32.mrf.mxu0
    %v3223 = vpop.f32.mrf.mxu0
    %v3224 = vadd.f32 0.0, %v3223
    %v3225 = vpop.f32.mrf.mxu0
    %3226 = vmatprep.mubr.bf16.mxu0 %v2221
    %3227 = vmatmul.mubr.bf16.gmra.mxu0 %v2220
    %v3228 = vpop.f32.mrf.mxu0
    %v3229 = vadd.f32 0.0, %v3228
    %v3230 = vpop.f32.mrf.mxu0
    %v3231 = vpop.f32.mrf.mxu0
    %v3232 = vadd.f32 0.0, %v3231
    %v3233 = vpop.f32.mrf.mxu0
    %3234 = vmatprep.mubr.bf16.mxu0 %v2225
    %3235 = vmatmul.mubr.bf16.gmra.mxu0 %v2224
    %v3236 = vpop.f32.mrf.mxu0
    %v3237 = vadd.f32 0.0, %v3236
    %v3238 = vpop.f32.mrf.mxu0
    %v3239 = vpop.f32.mrf.mxu0
    %v3240 = vadd.f32 0.0, %v3239
    %v3241 = vpop.f32.mrf.mxu0
    %3242 = vmatprep.mubr.bf16.mxu0 %v2229
    %3243 = vmatmul.mubr.bf16.gmra.mxu0 %v2228
    %v3244 = vpop.f32.mrf.mxu0
    %v3245 = vadd.f32 0.0, %v3244
    %v3246 = vpop.f32.mrf.mxu0
    %v3247 = vpop.f32.mrf.mxu0
    %v3248 = vadd.f32 0.0, %v3247
    %v3249 = vpop.f32.mrf.mxu0
    %3250 = vmatprep.mubr.bf16.mxu0 %v2233
    %3251 = vmatmul.mubr.bf16.gmra.mxu0 %v2232
    %v3252 = vpop.f32.mrf.mxu0
    %v3253 = vadd.f32 0.0, %v3252
    %v3254 = vpop.f32.mrf.mxu0
    %v3255 = vpop.f32.mrf.mxu0
    %v3256 = vadd.f32 0.0, %v3255
    %v3257 = vpop.f32.mrf.mxu0
    %3258 = vmatprep.mubr.bf16.mxu0 %v2237
    %3259 = vmatmul.mubr.bf16.gmra.mxu0 %v2236
    %v3260 = vpop.f32.mrf.mxu0
    %v3261 = vadd.f32 0.0, %v3260
    %v3262 = vpop.f32.mrf.mxu0
    %v3263 = vpop.f32.mrf.mxu0
    %v3264 = vadd.f32 0.0, %v3263
    %v3265 = vpop.f32.mrf.mxu0
    %3266 = vmatprep.mubr.bf16.mxu0 %v2241
    %3267 = vmatmul.mubr.bf16.gmra.mxu0 %v2240
    %v3268 = vpop.f32.mrf.mxu0
    %v3269 = vadd.f32 0.0, %v3268
    %v3270 = vpop.f32.mrf.mxu0
    %v3271 = vpop.f32.mrf.mxu0
    %v3272 = vadd.f32 0.0, %v3271
    %v3273 = vpop.f32.mrf.mxu0
    %3274 = vmatprep.mubr.bf16.mxu0 %v2245
    %3275 = vmatmul.mubr.bf16.gmra.mxu0 %v2244
    %v3276 = vpop.f32.mrf.mxu0
    %v3277 = vadd.f32 0.0, %v3276
    %v3278 = vpop.f32.mrf.mxu0
    %v3279 = vpop.f32.mrf.mxu0
    %v3280 = vadd.f32 0.0, %v3279
    %v3281 = vpop.f32.mrf.mxu0
    %3282 = vmatprep.mubr.bf16.mxu0 %v2249
    %3283 = vmatmul.mubr.bf16.gmra.mxu0 %v2248
    %v3284 = vpop.f32.mrf.mxu0
    %v3285 = vadd.f32 0.0, %v3284
    %v3286 = vpop.f32.mrf.mxu0
    %v3287 = vpop.f32.mrf.mxu0
    %v3288 = vadd.f32 0.0, %v3287
    %v3289 = vpop.f32.mrf.mxu0
    %3290 = vmatprep.mubr.bf16.mxu0 %v2253
    %3291 = vmatmul.mubr.bf16.gmra.mxu0 %v2252
    %v3292 = vpop.f32.mrf.mxu0
    %v3293 = vadd.f32 0.0, %v3292
    %v3294 = vpop.f32.mrf.mxu0
    %v3295 = vpop.f32.mrf.mxu0
    %v3296 = vadd.f32 0.0, %v3295
    %v3297 = vpop.f32.mrf.mxu0
    %3298 = vmatprep.mubr.bf16.mxu0 %v2257
    %3299 = vmatmul.mubr.bf16.gmra.mxu0 %v2256
    %v3300 = vpop.f32.mrf.mxu0
    %v3301 = vadd.f32 0.0, %v3300
    %v3302 = vpop.f32.mrf.mxu0
    %v3303 = vpop.f32.mrf.mxu0
    %v3304 = vadd.f32 0.0, %v3303
    %v3305 = vpop.f32.mrf.mxu0
    %3306 = vmatprep.mubr.bf16.mxu0 %v2261
    %3307 = vmatmul.mubr.bf16.gmra.mxu0 %v2260
    %v3308 = vpop.f32.mrf.mxu0
    %v3309 = vadd.f32 0.0, %v3308
    %v3310 = vpop.f32.mrf.mxu0
    %v3311 = vpop.f32.mrf.mxu0
    %v3312 = vadd.f32 0.0, %v3311
    %v3313 = vpop.f32.mrf.mxu0
    %3314 = vmatprep.mubr.bf16.mxu0 %v2265
    %3315 = vmatmul.mubr.bf16.gmra.mxu0 %v2264
    %v3316 = vpop.f32.mrf.mxu0
    %v3317 = vadd.f32 0.0, %v3316
    %v3318 = vpop.f32.mrf.mxu0
    %v3319 = vpop.f32.mrf.mxu0
    %v3320 = vadd.f32 0.0, %v3319
    %v3321 = vpop.f32.mrf.mxu0
    %3322 = vmatprep.mubr.bf16.mxu0 %v2269
    %3323 = vmatmul.mubr.bf16.gmra.mxu0 %v2268
    %v3324 = vpop.f32.mrf.mxu0
    %v3325 = vadd.f32 0.0, %v3324
    %v3326 = vpop.f32.mrf.mxu0
    %v3327 = vpop.f32.mrf.mxu0
    %v3328 = vadd.f32 0.0, %v3327
    %v3329 = vpop.f32.mrf.mxu0
    %3330 = vmatprep.mubr.bf16.mxu0 %v2273
    %3331 = vmatmul.mubr.bf16.gmra.mxu0 %v2272
    %v3332 = vpop.f32.mrf.mxu0
    %v3333 = vadd.f32 0.0, %v3332
    %v3334 = vpop.f32.mrf.mxu0
    %v3335 = vpop.f32.mrf.mxu0
    %v3336 = vadd.f32 0.0, %v3335
    %v3337 = vpop.f32.mrf.mxu0
    %3338 = vmatprep.mubr.bf16.mxu0 %v2277
    %3339 = vmatmul.mubr.bf16.gmra.mxu0 %v2276
    %v3340 = vpop.f32.mrf.mxu0
    %v3341 = vadd.f32 0.0, %v3340
    %v3342 = vpop.f32.mrf.mxu0
    %v3343 = vpop.f32.mrf.mxu0
    %v3344 = vadd.f32 0.0, %v3343
    %v3345 = vpop.f32.mrf.mxu0
    %3346 = vmatprep.mubr.bf16.mxu0 %v2281
    %3347 = vmatmul.mubr.bf16.gmra.mxu0 %v2280
    %v3348 = vpop.f32.mrf.mxu0
    %v3349 = vadd.f32 0.0, %v3348
    %v3350 = vpop.f32.mrf.mxu0
    %v3351 = vpop.f32.mrf.mxu0
    %v3352 = vadd.f32 0.0, %v3351
    %v3353 = vpop.f32.mrf.mxu0
    %3354 = vmatprep.mubr.bf16.mxu0 %v2285
    %3355 = vmatmul.mubr.bf16.gmra.mxu0 %v2284
    %v3356 = vpop.f32.mrf.mxu0
    %v3357 = vadd.f32 0.0, %v3356
    %v3358 = vpop.f32.mrf.mxu0
    %v3359 = vpop.f32.mrf.mxu0
    %v3360 = vadd.f32 0.0, %v3359
    %v3361 = vpop.f32.mrf.mxu0
    %3362 = vmatprep.mubr.bf16.mxu0 %v2289
    %3363 = vmatmul.mubr.bf16.gmra.mxu0 %v2288
    %v3364 = vpop.f32.mrf.mxu0
    %v3365 = vadd.f32 0.0, %v3364
    %v3366 = vpop.f32.mrf.mxu0
    %v3367 = vpop.f32.mrf.mxu0
    %v3368 = vadd.f32 0.0, %v3367
    %v3369 = vpop.f32.mrf.mxu0
    %3370 = vmatprep.mubr.bf16.mxu0 %v2293
    %3371 = vmatmul.mubr.bf16.gmra.mxu0 %v2292
    %v3372 = vpop.f32.mrf.mxu0
    %v3373 = vadd.f32 0.0, %v3372
    %v3374 = vpop.f32.mrf.mxu0
    %v3375 = vpop.f32.mrf.mxu0
    %v3376 = vadd.f32 0.0, %v3375
    %v3377 = vpop.f32.mrf.mxu0
    %3378 = vmatprep.mubr.bf16.mxu0 %v2297
    %3379 = vmatmul.mubr.bf16.gmra.mxu0 %v2296
    %v3380 = vpop.f32.mrf.mxu0
    %v3381 = vadd.f32 0.0, %v3380
    %v3382 = vpop.f32.mrf.mxu0
    %v3383 = vpop.f32.mrf.mxu0
    %v3384 = vadd.f32 0.0, %v3383
    %v3385 = vpop.f32.mrf.mxu0
    %3386 = vmatprep.mubr.bf16.mxu0 %v2301
    %3387 = vmatmul.mubr.bf16.gmra.mxu0 %v2300
    %v3388 = vpop.f32.mrf.mxu0
    %v3389 = vadd.f32 0.0, %v3388
    %v3390 = vpop.f32.mrf.mxu0
    %v3391 = vpop.f32.mrf.mxu0
    %v3392 = vadd.f32 0.0, %v3391
    %v3393 = vpop.f32.mrf.mxu0
    %3394 = vmatprep.mubr.bf16.mxu0 %v2305
    %3395 = vmatmul.mubr.bf16.gmra.mxu0 %v2304
    %v3396 = vpop.f32.mrf.mxu0
    %v3397 = vadd.f32 0.0, %v3396
    %v3398 = vpop.f32.mrf.mxu0
    %v3399 = vpop.f32.mrf.mxu0
    %v3400 = vadd.f32 0.0, %v3399
    %v3401 = vpop.f32.mrf.mxu0
    %3402 = vmatprep.mubr.bf16.mxu0 %v2309
    %3403 = vmatmul.mubr.bf16.gmra.mxu0 %v2308
    %v3404 = vpop.f32.mrf.mxu0
    %v3405 = vadd.f32 0.0, %v3404
    %v3406 = vpop.f32.mrf.mxu0
    %v3407 = vpop.f32.mrf.mxu0
    %v3408 = vadd.f32 0.0, %v3407
    %v3409 = vpop.f32.mrf.mxu0
    %3410 = vmatprep.mubr.bf16.mxu0 %v2313
    %3411 = vmatmul.mubr.bf16.gmra.mxu0 %v2312
    %v3412 = vpop.f32.mrf.mxu0
    %v3413 = vadd.f32 0.0, %v3412
    %v3414 = vpop.f32.mrf.mxu0
    %v3415 = vpop.f32.mrf.mxu0
    %v3416 = vadd.f32 0.0, %v3415
    %v3417 = vpop.f32.mrf.mxu0
    %3418 = vmatprep.mubr.bf16.mxu0 %v2317
    %3419 = vmatmul.mubr.bf16.gmra.mxu0 %v2316
    %v3420 = vpop.f32.mrf.mxu0
    %v3421 = vadd.f32 0.0, %v3420
    %v3422 = vpop.f32.mrf.mxu0
    %v3423 = vpop.f32.mrf.mxu0
    %v3424 = vadd.f32 0.0, %v3423
    %v3425 = vpop.f32.mrf.mxu0
    %3426 = vmatprep.mubr.bf16.mxu0 %v2321
    %3427 = vmatmul.mubr.bf16.gmra.mxu0 %v2320
    %v3428 = vpop.f32.mrf.mxu0
    %v3429 = vadd.f32 0.0, %v3428
    %v3430 = vpop.f32.mrf.mxu0
    %v3431 = vpop.f32.mrf.mxu0
    %v3432 = vadd.f32 0.0, %v3431
    %v3433 = vpop.f32.mrf.mxu0
    %3434 = vmatprep.mubr.bf16.mxu0 %v2325
    %3435 = vmatmul.mubr.bf16.gmra.mxu0 %v2324
    %v3436 = vpop.f32.mrf.mxu0
    %v3437 = vadd.f32 0.0, %v3436
    %v3438 = vpop.f32.mrf.mxu0
    %v3439 = vpop.f32.mrf.mxu0
    %v3440 = vadd.f32 0.0, %v3439
    %v3441 = vpop.f32.mrf.mxu0
    %3442 = vmatprep.mubr.bf16.mxu0 %v2329
    %3443 = vmatmul.mubr.bf16.gmra.mxu0 %v2328
    %v3444 = vpop.f32.mrf.mxu0
    %v3445 = vadd.f32 0.0, %v3444
    %v3446 = vpop.f32.mrf.mxu0
    %v3447 = vpop.f32.mrf.mxu0
    %v3448 = vadd.f32 0.0, %v3447
    %v3449 = vpop.f32.mrf.mxu0
    %3450 = vmatprep.mubr.bf16.mxu0 %v2333
    %3451 = vmatmul.mubr.bf16.gmra.mxu0 %v2332
    %v3452 = vpop.f32.mrf.mxu0
    %v3453 = vadd.f32 0.0, %v3452
    %v3454 = vpop.f32.mrf.mxu0
    %v3455 = vpop.f32.mrf.mxu0
    %v3456 = vadd.f32 0.0, %v3455
    %v3457 = vpop.f32.mrf.mxu0
    %3458 = vdwg.mxu0
    %3459 = vmatprep.subr.bf16.mxu0 0
    %3460 = vmatpush1.bf16.msra.mxu0 %v1671
    %3461 = vmatprep.subr.bf16.mxu0 0
    %3462 = vmatpush1.bf16.msra.mxu0 %v1668
    %3463 = vmatprep.subr.bf16.mxu0 0
    %3464 = vmatpush1.bf16.msra.mxu0 %v1665
    %3465 = vmatprep.subr.bf16.mxu0 0
    %3466 = vmatpush1.bf16.msra.mxu0 %v1662
    %3467 = vmatprep.subr.bf16.mxu0 0
    %3468 = vmatpush1.bf16.msra.mxu0 %v1659
    %3469 = vmatprep.subr.bf16.mxu0 0
    %3470 = vmatpush1.bf16.msra.mxu0 %v1656
    %3471 = vmatprep.subr.bf16.mxu0 0
    %3472 = vmatpush1.bf16.msra.mxu0 %v1653
    %3473 = vmatprep.subr.bf16.mxu0 0
    %3474 = vmatpush1.bf16.msra.mxu0 %v1650
    %3475 = vmatprep.subr.bf16.mxu0 0
    %3476 = vmatpush2.bf16.msra.mxu0 %v1695
    %3477 = vmatprep.subr.bf16.mxu0 0
    %3478 = vmatpush2.bf16.msra.mxu0 %v1692
    %3479 = vmatprep.subr.bf16.mxu0 0
    %3480 = vmatpush2.bf16.msra.mxu0 %v1689
    %3481 = vmatprep.subr.bf16.mxu0 0
    %3482 = vmatpush2.bf16.msra.mxu0 %v1686
    %3483 = vmatprep.subr.bf16.mxu0 0
    %3484 = vmatpush2.bf16.msra.mxu0 %v1683
    %3485 = vmatprep.subr.bf16.mxu0 0
    %3486 = vmatpush2.bf16.msra.mxu0 %v1680
    %3487 = vmatprep.subr.bf16.mxu0 0
    %3488 = vmatpush2.bf16.msra.mxu0 %v1677
    %3489 = vmatprep.subr.bf16.mxu0 0
    %3490 = vmatpush2.bf16.msra.mxu0 %v1674
    %3491 = vmatprep.mubr.bf16.mxu0 %v2211
    %3492 = vmatmul.mubr.bf16.gmra.mxu0 %v2210
    %v3493 = vpop.f32.mrf.mxu0
    %v3494 = vadd.f32 %v3205, %v3493
    %v3495 = vpop.f32.mrf.mxu0
    %v3496 = vpop.f32.mrf.mxu0
    %v3497 = vadd.f32 %v3208, %v3496
    %v3498 = vpop.f32.mrf.mxu0
    %3499 = vmatprep.mubr.bf16.mxu0 %v2215
    %3500 = vmatmul.mubr.bf16.gmra.mxu0 %v2214
    %v3501 = vpop.f32.mrf.mxu0
    %v3502 = vadd.f32 %v3213, %v3501
    %v3503 = vpop.f32.mrf.mxu0
    %v3504 = vpop.f32.mrf.mxu0
    %v3505 = vadd.f32 %v3216, %v3504
    %v3506 = vpop.f32.mrf.mxu0
    %3507 = vmatprep.mubr.bf16.mxu0 %v2219
    %3508 = vmatmul.mubr.bf16.gmra.mxu0 %v2218
    %v3509 = vpop.f32.mrf.mxu0
    %v3510 = vadd.f32 %v3221, %v3509
    %v3511 = vpop.f32.mrf.mxu0
    %v3512 = vpop.f32.mrf.mxu0
    %v3513 = vadd.f32 %v3224, %v3512
    %v3514 = vpop.f32.mrf.mxu0
    %3515 = vmatprep.mubr.bf16.mxu0 %v2223
    %3516 = vmatmul.mubr.bf16.gmra.mxu0 %v2222
    %v3517 = vpop.f32.mrf.mxu0
    %v3518 = vadd.f32 %v3229, %v3517
    %v3519 = vpop.f32.mrf.mxu0
    %v3520 = vpop.f32.mrf.mxu0
    %v3521 = vadd.f32 %v3232, %v3520
    %v3522 = vpop.f32.mrf.mxu0
    %3523 = vmatprep.mubr.bf16.mxu0 %v2227
    %3524 = vmatmul.mubr.bf16.gmra.mxu0 %v2226
    %v3525 = vpop.f32.mrf.mxu0
    %v3526 = vadd.f32 %v3237, %v3525
    %v3527 = vpop.f32.mrf.mxu0
    %v3528 = vpop.f32.mrf.mxu0
    %v3529 = vadd.f32 %v3240, %v3528
    %v3530 = vpop.f32.mrf.mxu0
    %3531 = vmatprep.mubr.bf16.mxu0 %v2231
    %3532 = vmatmul.mubr.bf16.gmra.mxu0 %v2230
    %v3533 = vpop.f32.mrf.mxu0
    %v3534 = vadd.f32 %v3245, %v3533
    %v3535 = vpop.f32.mrf.mxu0
    %v3536 = vpop.f32.mrf.mxu0
    %v3537 = vadd.f32 %v3248, %v3536
    %v3538 = vpop.f32.mrf.mxu0
    %3539 = vmatprep.mubr.bf16.mxu0 %v2235
    %3540 = vmatmul.mubr.bf16.gmra.mxu0 %v2234
    %v3541 = vpop.f32.mrf.mxu0
    %v3542 = vadd.f32 %v3253, %v3541
    %v3543 = vpop.f32.mrf.mxu0
    %v3544 = vpop.f32.mrf.mxu0
    %v3545 = vadd.f32 %v3256, %v3544
    %v3546 = vpop.f32.mrf.mxu0
    %3547 = vmatprep.mubr.bf16.mxu0 %v2239
    %3548 = vmatmul.mubr.bf16.gmra.mxu0 %v2238
    %v3549 = vpop.f32.mrf.mxu0
    %v3550 = vadd.f32 %v3261, %v3549
    %v3551 = vpop.f32.mrf.mxu0
    %v3552 = vpop.f32.mrf.mxu0
    %v3553 = vadd.f32 %v3264, %v3552
    %v3554 = vpop.f32.mrf.mxu0
    %3555 = vmatprep.mubr.bf16.mxu0 %v2243
    %3556 = vmatmul.mubr.bf16.gmra.mxu0 %v2242
    %v3557 = vpop.f32.mrf.mxu0
    %v3558 = vadd.f32 %v3269, %v3557
    %v3559 = vpop.f32.mrf.mxu0
    %v3560 = vpop.f32.mrf.mxu0
    %v3561 = vadd.f32 %v3272, %v3560
    %v3562 = vpop.f32.mrf.mxu0
    %3563 = vmatprep.mubr.bf16.mxu0 %v2247
    %3564 = vmatmul.mubr.bf16.gmra.mxu0 %v2246
    %v3565 = vpop.f32.mrf.mxu0
    %v3566 = vadd.f32 %v3277, %v3565
    %v3567 = vpop.f32.mrf.mxu0
    %v3568 = vpop.f32.mrf.mxu0
    %v3569 = vadd.f32 %v3280, %v3568
    %v3570 = vpop.f32.mrf.mxu0
    %3571 = vmatprep.mubr.bf16.mxu0 %v2251
    %3572 = vmatmul.mubr.bf16.gmra.mxu0 %v2250
    %v3573 = vpop.f32.mrf.mxu0
    %v3574 = vadd.f32 %v3285, %v3573
    %v3575 = vpop.f32.mrf.mxu0
    %v3576 = vpop.f32.mrf.mxu0
    %v3577 = vadd.f32 %v3288, %v3576
    %v3578 = vpop.f32.mrf.mxu0
    %3579 = vmatprep.mubr.bf16.mxu0 %v2255
    %3580 = vmatmul.mubr.bf16.gmra.mxu0 %v2254
    %v3581 = vpop.f32.mrf.mxu0
    %v3582 = vadd.f32 %v3293, %v3581
    %v3583 = vpop.f32.mrf.mxu0
    %v3584 = vpop.f32.mrf.mxu0
    %v3585 = vadd.f32 %v3296, %v3584
    %v3586 = vpop.f32.mrf.mxu0
    %3587 = vmatprep.mubr.bf16.mxu0 %v2259
    %3588 = vmatmul.mubr.bf16.gmra.mxu0 %v2258
    %v3589 = vpop.f32.mrf.mxu0
    %v3590 = vadd.f32 %v3301, %v3589
    %v3591 = vpop.f32.mrf.mxu0
    %v3592 = vpop.f32.mrf.mxu0
    %v3593 = vadd.f32 %v3304, %v3592
    %v3594 = vpop.f32.mrf.mxu0
    %3595 = vmatprep.mubr.bf16.mxu0 %v2263
    %3596 = vmatmul.mubr.bf16.gmra.mxu0 %v2262
    %v3597 = vpop.f32.mrf.mxu0
    %v3598 = vadd.f32 %v3309, %v3597
    %v3599 = vpop.f32.mrf.mxu0
    %v3600 = vpop.f32.mrf.mxu0
    %v3601 = vadd.f32 %v3312, %v3600
    %v3602 = vpop.f32.mrf.mxu0
    %3603 = vmatprep.mubr.bf16.mxu0 %v2267
    %3604 = vmatmul.mubr.bf16.gmra.mxu0 %v2266
    %v3605 = vpop.f32.mrf.mxu0
    %v3606 = vadd.f32 %v3317, %v3605
    %v3607 = vpop.f32.mrf.mxu0
    %v3608 = vpop.f32.mrf.mxu0
    %v3609 = vadd.f32 %v3320, %v3608
    %v3610 = vpop.f32.mrf.mxu0
    %3611 = vmatprep.mubr.bf16.mxu0 %v2271
    %3612 = vmatmul.mubr.bf16.gmra.mxu0 %v2270
    %v3613 = vpop.f32.mrf.mxu0
    %v3614 = vadd.f32 %v3325, %v3613
    %v3615 = vpop.f32.mrf.mxu0
    %v3616 = vpop.f32.mrf.mxu0
    %v3617 = vadd.f32 %v3328, %v3616
    %v3618 = vpop.f32.mrf.mxu0
    %3619 = vmatprep.mubr.bf16.mxu0 %v2275
    %3620 = vmatmul.mubr.bf16.gmra.mxu0 %v2274
    %v3621 = vpop.f32.mrf.mxu0
    %v3622 = vadd.f32 %v3333, %v3621
    %v3623 = vpop.f32.mrf.mxu0
    %v3624 = vpop.f32.mrf.mxu0
    %v3625 = vadd.f32 %v3336, %v3624
    %v3626 = vpop.f32.mrf.mxu0
    %3627 = vmatprep.mubr.bf16.mxu0 %v2279
    %3628 = vmatmul.mubr.bf16.gmra.mxu0 %v2278
    %v3629 = vpop.f32.mrf.mxu0
    %v3630 = vadd.f32 %v3341, %v3629
    %v3631 = vpop.f32.mrf.mxu0
    %v3632 = vpop.f32.mrf.mxu0
    %v3633 = vadd.f32 %v3344, %v3632
    %v3634 = vpop.f32.mrf.mxu0
    %3635 = vmatprep.mubr.bf16.mxu0 %v2283
    %3636 = vmatmul.mubr.bf16.gmra.mxu0 %v2282
    %v3637 = vpop.f32.mrf.mxu0
    %v3638 = vadd.f32 %v3349, %v3637
    %v3639 = vpop.f32.mrf.mxu0
    %v3640 = vpop.f32.mrf.mxu0
    %v3641 = vadd.f32 %v3352, %v3640
    %v3642 = vpop.f32.mrf.mxu0
    %3643 = vmatprep.mubr.bf16.mxu0 %v2287
    %3644 = vmatmul.mubr.bf16.gmra.mxu0 %v2286
    %v3645 = vpop.f32.mrf.mxu0
    %v3646 = vadd.f32 %v3357, %v3645
    %v3647 = vpop.f32.mrf.mxu0
    %v3648 = vpop.f32.mrf.mxu0
    %v3649 = vadd.f32 %v3360, %v3648
    %v3650 = vpop.f32.mrf.mxu0
    %3651 = vmatprep.mubr.bf16.mxu0 %v2291
    %3652 = vmatmul.mubr.bf16.gmra.mxu0 %v2290
    %v3653 = vpop.f32.mrf.mxu0
    %v3654 = vadd.f32 %v3365, %v3653
    %v3655 = vpop.f32.mrf.mxu0
    %v3656 = vpop.f32.mrf.mxu0
    %v3657 = vadd.f32 %v3368, %v3656
    %v3658 = vpop.f32.mrf.mxu0
    %3659 = vmatprep.mubr.bf16.mxu0 %v2295
    %3660 = vmatmul.mubr.bf16.gmra.mxu0 %v2294
    %v3661 = vpop.f32.mrf.mxu0
    %v3662 = vadd.f32 %v3373, %v3661
    %v3663 = vpop.f32.mrf.mxu0
    %v3664 = vpop.f32.mrf.mxu0
    %v3665 = vadd.f32 %v3376, %v3664
    %v3666 = vpop.f32.mrf.mxu0
    %3667 = vmatprep.mubr.bf16.mxu0 %v2299
    %3668 = vmatmul.mubr.bf16.gmra.mxu0 %v2298
    %v3669 = vpop.f32.mrf.mxu0
    %v3670 = vadd.f32 %v3381, %v3669
    %v3671 = vpop.f32.mrf.mxu0
    %v3672 = vpop.f32.mrf.mxu0
    %v3673 = vadd.f32 %v3384, %v3672
    %v3674 = vpop.f32.mrf.mxu0
    %3675 = vmatprep.mubr.bf16.mxu0 %v2303
    %3676 = vmatmul.mubr.bf16.gmra.mxu0 %v2302
    %v3677 = vpop.f32.mrf.mxu0
    %v3678 = vadd.f32 %v3389, %v3677
    %v3679 = vpop.f32.mrf.mxu0
    %v3680 = vpop.f32.mrf.mxu0
    %v3681 = vadd.f32 %v3392, %v3680
    %v3682 = vpop.f32.mrf.mxu0
    %3683 = vmatprep.mubr.bf16.mxu0 %v2307
    %3684 = vmatmul.mubr.bf16.gmra.mxu0 %v2306
    %v3685 = vpop.f32.mrf.mxu0
    %v3686 = vadd.f32 %v3397, %v3685
    %v3687 = vpop.f32.mrf.mxu0
    %v3688 = vpop.f32.mrf.mxu0
    %v3689 = vadd.f32 %v3400, %v3688
    %v3690 = vpop.f32.mrf.mxu0
    %3691 = vmatprep.mubr.bf16.mxu0 %v2311
    %3692 = vmatmul.mubr.bf16.gmra.mxu0 %v2310
    %v3693 = vpop.f32.mrf.mxu0
    %v3694 = vadd.f32 %v3405, %v3693
    %v3695 = vpop.f32.mrf.mxu0
    %v3696 = vpop.f32.mrf.mxu0
    %v3697 = vadd.f32 %v3408, %v3696
    %v3698 = vpop.f32.mrf.mxu0
    %3699 = vmatprep.mubr.bf16.mxu0 %v2315
    %3700 = vmatmul.mubr.bf16.gmra.mxu0 %v2314
    %v3701 = vpop.f32.mrf.mxu0
    %v3702 = vadd.f32 %v3413, %v3701
    %v3703 = vpop.f32.mrf.mxu0
    %v3704 = vpop.f32.mrf.mxu0
    %v3705 = vadd.f32 %v3416, %v3704
    %v3706 = vpop.f32.mrf.mxu0
    %3707 = vmatprep.mubr.bf16.mxu0 %v2319
    %3708 = vmatmul.mubr.bf16.gmra.mxu0 %v2318
    %v3709 = vpop.f32.mrf.mxu0
    %v3710 = vadd.f32 %v3421, %v3709
    %v3711 = vpop.f32.mrf.mxu0
    %v3712 = vpop.f32.mrf.mxu0
    %v3713 = vadd.f32 %v3424, %v3712
    %v3714 = vpop.f32.mrf.mxu0
    %3715 = vmatprep.mubr.bf16.mxu0 %v2323
    %3716 = vmatmul.mubr.bf16.gmra.mxu0 %v2322
    %v3717 = vpop.f32.mrf.mxu0
    %v3718 = vadd.f32 %v3429, %v3717
    %v3719 = vpop.f32.mrf.mxu0
    %v3720 = vpop.f32.mrf.mxu0
    %v3721 = vadd.f32 %v3432, %v3720
    %v3722 = vpop.f32.mrf.mxu0
    %3723 = vmatprep.mubr.bf16.mxu0 %v2327
    %3724 = vmatmul.mubr.bf16.gmra.mxu0 %v2326
    %v3725 = vpop.f32.mrf.mxu0
    %v3726 = vadd.f32 %v3437, %v3725
    %v3727 = vpop.f32.mrf.mxu0
    %v3728 = vpop.f32.mrf.mxu0
    %v3729 = vadd.f32 %v3440, %v3728
    %v3730 = vpop.f32.mrf.mxu0
    %3731 = vmatprep.mubr.bf16.mxu0 %v2331
    %3732 = vmatmul.mubr.bf16.gmra.mxu0 %v2330
    %v3733 = vpop.f32.mrf.mxu0
    %v3734 = vadd.f32 %v3445, %v3733
    %v3735 = vpop.f32.mrf.mxu0
    %v3736 = vpop.f32.mrf.mxu0
    %v3737 = vadd.f32 %v3448, %v3736
    %v3738 = vpop.f32.mrf.mxu0
    %3739 = vmatprep.mubr.bf16.mxu0 %v2335
    %3740 = vmatmul.mubr.bf16.gmra.mxu0 %v2334
    %v3741 = vpop.f32.mrf.mxu0
    %v3742 = vadd.f32 %v3453, %v3741
    %v3743 = vpop.f32.mrf.mxu0
    %v3744 = vpop.f32.mrf.mxu0
    %v3745 = vadd.f32 %v3456, %v3744
    %v3746 = vpop.f32.mrf.mxu0
    %3747 = vdwg.mxu0
    %v3748 = vpack.c.bf16 %v2856, %v2852
    %v3749 = vpack.c.bf16 %v2858, %v2854
    %v3750 = vpack.c.bf16 %v3497, %v3494
    %v3751 = vpack.c.bf16 %v2866, %v2862
    %v3752 = vpack.c.bf16 %v2868, %v2864
    %v3753 = vpack.c.bf16 %v3505, %v3502
    %v3754 = vpack.c.bf16 %v2876, %v2872
    %v3755 = vpack.c.bf16 %v2878, %v2874
    %v3756 = vpack.c.bf16 %v3513, %v3510
    %v3757 = vpack.c.bf16 %v2886, %v2882
    %v3758 = vpack.c.bf16 %v2888, %v2884
    %v3759 = vpack.c.bf16 %v3521, %v3518
    %v3760 = vpack.c.bf16 %v2896, %v2892
    %v3761 = vpack.c.bf16 %v2898, %v2894
    %v3762 = vpack.c.bf16 %v3529, %v3526
    %v3763 = vpack.c.bf16 %v2906, %v2902
    %v3764 = vpack.c.bf16 %v2908, %v2904
    %v3765 = vpack.c.bf16 %v3537, %v3534
    %v3766 = vpack.c.bf16 %v2916, %v2912
    %v3767 = vpack.c.bf16 %v2918, %v2914
    %v3768 = vpack.c.bf16 %v3545, %v3542
    %v3769 = vpack.c.bf16 %v2926, %v2922
    %v3770 = vpack.c.bf16 %v2928, %v2924
    %v3771 = vpack.c.bf16 %v3553, %v3550
    %v3772 = vpack.c.bf16 %v2936, %v2932
    %v3773 = vpack.c.bf16 %v2938, %v2934
    %v3774 = vpack.c.bf16 %v3561, %v3558
    %v3775 = vpack.c.bf16 %v2946, %v2942
    %v3776 = vpack.c.bf16 %v2948, %v2944
    %v3777 = vpack.c.bf16 %v3569, %v3566
    %v3778 = vpack.c.bf16 %v2956, %v2952
    %v3779 = vpack.c.bf16 %v2958, %v2954
    %v3780 = vpack.c.bf16 %v3577, %v3574
    %v3781 = vpack.c.bf16 %v2966, %v2962
    %v3782 = vpack.c.bf16 %v2968, %v2964
    %v3783 = vpack.c.bf16 %v3585, %v3582
    %v3784 = vpack.c.bf16 %v2976, %v2972
    %v3785 = vpack.c.bf16 %v2978, %v2974
    %v3786 = vpack.c.bf16 %v3593, %v3590
    %v3787 = vpack.c.bf16 %v2986, %v2982
    %v3788 = vpack.c.bf16 %v2988, %v2984
    %v3789 = vpack.c.bf16 %v3601, %v3598
    %v3790 = vpack.c.bf16 %v2996, %v2992
    %v3791 = vpack.c.bf16 %v2998, %v2994
    %v3792 = vpack.c.bf16 %v3609, %v3606
    %v3793 = vpack.c.bf16 %v3006, %v3002
    %v3794 = vpack.c.bf16 %v3008, %v3004
    %v3795 = vpack.c.bf16 %v3617, %v3614
    %v3796 = vpack.c.bf16 %v3016, %v3012
    %v3797 = vpack.c.bf16 %v3018, %v3014
    %v3798 = vpack.c.bf16 %v3625, %v3622
    %v3799 = vpack.c.bf16 %v3026, %v3022
    %v3800 = vpack.c.bf16 %v3028, %v3024
    %v3801 = vpack.c.bf16 %v3633, %v3630
    %v3802 = vpack.c.bf16 %v3036, %v3032
    %v3803 = vpack.c.bf16 %v3038, %v3034
    %v3804 = vpack.c.bf16 %v3641, %v3638
    %v3805 = vpack.c.bf16 %v3046, %v3042
    %v3806 = vpack.c.bf16 %v3048, %v3044
    %v3807 = vpack.c.bf16 %v3649, %v3646
    %v3808 = vpack.c.bf16 %v3056, %v3052
    %v3809 = vpack.c.bf16 %v3058, %v3054
    %v3810 = vpack.c.bf16 %v3657, %v3654
    %v3811 = vpack.c.bf16 %v3066, %v3062
    %v3812 = vpack.c.bf16 %v3068, %v3064
    %v3813 = vpack.c.bf16 %v3665, %v3662
    %v3814 = vpack.c.bf16 %v3076, %v3072
    %v3815 = vpack.c.bf16 %v3078, %v3074
    %v3816 = vpack.c.bf16 %v3673, %v3670
    %v3817 = vpack.c.bf16 %v3086, %v3082
    %v3818 = vpack.c.bf16 %v3088, %v3084
    %v3819 = vpack.c.bf16 %v3681, %v3678
    %v3820 = vpack.c.bf16 %v3096, %v3092
    %v3821 = vpack.c.bf16 %v3098, %v3094
    %v3822 = vpack.c.bf16 %v3689, %v3686
    %v3823 = vpack.c.bf16 %v3106, %v3102
    %v3824 = vpack.c.bf16 %v3108, %v3104
    %v3825 = vpack.c.bf16 %v3697, %v3694
    %v3826 = vpack.c.bf16 %v3116, %v3112
    %v3827 = vpack.c.bf16 %v3118, %v3114
    %v3828 = vpack.c.bf16 %v3705, %v3702
    %v3829 = vpack.c.bf16 %v3126, %v3122
    %v3830 = vpack.c.bf16 %v3128, %v3124
    %v3831 = vpack.c.bf16 %v3713, %v3710
    %v3832 = vpack.c.bf16 %v3136, %v3132
    %v3833 = vpack.c.bf16 %v3138, %v3134
    %v3834 = vpack.c.bf16 %v3721, %v3718
    %v3835 = vpack.c.bf16 %v3146, %v3142
    %v3836 = vpack.c.bf16 %v3148, %v3144
    %v3837 = vpack.c.bf16 %v3729, %v3726
    %v3838 = vpack.c.bf16 %v3156, %v3152
    %v3839 = vpack.c.bf16 %v3158, %v3154
    %v3840 = vpack.c.bf16 %v3737, %v3734
    %v3841 = vpack.c.bf16 %v3166, %v3162
    %v3842 = vpack.c.bf16 %v3168, %v3164
    %v3843 = vpack.c.bf16 %v3745, %v3742
    %v3844 = vld [vmem:[%s3] sm:$0xf]
    %v3845 = vld [vmem:[%s3 + $0x4] sm:$0xf]
    %v3846 = vld [vmem:[%s3 + $0x8] sm:$0xf]
    %v3847 = vld [vmem:[%s3 + $0xc] sm:$0xf]
    %v3848 = vld [vmem:[%s3 + $0x10] sm:$0xf]
    %v3849 = vld [vmem:[%s3 + $0x14] sm:$0xf]
    %v3850 = vld [vmem:[%s3 + $0x18] sm:$0xf]
    %v3851 = vld [vmem:[%s3 + $0x1c] sm:$0xf]
    %v3852 = vld [vmem:[%s3 + $0x20] sm:$0xf]
    %v3853 = vld [vmem:[%s3 + $0x24] sm:$0xf]
    %v3854 = vld [vmem:[%s3 + $0x28] sm:$0xf]
    %v3855 = vld [vmem:[%s3 + $0x2c] sm:$0xf]
    %v3856 = vld [vmem:[%s3 + $0x30] sm:$0xf]
    %v3857 = vld [vmem:[%s3 + $0x34] sm:$0xf]
    %v3858 = vld [vmem:[%s3 + $0x38] sm:$0xf]
    %v3859 = vld [vmem:[%s3 + $0x3c] sm:$0xf]
    %v3860 = vld [vmem:[%s3 + $0x40] sm:$0xf]
    %v3861 = vld [vmem:[%s3 + $0x44] sm:$0xf]
    %v3862 = vld [vmem:[%s3 + $0x48] sm:$0xf]
    %v3863 = vld [vmem:[%s3 + $0x4c] sm:$0xf]
    %v3864 = vld [vmem:[%s3 + $0x50] sm:$0xf]
    %v3865 = vld [vmem:[%s3 + $0x54] sm:$0xf]
    %v3866 = vld [vmem:[%s3 + $0x58] sm:$0xf]
    %v3867 = vld [vmem:[%s3 + $0x5c] sm:$0xf]
    %v3868 = vld [vmem:[%s3 + $0x60] sm:$0xf]
    %v3869 = vld [vmem:[%s3 + $0x64] sm:$0xf]
    %v3870 = vld [vmem:[%s3 + $0x68] sm:$0xf]
    %v3871 = vld [vmem:[%s3 + $0x6c] sm:$0xf]
    %v3872 = vld [vmem:[%s3 + $0x70] sm:$0xf]
    %v3873 = vld [vmem:[%s3 + $0x74] sm:$0xf]
    %v3874 = vld [vmem:[%s3 + $0x78] sm:$0xf]
    %v3875 = vld [vmem:[%s3 + $0x7c] sm:$0xf]
    %v3876 = vld [vmem:[%s3 + $0x80] sm:$0xf]
    %v3877 = vld [vmem:[%s3 + $0x84] sm:$0xf]
    %v3878 = vld [vmem:[%s3 + $0x88] sm:$0xf]
    %v3879 = vld [vmem:[%s3 + $0x8c] sm:$0xf]
    %v3880 = vld [vmem:[%s3 + $0x90] sm:$0xf]
    %v3881 = vld [vmem:[%s3 + $0x94] sm:$0xf]
    %v3882 = vld [vmem:[%s3 + $0x98] sm:$0xf]
    %v3883 = vld [vmem:[%s3 + $0x9c] sm:$0xf]
    %v3884 = vld [vmem:[%s3 + $0xa0] sm:$0xf]
    %v3885 = vld [vmem:[%s3 + $0xa4] sm:$0xf]
    %v3886 = vld [vmem:[%s3 + $0xa8] sm:$0xf]
    %v3887 = vld [vmem:[%s3 + $0xac] sm:$0xf]
    %v3888 = vld [vmem:[%s3 + $0xb0] sm:$0xf]
    %v3889 = vld [vmem:[%s3 + $0xb4] sm:$0xf]
    %v3890 = vld [vmem:[%s3 + $0xb8] sm:$0xf]
    %v3891 = vld [vmem:[%s3 + $0xbc] sm:$0xf]
    %v3892 = vld [vmem:[%s3 + $0xc0] sm:$0xf]
    %v3893 = vld [vmem:[%s3 + $0xc4] sm:$0xf]
    %v3894 = vld [vmem:[%s3 + $0xc8] sm:$0xf]
    %v3895 = vld [vmem:[%s3 + $0xcc] sm:$0xf]
    %v3896 = vld [vmem:[%s3 + $0xd0] sm:$0xf]
    %v3897 = vld [vmem:[%s3 + $0xd4] sm:$0xf]
    %v3898 = vld [vmem:[%s3 + $0xd8] sm:$0xf]
    %v3899 = vld [vmem:[%s3 + $0xdc] sm:$0xf]
    %v3900 = vld [vmem:[%s3 + $0xe0] sm:$0xf]
    %v3901 = vld [vmem:[%s3 + $0xe4] sm:$0xf]
    %v3902 = vld [vmem:[%s3 + $0xe8] sm:$0xf]
    %v3903 = vld [vmem:[%s3 + $0xec] sm:$0xf]
    %v3904 = vld [vmem:[%s3 + $0xf0] sm:$0xf]
    %v3905 = vld [vmem:[%s3 + $0xf4] sm:$0xf]
    %v3906 = vld [vmem:[%s3 + $0xf8] sm:$0xf]
    %v3907 = vld [vmem:[%s3 + $0xfc] sm:$0xf]
    %3909 = vset.pattern.permute.xlu0 0
    %3910 = vperm.xlu0 %3909, %v3844
    %v3911 = vpop.permute.xlu0 %3910
    %v3914 = vunpack.c.l.s4 839922192
    %v3915 = vunpack.c.0.s8 %v3914
    %v3916 = vlaneseq
    %v3917 = vshrl.u32 %v3916, 7
    %v3918 = vsub.s32 %v3915, %v3917
    %v3919 = vrot.slane %v3911, %v3918
    %3921 = vset.pattern.permute.xlu0 0
    %3922 = vperm.xlu0 %3921, %v3845
    %v3923 = vpop.permute.xlu0 %3922
    %v3926 = vunpack.c.l.s4 839922192
    %v3927 = vunpack.c.0.s8 %v3926
    %v3928 = vlaneseq
    %v3929 = vshrl.u32 %v3928, 7
    %v3930 = vsub.s32 %v3927, %v3929
    %v3931 = vrot.slane %v3923, %v3930
    %3933 = vset.pattern.permute.xlu0 0
    %3934 = vperm.xlu0 %3933, %v3846
    %v3935 = vpop.permute.xlu0 %3934
    %v3938 = vunpack.c.l.s4 839922192
    %v3939 = vunpack.c.0.s8 %v3938
    %v3940 = vlaneseq
    %v3941 = vshrl.u32 %v3940, 7
    %v3942 = vsub.s32 %v3939, %v3941
    %v3943 = vrot.slane %v3935, %v3942
    %3945 = vset.pattern.permute.xlu0 0
    %3946 = vperm.xlu0 %3945, %v3847
    %v3947 = vpop.permute.xlu0 %3946
    %v3950 = vunpack.c.l.s4 839922192
    %v3951 = vunpack.c.0.s8 %v3950
    %v3952 = vlaneseq
    %v3953 = vshrl.u32 %v3952, 7
    %v3954 = vsub.s32 %v3951, %v3953
    %v3955 = vrot.slane %v3947, %v3954
    %3957 = vset.pattern.permute.xlu0 0
    %3958 = vperm.xlu0 %3957, %v3848
    %v3959 = vpop.permute.xlu0 %3958
    %v3962 = vunpack.c.l.s4 839922192
    %v3963 = vunpack.c.0.s8 %v3962
    %v3964 = vlaneseq
    %v3965 = vshrl.u32 %v3964, 7
    %v3966 = vsub.s32 %v3963, %v3965
    %v3967 = vrot.slane %v3959, %v3966
    %3969 = vset.pattern.permute.xlu0 0
    %3970 = vperm.xlu0 %3969, %v3849
    %v3971 = vpop.permute.xlu0 %3970
    %v3974 = vunpack.c.l.s4 839922192
    %v3975 = vunpack.c.0.s8 %v3974
    %v3976 = vlaneseq
    %v3977 = vshrl.u32 %v3976, 7
    %v3978 = vsub.s32 %v3975, %v3977
    %v3979 = vrot.slane %v3971, %v3978
    %3981 = vset.pattern.permute.xlu0 0
    %3982 = vperm.xlu0 %3981, %v3850
    %v3983 = vpop.permute.xlu0 %3982
    %v3986 = vunpack.c.l.s4 839922192
    %v3987 = vunpack.c.0.s8 %v3986
    %v3988 = vlaneseq
    %v3989 = vshrl.u32 %v3988, 7
    %v3990 = vsub.s32 %v3987, %v3989
    %v3991 = vrot.slane %v3983, %v3990
    %3993 = vset.pattern.permute.xlu0 0
    %3994 = vperm.xlu0 %3993, %v3851
    %v3995 = vpop.permute.xlu0 %3994
    %v3998 = vunpack.c.l.s4 839922192
    %v3999 = vunpack.c.0.s8 %v3998
    %v4000 = vlaneseq
    %v4001 = vshrl.u32 %v4000, 7
    %v4002 = vsub.s32 %v3999, %v4001
    %v4003 = vrot.slane %v3995, %v4002
    %4005 = vset.pattern.permute.xlu0 0
    %4006 = vperm.xlu0 %4005, %v3852
    %v4007 = vpop.permute.xlu0 %4006
    %v4010 = vunpack.c.l.s4 839922192
    %v4011 = vunpack.c.0.s8 %v4010
    %v4012 = vlaneseq
    %v4013 = vshrl.u32 %v4012, 7
    %v4014 = vsub.s32 %v4011, %v4013
    %v4015 = vrot.slane %v4007, %v4014
    %4017 = vset.pattern.permute.xlu0 0
    %4018 = vperm.xlu0 %4017, %v3853
    %v4019 = vpop.permute.xlu0 %4018
    %v4022 = vunpack.c.l.s4 839922192
    %v4023 = vunpack.c.0.s8 %v4022
    %v4024 = vlaneseq
    %v4025 = vshrl.u32 %v4024, 7
    %v4026 = vsub.s32 %v4023, %v4025
    %v4027 = vrot.slane %v4019, %v4026
    %4029 = vset.pattern.permute.xlu0 0
    %4030 = vperm.xlu0 %4029, %v3854
    %v4031 = vpop.permute.xlu0 %4030
    %v4034 = vunpack.c.l.s4 839922192
    %v4035 = vunpack.c.0.s8 %v4034
    %v4036 = vlaneseq
    %v4037 = vshrl.u32 %v4036, 7
    %v4038 = vsub.s32 %v4035, %v4037
    %v4039 = vrot.slane %v4031, %v4038
    %4041 = vset.pattern.permute.xlu0 0
    %4042 = vperm.xlu0 %4041, %v3855
    %v4043 = vpop.permute.xlu0 %4042
    %v4046 = vunpack.c.l.s4 839922192
    %v4047 = vunpack.c.0.s8 %v4046
    %v4048 = vlaneseq
    %v4049 = vshrl.u32 %v4048, 7
    %v4050 = vsub.s32 %v4047, %v4049
    %v4051 = vrot.slane %v4043, %v4050
    %4053 = vset.pattern.permute.xlu0 0
    %4054 = vperm.xlu0 %4053, %v3856
    %v4055 = vpop.permute.xlu0 %4054
    %v4058 = vunpack.c.l.s4 839922192
    %v4059 = vunpack.c.0.s8 %v4058
    %v4060 = vlaneseq
    %v4061 = vshrl.u32 %v4060, 7
    %v4062 = vsub.s32 %v4059, %v4061
    %v4063 = vrot.slane %v4055, %v4062
    %4065 = vset.pattern.permute.xlu0 0
    %4066 = vperm.xlu0 %4065, %v3857
    %v4067 = vpop.permute.xlu0 %4066
    %v4070 = vunpack.c.l.s4 839922192
    %v4071 = vunpack.c.0.s8 %v4070
    %v4072 = vlaneseq
    %v4073 = vshrl.u32 %v4072, 7
    %v4074 = vsub.s32 %v4071, %v4073
    %v4075 = vrot.slane %v4067, %v4074
    %4077 = vset.pattern.permute.xlu0 0
    %4078 = vperm.xlu0 %4077, %v3858
    %v4079 = vpop.permute.xlu0 %4078
    %v4082 = vunpack.c.l.s4 839922192
    %v4083 = vunpack.c.0.s8 %v4082
    %v4084 = vlaneseq
    %v4085 = vshrl.u32 %v4084, 7
    %v4086 = vsub.s32 %v4083, %v4085
    %v4087 = vrot.slane %v4079, %v4086
    %4089 = vset.pattern.permute.xlu0 0
    %4090 = vperm.xlu0 %4089, %v3859
    %v4091 = vpop.permute.xlu0 %4090
    %v4094 = vunpack.c.l.s4 839922192
    %v4095 = vunpack.c.0.s8 %v4094
    %v4096 = vlaneseq
    %v4097 = vshrl.u32 %v4096, 7
    %v4098 = vsub.s32 %v4095, %v4097
    %v4099 = vrot.slane %v4091, %v4098
    %4101 = vset.pattern.permute.xlu0 0
    %4102 = vperm.xlu0 %4101, %v3860
    %v4103 = vpop.permute.xlu0 %4102
    %v4106 = vunpack.c.l.s4 839922192
    %v4107 = vunpack.c.0.s8 %v4106
    %v4108 = vlaneseq
    %v4109 = vshrl.u32 %v4108, 7
    %v4110 = vsub.s32 %v4107, %v4109
    %v4111 = vrot.slane %v4103, %v4110
    %4113 = vset.pattern.permute.xlu0 0
    %4114 = vperm.xlu0 %4113, %v3861
    %v4115 = vpop.permute.xlu0 %4114
    %v4118 = vunpack.c.l.s4 839922192
    %v4119 = vunpack.c.0.s8 %v4118
    %v4120 = vlaneseq
    %v4121 = vshrl.u32 %v4120, 7
    %v4122 = vsub.s32 %v4119, %v4121
    %v4123 = vrot.slane %v4115, %v4122
    %4125 = vset.pattern.permute.xlu0 0
    %4126 = vperm.xlu0 %4125, %v3862
    %v4127 = vpop.permute.xlu0 %4126
    %v4130 = vunpack.c.l.s4 839922192
    %v4131 = vunpack.c.0.s8 %v4130
    %v4132 = vlaneseq
    %v4133 = vshrl.u32 %v4132, 7
    %v4134 = vsub.s32 %v4131, %v4133
    %v4135 = vrot.slane %v4127, %v4134
    %4137 = vset.pattern.permute.xlu0 0
    %4138 = vperm.xlu0 %4137, %v3863
    %v4139 = vpop.permute.xlu0 %4138
    %v4142 = vunpack.c.l.s4 839922192
    %v4143 = vunpack.c.0.s8 %v4142
    %v4144 = vlaneseq
    %v4145 = vshrl.u32 %v4144, 7
    %v4146 = vsub.s32 %v4143, %v4145
    %v4147 = vrot.slane %v4139, %v4146
    %4149 = vset.pattern.permute.xlu0 0
    %4150 = vperm.xlu0 %4149, %v3864
    %v4151 = vpop.permute.xlu0 %4150
    %v4154 = vunpack.c.l.s4 839922192
    %v4155 = vunpack.c.0.s8 %v4154
    %v4156 = vlaneseq
    %v4157 = vshrl.u32 %v4156, 7
    %v4158 = vsub.s32 %v4155, %v4157
    %v4159 = vrot.slane %v4151, %v4158
    %4161 = vset.pattern.permute.xlu0 0
    %4162 = vperm.xlu0 %4161, %v3865
    %v4163 = vpop.permute.xlu0 %4162
    %v4166 = vunpack.c.l.s4 839922192
    %v4167 = vunpack.c.0.s8 %v4166
    %v4168 = vlaneseq
    %v4169 = vshrl.u32 %v4168, 7
    %v4170 = vsub.s32 %v4167, %v4169
    %v4171 = vrot.slane %v4163, %v4170
    %4173 = vset.pattern.permute.xlu0 0
    %4174 = vperm.xlu0 %4173, %v3866
    %v4175 = vpop.permute.xlu0 %4174
    %v4178 = vunpack.c.l.s4 839922192
    %v4179 = vunpack.c.0.s8 %v4178
    %v4180 = vlaneseq
    %v4181 = vshrl.u32 %v4180, 7
    %v4182 = vsub.s32 %v4179, %v4181
    %v4183 = vrot.slane %v4175, %v4182
    %4185 = vset.pattern.permute.xlu0 0
    %4186 = vperm.xlu0 %4185, %v3867
    %v4187 = vpop.permute.xlu0 %4186
    %v4190 = vunpack.c.l.s4 839922192
    %v4191 = vunpack.c.0.s8 %v4190
    %v4192 = vlaneseq
    %v4193 = vshrl.u32 %v4192, 7
    %v4194 = vsub.s32 %v4191, %v4193
    %v4195 = vrot.slane %v4187, %v4194
    %4197 = vset.pattern.permute.xlu0 0
    %4198 = vperm.xlu0 %4197, %v3868
    %v4199 = vpop.permute.xlu0 %4198
    %v4202 = vunpack.c.l.s4 839922192
    %v4203 = vunpack.c.0.s8 %v4202
    %v4204 = vlaneseq
    %v4205 = vshrl.u32 %v4204, 7
    %v4206 = vsub.s32 %v4203, %v4205
    %v4207 = vrot.slane %v4199, %v4206
    %4209 = vset.pattern.permute.xlu0 0
    %4210 = vperm.xlu0 %4209, %v3869
    %v4211 = vpop.permute.xlu0 %4210
    %v4214 = vunpack.c.l.s4 839922192
    %v4215 = vunpack.c.0.s8 %v4214
    %v4216 = vlaneseq
    %v4217 = vshrl.u32 %v4216, 7
    %v4218 = vsub.s32 %v4215, %v4217
    %v4219 = vrot.slane %v4211, %v4218
    %4221 = vset.pattern.permute.xlu0 0
    %4222 = vperm.xlu0 %4221, %v3870
    %v4223 = vpop.permute.xlu0 %4222
    %v4226 = vunpack.c.l.s4 839922192
    %v4227 = vunpack.c.0.s8 %v4226
    %v4228 = vlaneseq
    %v4229 = vshrl.u32 %v4228, 7
    %v4230 = vsub.s32 %v4227, %v4229
    %v4231 = vrot.slane %v4223, %v4230
    %4233 = vset.pattern.permute.xlu0 0
    %4234 = vperm.xlu0 %4233, %v3871
    %v4235 = vpop.permute.xlu0 %4234
    %v4238 = vunpack.c.l.s4 839922192
    %v4239 = vunpack.c.0.s8 %v4238
    %v4240 = vlaneseq
    %v4241 = vshrl.u32 %v4240, 7
    %v4242 = vsub.s32 %v4239, %v4241
    %v4243 = vrot.slane %v4235, %v4242
    %4245 = vset.pattern.permute.xlu0 0
    %4246 = vperm.xlu0 %4245, %v3872
    %v4247 = vpop.permute.xlu0 %4246
    %v4250 = vunpack.c.l.s4 839922192
    %v4251 = vunpack.c.0.s8 %v4250
    %v4252 = vlaneseq
    %v4253 = vshrl.u32 %v4252, 7
    %v4254 = vsub.s32 %v4251, %v4253
    %v4255 = vrot.slane %v4247, %v4254
    %4257 = vset.pattern.permute.xlu0 0
    %4258 = vperm.xlu0 %4257, %v3873
    %v4259 = vpop.permute.xlu0 %4258
    %v4262 = vunpack.c.l.s4 839922192
    %v4263 = vunpack.c.0.s8 %v4262
    %v4264 = vlaneseq
    %v4265 = vshrl.u32 %v4264, 7
    %v4266 = vsub.s32 %v4263, %v4265
    %v4267 = vrot.slane %v4259, %v4266
    %4269 = vset.pattern.permute.xlu0 0
    %4270 = vperm.xlu0 %4269, %v3874
    %v4271 = vpop.permute.xlu0 %4270
    %v4274 = vunpack.c.l.s4 839922192
    %v4275 = vunpack.c.0.s8 %v4274
    %v4276 = vlaneseq
    %v4277 = vshrl.u32 %v4276, 7
    %v4278 = vsub.s32 %v4275, %v4277
    %v4279 = vrot.slane %v4271, %v4278
    %4281 = vset.pattern.permute.xlu0 0
    %4282 = vperm.xlu0 %4281, %v3875
    %v4283 = vpop.permute.xlu0 %4282
    %v4286 = vunpack.c.l.s4 839922192
    %v4287 = vunpack.c.0.s8 %v4286
    %v4288 = vlaneseq
    %v4289 = vshrl.u32 %v4288, 7
    %v4290 = vsub.s32 %v4287, %v4289
    %v4291 = vrot.slane %v4283, %v4290
    %4293 = vset.pattern.permute.xlu0 0
    %4294 = vperm.xlu0 %4293, %v3876
    %v4295 = vpop.permute.xlu0 %4294
    %v4298 = vunpack.c.l.s4 839922192
    %v4299 = vunpack.c.0.s8 %v4298
    %v4300 = vlaneseq
    %v4301 = vshrl.u32 %v4300, 7
    %v4302 = vsub.s32 %v4299, %v4301
    %v4303 = vrot.slane %v4295, %v4302
    %4305 = vset.pattern.permute.xlu0 0
    %4306 = vperm.xlu0 %4305, %v3877
    %v4307 = vpop.permute.xlu0 %4306
    %v4310 = vunpack.c.l.s4 839922192
    %v4311 = vunpack.c.0.s8 %v4310
    %v4312 = vlaneseq
    %v4313 = vshrl.u32 %v4312, 7
    %v4314 = vsub.s32 %v4311, %v4313
    %v4315 = vrot.slane %v4307, %v4314
    %4317 = vset.pattern.permute.xlu0 0
    %4318 = vperm.xlu0 %4317, %v3878
    %v4319 = vpop.permute.xlu0 %4318
    %v4322 = vunpack.c.l.s4 839922192
    %v4323 = vunpack.c.0.s8 %v4322
    %v4324 = vlaneseq
    %v4325 = vshrl.u32 %v4324, 7
    %v4326 = vsub.s32 %v4323, %v4325
    %v4327 = vrot.slane %v4319, %v4326
    %4329 = vset.pattern.permute.xlu0 0
    %4330 = vperm.xlu0 %4329, %v3879
    %v4331 = vpop.permute.xlu0 %4330
    %v4334 = vunpack.c.l.s4 839922192
    %v4335 = vunpack.c.0.s8 %v4334
    %v4336 = vlaneseq
    %v4337 = vshrl.u32 %v4336, 7
    %v4338 = vsub.s32 %v4335, %v4337
    %v4339 = vrot.slane %v4331, %v4338
    %4341 = vset.pattern.permute.xlu0 0
    %4342 = vperm.xlu0 %4341, %v3880
    %v4343 = vpop.permute.xlu0 %4342
    %v4346 = vunpack.c.l.s4 839922192
    %v4347 = vunpack.c.0.s8 %v4346
    %v4348 = vlaneseq
    %v4349 = vshrl.u32 %v4348, 7
    %v4350 = vsub.s32 %v4347, %v4349
    %v4351 = vrot.slane %v4343, %v4350
    %4353 = vset.pattern.permute.xlu0 0
    %4354 = vperm.xlu0 %4353, %v3881
    %v4355 = vpop.permute.xlu0 %4354
    %v4358 = vunpack.c.l.s4 839922192
    %v4359 = vunpack.c.0.s8 %v4358
    %v4360 = vlaneseq
    %v4361 = vshrl.u32 %v4360, 7
    %v4362 = vsub.s32 %v4359, %v4361
    %v4363 = vrot.slane %v4355, %v4362
    %4365 = vset.pattern.permute.xlu0 0
    %4366 = vperm.xlu0 %4365, %v3882
    %v4367 = vpop.permute.xlu0 %4366
    %v4370 = vunpack.c.l.s4 839922192
    %v4371 = vunpack.c.0.s8 %v4370
    %v4372 = vlaneseq
    %v4373 = vshrl.u32 %v4372, 7
    %v4374 = vsub.s32 %v4371, %v4373
    %v4375 = vrot.slane %v4367, %v4374
    %4377 = vset.pattern.permute.xlu0 0
    %4378 = vperm.xlu0 %4377, %v3883
    %v4379 = vpop.permute.xlu0 %4378
    %v4382 = vunpack.c.l.s4 839922192
    %v4383 = vunpack.c.0.s8 %v4382
    %v4384 = vlaneseq
    %v4385 = vshrl.u32 %v4384, 7
    %v4386 = vsub.s32 %v4383, %v4385
    %v4387 = vrot.slane %v4379, %v4386
    %4389 = vset.pattern.permute.xlu0 0
    %4390 = vperm.xlu0 %4389, %v3884
    %v4391 = vpop.permute.xlu0 %4390
    %v4394 = vunpack.c.l.s4 839922192
    %v4395 = vunpack.c.0.s8 %v4394
    %v4396 = vlaneseq
    %v4397 = vshrl.u32 %v4396, 7
    %v4398 = vsub.s32 %v4395, %v4397
    %v4399 = vrot.slane %v4391, %v4398
    %4401 = vset.pattern.permute.xlu0 0
    %4402 = vperm.xlu0 %4401, %v3885
    %v4403 = vpop.permute.xlu0 %4402
    %v4406 = vunpack.c.l.s4 839922192
    %v4407 = vunpack.c.0.s8 %v4406
    %v4408 = vlaneseq
    %v4409 = vshrl.u32 %v4408, 7
    %v4410 = vsub.s32 %v4407, %v4409
    %v4411 = vrot.slane %v4403, %v4410
    %4413 = vset.pattern.permute.xlu0 0
    %4414 = vperm.xlu0 %4413, %v3886
    %v4415 = vpop.permute.xlu0 %4414
    %v4418 = vunpack.c.l.s4 839922192
    %v4419 = vunpack.c.0.s8 %v4418
    %v4420 = vlaneseq
    %v4421 = vshrl.u32 %v4420, 7
    %v4422 = vsub.s32 %v4419, %v4421
    %v4423 = vrot.slane %v4415, %v4422
    %4425 = vset.pattern.permute.xlu0 0
    %4426 = vperm.xlu0 %4425, %v3887
    %v4427 = vpop.permute.xlu0 %4426
    %v4430 = vunpack.c.l.s4 839922192
    %v4431 = vunpack.c.0.s8 %v4430
    %v4432 = vlaneseq
    %v4433 = vshrl.u32 %v4432, 7
    %v4434 = vsub.s32 %v4431, %v4433
    %v4435 = vrot.slane %v4427, %v4434
    %4437 = vset.pattern.permute.xlu0 0
    %4438 = vperm.xlu0 %4437, %v3888
    %v4439 = vpop.permute.xlu0 %4438
    %v4442 = vunpack.c.l.s4 839922192
    %v4443 = vunpack.c.0.s8 %v4442
    %v4444 = vlaneseq
    %v4445 = vshrl.u32 %v4444, 7
    %v4446 = vsub.s32 %v4443, %v4445
    %v4447 = vrot.slane %v4439, %v4446
    %4449 = vset.pattern.permute.xlu0 0
    %4450 = vperm.xlu0 %4449, %v3889
    %v4451 = vpop.permute.xlu0 %4450
    %v4454 = vunpack.c.l.s4 839922192
    %v4455 = vunpack.c.0.s8 %v4454
    %v4456 = vlaneseq
    %v4457 = vshrl.u32 %v4456, 7
    %v4458 = vsub.s32 %v4455, %v4457
    %v4459 = vrot.slane %v4451, %v4458
    %4461 = vset.pattern.permute.xlu0 0
    %4462 = vperm.xlu0 %4461, %v3890
    %v4463 = vpop.permute.xlu0 %4462
    %v4466 = vunpack.c.l.s4 839922192
    %v4467 = vunpack.c.0.s8 %v4466
    %v4468 = vlaneseq
    %v4469 = vshrl.u32 %v4468, 7
    %v4470 = vsub.s32 %v4467, %v4469
    %v4471 = vrot.slane %v4463, %v4470
    %4473 = vset.pattern.permute.xlu0 0
    %4474 = vperm.xlu0 %4473, %v3891
    %v4475 = vpop.permute.xlu0 %4474
    %v4478 = vunpack.c.l.s4 839922192
    %v4479 = vunpack.c.0.s8 %v4478
    %v4480 = vlaneseq
    %v4481 = vshrl.u32 %v4480, 7
    %v4482 = vsub.s32 %v4479, %v4481
    %v4483 = vrot.slane %v4475, %v4482
    %4485 = vset.pattern.permute.xlu0 0
    %4486 = vperm.xlu0 %4485, %v3892
    %v4487 = vpop.permute.xlu0 %4486
    %v4490 = vunpack.c.l.s4 839922192
    %v4491 = vunpack.c.0.s8 %v4490
    %v4492 = vlaneseq
    %v4493 = vshrl.u32 %v4492, 7
    %v4494 = vsub.s32 %v4491, %v4493
    %v4495 = vrot.slane %v4487, %v4494
    %4497 = vset.pattern.permute.xlu0 0
    %4498 = vperm.xlu0 %4497, %v3893
    %v4499 = vpop.permute.xlu0 %4498
    %v4502 = vunpack.c.l.s4 839922192
    %v4503 = vunpack.c.0.s8 %v4502
    %v4504 = vlaneseq
    %v4505 = vshrl.u32 %v4504, 7
    %v4506 = vsub.s32 %v4503, %v4505
    %v4507 = vrot.slane %v4499, %v4506
    %4509 = vset.pattern.permute.xlu0 0
    %4510 = vperm.xlu0 %4509, %v3894
    %v4511 = vpop.permute.xlu0 %4510
    %v4514 = vunpack.c.l.s4 839922192
    %v4515 = vunpack.c.0.s8 %v4514
    %v4516 = vlaneseq
    %v4517 = vshrl.u32 %v4516, 7
    %v4518 = vsub.s32 %v4515, %v4517
    %v4519 = vrot.slane %v4511, %v4518
    %4521 = vset.pattern.permute.xlu0 0
    %4522 = vperm.xlu0 %4521, %v3895
    %v4523 = vpop.permute.xlu0 %4522
    %v4526 = vunpack.c.l.s4 839922192
    %v4527 = vunpack.c.0.s8 %v4526
    %v4528 = vlaneseq
    %v4529 = vshrl.u32 %v4528, 7
    %v4530 = vsub.s32 %v4527, %v4529
    %v4531 = vrot.slane %v4523, %v4530
    %4533 = vset.pattern.permute.xlu0 0
    %4534 = vperm.xlu0 %4533, %v3896
    %v4535 = vpop.permute.xlu0 %4534
    %v4538 = vunpack.c.l.s4 839922192
    %v4539 = vunpack.c.0.s8 %v4538
    %v4540 = vlaneseq
    %v4541 = vshrl.u32 %v4540, 7
    %v4542 = vsub.s32 %v4539, %v4541
    %v4543 = vrot.slane %v4535, %v4542
    %4545 = vset.pattern.permute.xlu0 0
    %4546 = vperm.xlu0 %4545, %v3897
    %v4547 = vpop.permute.xlu0 %4546
    %v4550 = vunpack.c.l.s4 839922192
    %v4551 = vunpack.c.0.s8 %v4550
    %v4552 = vlaneseq
    %v4553 = vshrl.u32 %v4552, 7
    %v4554 = vsub.s32 %v4551, %v4553
    %v4555 = vrot.slane %v4547, %v4554
    %4557 = vset.pattern.permute.xlu0 0
    %4558 = vperm.xlu0 %4557, %v3898
    %v4559 = vpop.permute.xlu0 %4558
    %v4562 = vunpack.c.l.s4 839922192
    %v4563 = vunpack.c.0.s8 %v4562
    %v4564 = vlaneseq
    %v4565 = vshrl.u32 %v4564, 7
    %v4566 = vsub.s32 %v4563, %v4565
    %v4567 = vrot.slane %v4559, %v4566
    %4569 = vset.pattern.permute.xlu0 0
    %4570 = vperm.xlu0 %4569, %v3899
    %v4571 = vpop.permute.xlu0 %4570
    %v4574 = vunpack.c.l.s4 839922192
    %v4575 = vunpack.c.0.s8 %v4574
    %v4576 = vlaneseq
    %v4577 = vshrl.u32 %v4576, 7
    %v4578 = vsub.s32 %v4575, %v4577
    %v4579 = vrot.slane %v4571, %v4578
    %4581 = vset.pattern.permute.xlu0 0
    %4582 = vperm.xlu0 %4581, %v3900
    %v4583 = vpop.permute.xlu0 %4582
    %v4586 = vunpack.c.l.s4 839922192
    %v4587 = vunpack.c.0.s8 %v4586
    %v4588 = vlaneseq
    %v4589 = vshrl.u32 %v4588, 7
    %v4590 = vsub.s32 %v4587, %v4589
    %v4591 = vrot.slane %v4583, %v4590
    %4593 = vset.pattern.permute.xlu0 0
    %4594 = vperm.xlu0 %4593, %v3901
    %v4595 = vpop.permute.xlu0 %4594
    %v4598 = vunpack.c.l.s4 839922192
    %v4599 = vunpack.c.0.s8 %v4598
    %v4600 = vlaneseq
    %v4601 = vshrl.u32 %v4600, 7
    %v4602 = vsub.s32 %v4599, %v4601
    %v4603 = vrot.slane %v4595, %v4602
    %4605 = vset.pattern.permute.xlu0 0
    %4606 = vperm.xlu0 %4605, %v3902
    %v4607 = vpop.permute.xlu0 %4606
    %v4610 = vunpack.c.l.s4 839922192
    %v4611 = vunpack.c.0.s8 %v4610
    %v4612 = vlaneseq
    %v4613 = vshrl.u32 %v4612, 7
    %v4614 = vsub.s32 %v4611, %v4613
    %v4615 = vrot.slane %v4607, %v4614
    %4617 = vset.pattern.permute.xlu0 0
    %4618 = vperm.xlu0 %4617, %v3903
    %v4619 = vpop.permute.xlu0 %4618
    %v4622 = vunpack.c.l.s4 839922192
    %v4623 = vunpack.c.0.s8 %v4622
    %v4624 = vlaneseq
    %v4625 = vshrl.u32 %v4624, 7
    %v4626 = vsub.s32 %v4623, %v4625
    %v4627 = vrot.slane %v4619, %v4626
    %4629 = vset.pattern.permute.xlu0 0
    %4630 = vperm.xlu0 %4629, %v3904
    %v4631 = vpop.permute.xlu0 %4630
    %v4634 = vunpack.c.l.s4 839922192
    %v4635 = vunpack.c.0.s8 %v4634
    %v4636 = vlaneseq
    %v4637 = vshrl.u32 %v4636, 7
    %v4638 = vsub.s32 %v4635, %v4637
    %v4639 = vrot.slane %v4631, %v4638
    %4641 = vset.pattern.permute.xlu0 0
    %4642 = vperm.xlu0 %4641, %v3905
    %v4643 = vpop.permute.xlu0 %4642
    %v4646 = vunpack.c.l.s4 839922192
    %v4647 = vunpack.c.0.s8 %v4646
    %v4648 = vlaneseq
    %v4649 = vshrl.u32 %v4648, 7
    %v4650 = vsub.s32 %v4647, %v4649
    %v4651 = vrot.slane %v4643, %v4650
    %4653 = vset.pattern.permute.xlu0 0
    %4654 = vperm.xlu0 %4653, %v3906
    %v4655 = vpop.permute.xlu0 %4654
    %v4658 = vunpack.c.l.s4 839922192
    %v4659 = vunpack.c.0.s8 %v4658
    %v4660 = vlaneseq
    %v4661 = vshrl.u32 %v4660, 7
    %v4662 = vsub.s32 %v4659, %v4661
    %v4663 = vrot.slane %v4655, %v4662
    %4665 = vset.pattern.permute.xlu0 0
    %4666 = vperm.xlu0 %4665, %v3907
    %v4667 = vpop.permute.xlu0 %4666
    %v4670 = vunpack.c.l.s4 839922192
    %v4671 = vunpack.c.0.s8 %v4670
    %v4672 = vlaneseq
    %v4673 = vshrl.u32 %v4672, 7
    %v4674 = vsub.s32 %v4671, %v4673
    %v4675 = vrot.slane %v4667, %v4674
    %v4740 = vunpack.c.l.b16 %v3919
    %v4741 = vunpack.c.l.b16 %v3931
    %v4742 = vunpack.c.l.b16 %v3943
    %v4743 = vunpack.c.l.b16 %v3955
    %v4744 = vunpack.c.l.b16 %v3967
    %v4745 = vunpack.c.l.b16 %v3979
    %v4746 = vunpack.c.l.b16 %v3991
    %v4747 = vunpack.c.l.b16 %v4003
    %v4748 = vunpack.c.l.b16 %v4015
    %v4749 = vunpack.c.l.b16 %v4027
    %v4750 = vunpack.c.l.b16 %v4039
    %v4751 = vunpack.c.l.b16 %v4051
    %v4752 = vunpack.c.l.b16 %v4063
    %v4753 = vunpack.c.l.b16 %v4075
    %v4754 = vunpack.c.l.b16 %v4087
    %v4755 = vunpack.c.l.b16 %v4099
    %v4756 = vunpack.c.l.b16 %v4111
    %v4757 = vunpack.c.l.b16 %v4123
    %v4758 = vunpack.c.l.b16 %v4135
    %v4759 = vunpack.c.l.b16 %v4147
    %v4760 = vunpack.c.l.b16 %v4159
    %v4761 = vunpack.c.l.b16 %v4171
    %v4762 = vunpack.c.l.b16 %v4183
    %v4763 = vunpack.c.l.b16 %v4195
    %v4764 = vunpack.c.l.b16 %v4207
    %v4765 = vunpack.c.l.b16 %v4219
    %v4766 = vunpack.c.l.b16 %v4231
    %v4767 = vunpack.c.l.b16 %v4243
    %v4768 = vunpack.c.l.b16 %v4255
    %v4769 = vunpack.c.l.b16 %v4267
    %v4770 = vunpack.c.l.b16 %v4279
    %v4771 = vunpack.c.l.b16 %v4291
    %v4772 = vunpack.c.l.b16 %v4303
    %v4773 = vunpack.c.l.b16 %v4315
    %v4774 = vunpack.c.l.b16 %v4327
    %v4775 = vunpack.c.l.b16 %v4339
    %v4776 = vunpack.c.l.b16 %v4351
    %v4777 = vunpack.c.l.b16 %v4363
    %v4778 = vunpack.c.l.b16 %v4375
    %v4779 = vunpack.c.l.b16 %v4387
    %v4780 = vunpack.c.l.b16 %v4399
    %v4781 = vunpack.c.l.b16 %v4411
    %v4782 = vunpack.c.l.b16 %v4423
    %v4783 = vunpack.c.l.b16 %v4435
    %v4784 = vunpack.c.l.b16 %v4447
    %v4785 = vunpack.c.l.b16 %v4459
    %v4786 = vunpack.c.l.b16 %v4471
    %v4787 = vunpack.c.l.b16 %v4483
    %v4788 = vunpack.c.l.b16 %v4495
    %v4789 = vunpack.c.l.b16 %v4507
    %v4790 = vunpack.c.l.b16 %v4519
    %v4791 = vunpack.c.l.b16 %v4531
    %v4792 = vunpack.c.l.b16 %v4543
    %v4793 = vunpack.c.l.b16 %v4555
    %v4794 = vunpack.c.l.b16 %v4567
    %v4795 = vunpack.c.l.b16 %v4579
    %v4796 = vunpack.c.l.b16 %v4591
    %v4797 = vunpack.c.l.b16 %v4603
    %v4798 = vunpack.c.l.b16 %v4615
    %v4799 = vunpack.c.l.b16 %v4627
    %v4800 = vunpack.c.l.b16 %v4639
    %v4801 = vunpack.c.l.b16 %v4651
    %v4802 = vunpack.c.l.b16 %v4663
    %v4803 = vunpack.c.l.b16 %v4675
    %v4804 = vpack.c.b16 %v4741, %v4740
    %v4805 = vpack.c.b16 %v4743, %v4742
    %v4806 = vpack.c.b16 %v4745, %v4744
    %v4807 = vpack.c.b16 %v4747, %v4746
    %v4808 = vpack.c.b16 %v4749, %v4748
    %v4809 = vpack.c.b16 %v4751, %v4750
    %v4810 = vpack.c.b16 %v4753, %v4752
    %v4811 = vpack.c.b16 %v4755, %v4754
    %v4812 = vpack.c.b16 %v4757, %v4756
    %v4813 = vpack.c.b16 %v4759, %v4758
    %v4814 = vpack.c.b16 %v4761, %v4760
    %v4815 = vpack.c.b16 %v4763, %v4762
    %v4816 = vpack.c.b16 %v4765, %v4764
    %v4817 = vpack.c.b16 %v4767, %v4766
    %v4818 = vpack.c.b16 %v4769, %v4768
    %v4819 = vpack.c.b16 %v4771, %v4770
    %v4820 = vpack.c.b16 %v4773, %v4772
    %v4821 = vpack.c.b16 %v4775, %v4774
    %v4822 = vpack.c.b16 %v4777, %v4776
    %v4823 = vpack.c.b16 %v4779, %v4778
    %v4824 = vpack.c.b16 %v4781, %v4780
    %v4825 = vpack.c.b16 %v4783, %v4782
    %v4826 = vpack.c.b16 %v4785, %v4784
    %v4827 = vpack.c.b16 %v4787, %v4786
    %v4828 = vpack.c.b16 %v4789, %v4788
    %v4829 = vpack.c.b16 %v4791, %v4790
    %v4830 = vpack.c.b16 %v4793, %v4792
    %v4831 = vpack.c.b16 %v4795, %v4794
    %v4832 = vpack.c.b16 %v4797, %v4796
    %v4833 = vpack.c.b16 %v4799, %v4798
    %v4834 = vpack.c.b16 %v4801, %v4800
    %v4835 = vpack.c.b16 %v4803, %v4802
    %v4868 = vadd.bf16 %v3748, %v4804
    %v4869 = vadd.bf16 %v3749, %v4804
    %v4870 = vadd.bf16 %v3750, %v4804
    %v4871 = vadd.bf16 %v3751, %v4805
    %v4872 = vadd.bf16 %v3752, %v4805
    %v4873 = vadd.bf16 %v3753, %v4805
    %v4874 = vadd.bf16 %v3754, %v4806
    %v4875 = vadd.bf16 %v3755, %v4806
    %v4876 = vadd.bf16 %v3756, %v4806
    %v4877 = vadd.bf16 %v3757, %v4807
    %v4878 = vadd.bf16 %v3758, %v4807
    %v4879 = vadd.bf16 %v3759, %v4807
    %v4880 = vadd.bf16 %v3760, %v4808
    %v4881 = vadd.bf16 %v3761, %v4808
    %v4882 = vadd.bf16 %v3762, %v4808
    %v4883 = vadd.bf16 %v3763, %v4809
    %v4884 = vadd.bf16 %v3764, %v4809
    %v4885 = vadd.bf16 %v3765, %v4809
    %v4886 = vadd.bf16 %v3766, %v4810
    %v4887 = vadd.bf16 %v3767, %v4810
    %v4888 = vadd.bf16 %v3768, %v4810
    %v4889 = vadd.bf16 %v3769, %v4811
    %v4890 = vadd.bf16 %v3770, %v4811
    %v4891 = vadd.bf16 %v3771, %v4811
    %v4892 = vadd.bf16 %v3772, %v4812
    %v4893 = vadd.bf16 %v3773, %v4812
    %v4894 = vadd.bf16 %v3774, %v4812
    %v4895 = vadd.bf16 %v3775, %v4813
    %v4896 = vadd.bf16 %v3776, %v4813
    %v4897 = vadd.bf16 %v3777, %v4813
    %v4898 = vadd.bf16 %v3778, %v4814
    %v4899 = vadd.bf16 %v3779, %v4814
    %v4900 = vadd.bf16 %v3780, %v4814
    %v4901 = vadd.bf16 %v3781, %v4815
    %v4902 = vadd.bf16 %v3782, %v4815
    %v4903 = vadd.bf16 %v3783, %v4815
    %v4904 = vadd.bf16 %v3784, %v4816
    %v4905 = vadd.bf16 %v3785, %v4816
    %v4906 = vadd.bf16 %v3786, %v4816
    %v4907 = vadd.bf16 %v3787, %v4817
    %v4908 = vadd.bf16 %v3788, %v4817
    %v4909 = vadd.bf16 %v3789, %v4817
    %v4910 = vadd.bf16 %v3790, %v4818
    %v4911 = vadd.bf16 %v3791, %v4818
    %v4912 = vadd.bf16 %v3792, %v4818
    %v4913 = vadd.bf16 %v3793, %v4819
    %v4914 = vadd.bf16 %v3794, %v4819
    %v4915 = vadd.bf16 %v3795, %v4819
    %v4916 = vadd.bf16 %v3796, %v4820
    %v4917 = vadd.bf16 %v3797, %v4820
    %v4918 = vadd.bf16 %v3798, %v4820
    %v4919 = vadd.bf16 %v3799, %v4821
    %v4920 = vadd.bf16 %v3800, %v4821
    %v4921 = vadd.bf16 %v3801, %v4821
    %v4922 = vadd.bf16 %v3802, %v4822
    %v4923 = vadd.bf16 %v3803, %v4822
    %v4924 = vadd.bf16 %v3804, %v4822
    %v4925 = vadd.bf16 %v3805, %v4823
    %v4926 = vadd.bf16 %v3806, %v4823
    %v4927 = vadd.bf16 %v3807, %v4823
    %v4928 = vadd.bf16 %v3808, %v4824
    %v4929 = vadd.bf16 %v3809, %v4824
    %v4930 = vadd.bf16 %v3810, %v4824
    %v4931 = vadd.bf16 %v3811, %v4825
    %v4932 = vadd.bf16 %v3812, %v4825
    %v4933 = vadd.bf16 %v3813, %v4825
    %v4934 = vadd.bf16 %v3814, %v4826
    %v4935 = vadd.bf16 %v3815, %v4826
    %v4936 = vadd.bf16 %v3816, %v4826
    %v4937 = vadd.bf16 %v3817, %v4827
    %v4938 = vadd.bf16 %v3818, %v4827
    %v4939 = vadd.bf16 %v3819, %v4827
    %v4940 = vadd.bf16 %v3820, %v4828
    %v4941 = vadd.bf16 %v3821, %v4828
    %v4942 = vadd.bf16 %v3822, %v4828
    %v4943 = vadd.bf16 %v3823, %v4829
    %v4944 = vadd.bf16 %v3824, %v4829
    %v4945 = vadd.bf16 %v3825, %v4829
    %v4946 = vadd.bf16 %v3826, %v4830
    %v4947 = vadd.bf16 %v3827, %v4830
    %v4948 = vadd.bf16 %v3828, %v4830
    %v4949 = vadd.bf16 %v3829, %v4831
    %v4950 = vadd.bf16 %v3830, %v4831
    %v4951 = vadd.bf16 %v3831, %v4831
    %v4952 = vadd.bf16 %v3832, %v4832
    %v4953 = vadd.bf16 %v3833, %v4832
    %v4954 = vadd.bf16 %v3834, %v4832
    %v4955 = vadd.bf16 %v3835, %v4833
    %v4956 = vadd.bf16 %v3836, %v4833
    %v4957 = vadd.bf16 %v3837, %v4833
    %v4958 = vadd.bf16 %v3838, %v4834
    %v4959 = vadd.bf16 %v3839, %v4834
    %v4960 = vadd.bf16 %v3840, %v4834
    %v4961 = vadd.bf16 %v3841, %v4835
    %v4962 = vadd.bf16 %v3842, %v4835
    %v4963 = vadd.bf16 %v3843, %v4835
    %vm4964 = vcmp.gt.bf16.partialorder %v4868, 0
    %vm4965 = vcmp.gt.bf16.partialorder %v4869, 0
    %vm4966 = vcmp.gt.bf16.partialorder %v4870, 0
    %vm4967 = vcmp.gt.bf16.partialorder %v4871, 0
    %vm4968 = vcmp.gt.bf16.partialorder %v4872, 0
    %vm4969 = vcmp.gt.bf16.partialorder %v4873, 0
    %vm4970 = vcmp.gt.bf16.partialorder %v4874, 0
    %vm4971 = vcmp.gt.bf16.partialorder %v4875, 0
    %vm4972 = vcmp.gt.bf16.partialorder %v4876, 0
    %vm4973 = vcmp.gt.bf16.partialorder %v4877, 0
    %vm4974 = vcmp.gt.bf16.partialorder %v4878, 0
    %vm4975 = vcmp.gt.bf16.partialorder %v4879, 0
    %vm4976 = vcmp.gt.bf16.partialorder %v4880, 0
    %vm4977 = vcmp.gt.bf16.partialorder %v4881, 0
    %vm4978 = vcmp.gt.bf16.partialorder %v4882, 0
    %vm4979 = vcmp.gt.bf16.partialorder %v4883, 0
    %vm4980 = vcmp.gt.bf16.partialorder %v4884, 0
    %vm4981 = vcmp.gt.bf16.partialorder %v4885, 0
    %vm4982 = vcmp.gt.bf16.partialorder %v4886, 0
    %vm4983 = vcmp.gt.bf16.partialorder %v4887, 0
    %vm4984 = vcmp.gt.bf16.partialorder %v4888, 0
    %vm4985 = vcmp.gt.bf16.partialorder %v4889, 0
    %vm4986 = vcmp.gt.bf16.partialorder %v4890, 0
    %vm4987 = vcmp.gt.bf16.partialorder %v4891, 0
    %vm4988 = vcmp.gt.bf16.partialorder %v4892, 0
    %vm4989 = vcmp.gt.bf16.partialorder %v4893, 0
    %vm4990 = vcmp.gt.bf16.partialorder %v4894, 0
    %vm4991 = vcmp.gt.bf16.partialorder %v4895, 0
    %vm4992 = vcmp.gt.bf16.partialorder %v4896, 0
    %vm4993 = vcmp.gt.bf16.partialorder %v4897, 0
    %vm4994 = vcmp.gt.bf16.partialorder %v4898, 0
    %vm4995 = vcmp.gt.bf16.partialorder %v4899, 0
    %vm4996 = vcmp.gt.bf16.partialorder %v4900, 0
    %vm4997 = vcmp.gt.bf16.partialorder %v4901, 0
    %vm4998 = vcmp.gt.bf16.partialorder %v4902, 0
    %vm4999 = vcmp.gt.bf16.partialorder %v4903, 0
    %vm5000 = vcmp.gt.bf16.partialorder %v4904, 0
    %vm5001 = vcmp.gt.bf16.partialorder %v4905, 0
    %vm5002 = vcmp.gt.bf16.partialorder %v4906, 0
    %vm5003 = vcmp.gt.bf16.partialorder %v4907, 0
    %vm5004 = vcmp.gt.bf16.partialorder %v4908, 0
    %vm5005 = vcmp.gt.bf16.partialorder %v4909, 0
    %vm5006 = vcmp.gt.bf16.partialorder %v4910, 0
    %vm5007 = vcmp.gt.bf16.partialorder %v4911, 0
    %vm5008 = vcmp.gt.bf16.partialorder %v4912, 0
    %vm5009 = vcmp.gt.bf16.partialorder %v4913, 0
    %vm5010 = vcmp.gt.bf16.partialorder %v4914, 0
    %vm5011 = vcmp.gt.bf16.partialorder %v4915, 0
    %vm5012 = vcmp.gt.bf16.partialorder %v4916, 0
    %vm5013 = vcmp.gt.bf16.partialorder %v4917, 0
    %vm5014 = vcmp.gt.bf16.partialorder %v4918, 0
    %vm5015 = vcmp.gt.bf16.partialorder %v4919, 0
    %vm5016 = vcmp.gt.bf16.partialorder %v4920, 0
    %vm5017 = vcmp.gt.bf16.partialorder %v4921, 0
    %vm5018 = vcmp.gt.bf16.partialorder %v4922, 0
    %vm5019 = vcmp.gt.bf16.partialorder %v4923, 0
    %vm5020 = vcmp.gt.bf16.partialorder %v4924, 0
    %vm5021 = vcmp.gt.bf16.partialorder %v4925, 0
    %vm5022 = vcmp.gt.bf16.partialorder %v4926, 0
    %vm5023 = vcmp.gt.bf16.partialorder %v4927, 0
    %vm5024 = vcmp.gt.bf16.partialorder %v4928, 0
    %vm5025 = vcmp.gt.bf16.partialorder %v4929, 0
    %vm5026 = vcmp.gt.bf16.partialorder %v4930, 0
    %vm5027 = vcmp.gt.bf16.partialorder %v4931, 0
    %vm5028 = vcmp.gt.bf16.partialorder %v4932, 0
    %vm5029 = vcmp.gt.bf16.partialorder %v4933, 0
    %vm5030 = vcmp.gt.bf16.partialorder %v4934, 0
    %vm5031 = vcmp.gt.bf16.partialorder %v4935, 0
    %vm5032 = vcmp.gt.bf16.partialorder %v4936, 0
    %vm5033 = vcmp.gt.bf16.partialorder %v4937, 0
    %vm5034 = vcmp.gt.bf16.partialorder %v4938, 0
    %vm5035 = vcmp.gt.bf16.partialorder %v4939, 0
    %vm5036 = vcmp.gt.bf16.partialorder %v4940, 0
    %vm5037 = vcmp.gt.bf16.partialorder %v4941, 0
    %vm5038 = vcmp.gt.bf16.partialorder %v4942, 0
    %vm5039 = vcmp.gt.bf16.partialorder %v4943, 0
    %vm5040 = vcmp.gt.bf16.partialorder %v4944, 0
    %vm5041 = vcmp.gt.bf16.partialorder %v4945, 0
    %vm5042 = vcmp.gt.bf16.partialorder %v4946, 0
    %vm5043 = vcmp.gt.bf16.partialorder %v4947, 0
    %vm5044 = vcmp.gt.bf16.partialorder %v4948, 0
    %vm5045 = vcmp.gt.bf16.partialorder %v4949, 0
    %vm5046 = vcmp.gt.bf16.partialorder %v4950, 0
    %vm5047 = vcmp.gt.bf16.partialorder %v4951, 0
    %vm5048 = vcmp.gt.bf16.partialorder %v4952, 0
    %vm5049 = vcmp.gt.bf16.partialorder %v4953, 0
    %vm5050 = vcmp.gt.bf16.partialorder %v4954, 0
    %vm5051 = vcmp.gt.bf16.partialorder %v4955, 0
    %vm5052 = vcmp.gt.bf16.partialorder %v4956, 0
    %vm5053 = vcmp.gt.bf16.partialorder %v4957, 0
    %vm5054 = vcmp.gt.bf16.partialorder %v4958, 0
    %vm5055 = vcmp.gt.bf16.partialorder %v4959, 0
    %vm5056 = vcmp.gt.bf16.partialorder %v4960, 0
    %vm5057 = vcmp.gt.bf16.partialorder %v4961, 0
    %vm5058 = vcmp.gt.bf16.partialorder %v4962, 0
    %vm5059 = vcmp.gt.bf16.partialorder %v4963, 0
    %v5061 = vmul.bf16 %v4868, 1069105081
    %v5062 = vpow.bf16.pop %v5061
    %v5064 = vmul.bf16 %v4869, 1069105081
    %v5065 = vpow.bf16.pop %v5064
    %v5067 = vmul.bf16 %v4870, 1069105081
    %v5068 = vpow.bf16.pop %v5067
    %v5070 = vmul.bf16 %v4871, 1069105081
    %v5071 = vpow.bf16.pop %v5070
    %v5073 = vmul.bf16 %v4872, 1069105081
    %v5074 = vpow.bf16.pop %v5073
    %v5076 = vmul.bf16 %v4873, 1069105081
    %v5077 = vpow.bf16.pop %v5076
    %v5079 = vmul.bf16 %v4874, 1069105081
    %v5080 = vpow.bf16.pop %v5079
    %v5082 = vmul.bf16 %v4875, 1069105081
    %v5083 = vpow.bf16.pop %v5082
    %v5085 = vmul.bf16 %v4876, 1069105081
    %v5086 = vpow.bf16.pop %v5085
    %v5088 = vmul.bf16 %v4877, 1069105081
    %v5089 = vpow.bf16.pop %v5088
    %v5091 = vmul.bf16 %v4878, 1069105081
    %v5092 = vpow.bf16.pop %v5091
    %v5094 = vmul.bf16 %v4879, 1069105081
    %v5095 = vpow.bf16.pop %v5094
    %v5097 = vmul.bf16 %v4880, 1069105081
    %v5098 = vpow.bf16.pop %v5097
    %v5100 = vmul.bf16 %v4881, 1069105081
    %v5101 = vpow.bf16.pop %v5100
    %v5103 = vmul.bf16 %v4882, 1069105081
    %v5104 = vpow.bf16.pop %v5103
    %v5106 = vmul.bf16 %v4883, 1069105081
    %v5107 = vpow.bf16.pop %v5106
    %v5109 = vmul.bf16 %v4884, 1069105081
    %v5110 = vpow.bf16.pop %v5109
    %v5112 = vmul.bf16 %v4885, 1069105081
    %v5113 = vpow.bf16.pop %v5112
    %v5115 = vmul.bf16 %v4886, 1069105081
    %v5116 = vpow.bf16.pop %v5115
    %v5118 = vmul.bf16 %v4887, 1069105081
    %v5119 = vpow.bf16.pop %v5118
    %v5121 = vmul.bf16 %v4888, 1069105081
    %v5122 = vpow.bf16.pop %v5121
    %v5124 = vmul.bf16 %v4889, 1069105081
    %v5125 = vpow.bf16.pop %v5124
    %v5127 = vmul.bf16 %v4890, 1069105081
    %v5128 = vpow.bf16.pop %v5127
    %v5130 = vmul.bf16 %v4891, 1069105081
    %v5131 = vpow.bf16.pop %v5130
    %v5133 = vmul.bf16 %v4892, 1069105081
    %v5134 = vpow.bf16.pop %v5133
    %v5136 = vmul.bf16 %v4893, 1069105081
    %v5137 = vpow.bf16.pop %v5136
    %v5139 = vmul.bf16 %v4894, 1069105081
    %v5140 = vpow.bf16.pop %v5139
    %v5142 = vmul.bf16 %v4895, 1069105081
    %v5143 = vpow.bf16.pop %v5142
    %v5145 = vmul.bf16 %v4896, 1069105081
    %v5146 = vpow.bf16.pop %v5145
    %v5148 = vmul.bf16 %v4897, 1069105081
    %v5149 = vpow.bf16.pop %v5148
    %v5151 = vmul.bf16 %v4898, 1069105081
    %v5152 = vpow.bf16.pop %v5151
    %v5154 = vmul.bf16 %v4899, 1069105081
    %v5155 = vpow.bf16.pop %v5154
    %v5157 = vmul.bf16 %v4900, 1069105081
    %v5158 = vpow.bf16.pop %v5157
    %v5160 = vmul.bf16 %v4901, 1069105081
    %v5161 = vpow.bf16.pop %v5160
    %v5163 = vmul.bf16 %v4902, 1069105081
    %v5164 = vpow.bf16.pop %v5163
    %v5166 = vmul.bf16 %v4903, 1069105081
    %v5167 = vpow.bf16.pop %v5166
    %v5169 = vmul.bf16 %v4904, 1069105081
    %v5170 = vpow.bf16.pop %v5169
    %v5172 = vmul.bf16 %v4905, 1069105081
    %v5173 = vpow.bf16.pop %v5172
    %v5175 = vmul.bf16 %v4906, 1069105081
    %v5176 = vpow.bf16.pop %v5175
    %v5178 = vmul.bf16 %v4907, 1069105081
    %v5179 = vpow.bf16.pop %v5178
    %v5181 = vmul.bf16 %v4908, 1069105081
    %v5182 = vpow.bf16.pop %v5181
    %v5184 = vmul.bf16 %v4909, 1069105081
    %v5185 = vpow.bf16.pop %v5184
    %v5187 = vmul.bf16 %v4910, 1069105081
    %v5188 = vpow.bf16.pop %v5187
    %v5190 = vmul.bf16 %v4911, 1069105081
    %v5191 = vpow.bf16.pop %v5190
    %v5193 = vmul.bf16 %v4912, 1069105081
    %v5194 = vpow.bf16.pop %v5193
    %v5196 = vmul.bf16 %v4913, 1069105081
    %v5197 = vpow.bf16.pop %v5196
    %v5199 = vmul.bf16 %v4914, 1069105081
    %v5200 = vpow.bf16.pop %v5199
    %v5202 = vmul.bf16 %v4915, 1069105081
    %v5203 = vpow.bf16.pop %v5202
    %v5205 = vmul.bf16 %v4916, 1069105081
    %v5206 = vpow.bf16.pop %v5205
    %v5208 = vmul.bf16 %v4917, 1069105081
    %v5209 = vpow.bf16.pop %v5208
    %v5211 = vmul.bf16 %v4918, 1069105081
    %v5212 = vpow.bf16.pop %v5211
    %v5214 = vmul.bf16 %v4919, 1069105081
    %v5215 = vpow.bf16.pop %v5214
    %v5217 = vmul.bf16 %v4920, 1069105081
    %v5218 = vpow.bf16.pop %v5217
    %v5220 = vmul.bf16 %v4921, 1069105081
    %v5221 = vpow.bf16.pop %v5220
    %v5223 = vmul.bf16 %v4922, 1069105081
    %v5224 = vpow.bf16.pop %v5223
    %v5226 = vmul.bf16 %v4923, 1069105081
    %v5227 = vpow.bf16.pop %v5226
    %v5229 = vmul.bf16 %v4924, 1069105081
    %v5230 = vpow.bf16.pop %v5229
    %v5232 = vmul.bf16 %v4925, 1069105081
    %v5233 = vpow.bf16.pop %v5232
    %v5235 = vmul.bf16 %v4926, 1069105081
    %v5236 = vpow.bf16.pop %v5235
    %v5238 = vmul.bf16 %v4927, 1069105081
    %v5239 = vpow.bf16.pop %v5238
    %v5241 = vmul.bf16 %v4928, 1069105081
    %v5242 = vpow.bf16.pop %v5241
    %v5244 = vmul.bf16 %v4929, 1069105081
    %v5245 = vpow.bf16.pop %v5244
    %v5247 = vmul.bf16 %v4930, 1069105081
    %v5248 = vpow.bf16.pop %v5247
    %v5250 = vmul.bf16 %v4931, 1069105081
    %v5251 = vpow.bf16.pop %v5250
    %v5253 = vmul.bf16 %v4932, 1069105081
    %v5254 = vpow.bf16.pop %v5253
    %v5256 = vmul.bf16 %v4933, 1069105081
    %v5257 = vpow.bf16.pop %v5256
    %v5259 = vmul.bf16 %v4934, 1069105081
    %v5260 = vpow.bf16.pop %v5259
    %v5262 = vmul.bf16 %v4935, 1069105081
    %v5263 = vpow.bf16.pop %v5262
    %v5265 = vmul.bf16 %v4936, 1069105081
    %v5266 = vpow.bf16.pop %v5265
    %v5268 = vmul.bf16 %v4937, 1069105081
    %v5269 = vpow.bf16.pop %v5268
    %v5271 = vmul.bf16 %v4938, 1069105081
    %v5272 = vpow.bf16.pop %v5271
    %v5274 = vmul.bf16 %v4939, 1069105081
    %v5275 = vpow.bf16.pop %v5274
    %v5277 = vmul.bf16 %v4940, 1069105081
    %v5278 = vpow.bf16.pop %v5277
    %v5280 = vmul.bf16 %v4941, 1069105081
    %v5281 = vpow.bf16.pop %v5280
    %v5283 = vmul.bf16 %v4942, 1069105081
    %v5284 = vpow.bf16.pop %v5283
    %v5286 = vmul.bf16 %v4943, 1069105081
    %v5287 = vpow.bf16.pop %v5286
    %v5289 = vmul.bf16 %v4944, 1069105081
    %v5290 = vpow.bf16.pop %v5289
    %v5292 = vmul.bf16 %v4945, 1069105081
    %v5293 = vpow.bf16.pop %v5292
    %v5295 = vmul.bf16 %v4946, 1069105081
    %v5296 = vpow.bf16.pop %v5295
    %v5298 = vmul.bf16 %v4947, 1069105081
    %v5299 = vpow.bf16.pop %v5298
    %v5301 = vmul.bf16 %v4948, 1069105081
    %v5302 = vpow.bf16.pop %v5301
    %v5304 = vmul.bf16 %v4949, 1069105081
    %v5305 = vpow.bf16.pop %v5304
    %v5307 = vmul.bf16 %v4950, 1069105081
    %v5308 = vpow.bf16.pop %v5307
    %v5310 = vmul.bf16 %v4951, 1069105081
    %v5311 = vpow.bf16.pop %v5310
    %v5313 = vmul.bf16 %v4952, 1069105081
    %v5314 = vpow.bf16.pop %v5313
    %v5316 = vmul.bf16 %v4953, 1069105081
    %v5317 = vpow.bf16.pop %v5316
    %v5319 = vmul.bf16 %v4954, 1069105081
    %v5320 = vpow.bf16.pop %v5319
    %v5322 = vmul.bf16 %v4955, 1069105081
    %v5323 = vpow.bf16.pop %v5322
    %v5325 = vmul.bf16 %v4956, 1069105081
    %v5326 = vpow.bf16.pop %v5325
    %v5328 = vmul.bf16 %v4957, 1069105081
    %v5329 = vpow.bf16.pop %v5328
    %v5331 = vmul.bf16 %v4958, 1069105081
    %v5332 = vpow.bf16.pop %v5331
    %v5334 = vmul.bf16 %v4959, 1069105081
    %v5335 = vpow.bf16.pop %v5334
    %v5337 = vmul.bf16 %v4960, 1069105081
    %v5338 = vpow.bf16.pop %v5337
    %v5340 = vmul.bf16 %v4961, 1069105081
    %v5341 = vpow.bf16.pop %v5340
    %v5343 = vmul.bf16 %v4962, 1069105081
    %v5344 = vpow.bf16.pop %v5343
    %v5346 = vmul.bf16 %v4963, 1069105081
    %v5347 = vpow.bf16.pop %v5346
    %v5348 = vsub.bf16 %v5062, 1065369472
    %v5349 = vsub.bf16 %v5065, 1065369472
    %v5350 = vsub.bf16 %v5068, 1065369472
    %v5351 = vsub.bf16 %v5071, 1065369472
    %v5352 = vsub.bf16 %v5074, 1065369472
    %v5353 = vsub.bf16 %v5077, 1065369472
    %v5354 = vsub.bf16 %v5080, 1065369472
    %v5355 = vsub.bf16 %v5083, 1065369472
    %v5356 = vsub.bf16 %v5086, 1065369472
    %v5357 = vsub.bf16 %v5089, 1065369472
    %v5358 = vsub.bf16 %v5092, 1065369472
    %v5359 = vsub.bf16 %v5095, 1065369472
    %v5360 = vsub.bf16 %v5098, 1065369472
    %v5361 = vsub.bf16 %v5101, 1065369472
    %v5362 = vsub.bf16 %v5104, 1065369472
    %v5363 = vsub.bf16 %v5107, 1065369472
    %v5364 = vsub.bf16 %v5110, 1065369472
    %v5365 = vsub.bf16 %v5113, 1065369472
    %v5366 = vsub.bf16 %v5116, 1065369472
    %v5367 = vsub.bf16 %v5119, 1065369472
    %v5368 = vsub.bf16 %v5122, 1065369472
    %v5369 = vsub.bf16 %v5125, 1065369472
    %v5370 = vsub.bf16 %v5128, 1065369472
    %v5371 = vsub.bf16 %v5131, 1065369472
    %v5372 = vsub.bf16 %v5134, 1065369472
    %v5373 = vsub.bf16 %v5137, 1065369472
    %v5374 = vsub.bf16 %v5140, 1065369472
    %v5375 = vsub.bf16 %v5143, 1065369472
    %v5376 = vsub.bf16 %v5146, 1065369472
    %v5377 = vsub.bf16 %v5149, 1065369472
    %v5378 = vsub.bf16 %v5152, 1065369472
    %v5379 = vsub.bf16 %v5155, 1065369472
    %v5380 = vsub.bf16 %v5158, 1065369472
    %v5381 = vsub.bf16 %v5161, 1065369472
    %v5382 = vsub.bf16 %v5164, 1065369472
    %v5383 = vsub.bf16 %v5167, 1065369472
    %v5384 = vsub.bf16 %v5170, 1065369472
    %v5385 = vsub.bf16 %v5173, 1065369472
    %v5386 = vsub.bf16 %v5176, 1065369472
    %v5387 = vsub.bf16 %v5179, 1065369472
    %v5388 = vsub.bf16 %v5182, 1065369472
    %v5389 = vsub.bf16 %v5185, 1065369472
    %v5390 = vsub.bf16 %v5188, 1065369472
    %v5391 = vsub.bf16 %v5191, 1065369472
    %v5392 = vsub.bf16 %v5194, 1065369472
    %v5393 = vsub.bf16 %v5197, 1065369472
    %v5394 = vsub.bf16 %v5200, 1065369472
    %v5395 = vsub.bf16 %v5203, 1065369472
    %v5396 = vsub.bf16 %v5206, 1065369472
    %v5397 = vsub.bf16 %v5209, 1065369472
    %v5398 = vsub.bf16 %v5212, 1065369472
    %v5399 = vsub.bf16 %v5215, 1065369472
    %v5400 = vsub.bf16 %v5218, 1065369472
    %v5401 = vsub.bf16 %v5221, 1065369472
    %v5402 = vsub.bf16 %v5224, 1065369472
    %v5403 = vsub.bf16 %v5227, 1065369472
    %v5404 = vsub.bf16 %v5230, 1065369472
    %v5405 = vsub.bf16 %v5233, 1065369472
    %v5406 = vsub.bf16 %v5236, 1065369472
    %v5407 = vsub.bf16 %v5239, 1065369472
    %v5408 = vsub.bf16 %v5242, 1065369472
    %v5409 = vsub.bf16 %v5245, 1065369472
    %v5410 = vsub.bf16 %v5248, 1065369472
    %v5411 = vsub.bf16 %v5251, 1065369472
    %v5412 = vsub.bf16 %v5254, 1065369472
    %v5413 = vsub.bf16 %v5257, 1065369472
    %v5414 = vsub.bf16 %v5260, 1065369472
    %v5415 = vsub.bf16 %v5263, 1065369472
    %v5416 = vsub.bf16 %v5266, 1065369472
    %v5417 = vsub.bf16 %v5269, 1065369472
    %v5418 = vsub.bf16 %v5272, 1065369472
    %v5419 = vsub.bf16 %v5275, 1065369472
    %v5420 = vsub.bf16 %v5278, 1065369472
    %v5421 = vsub.bf16 %v5281, 1065369472
    %v5422 = vsub.bf16 %v5284, 1065369472
    %v5423 = vsub.bf16 %v5287, 1065369472
    %v5424 = vsub.bf16 %v5290, 1065369472
    %v5425 = vsub.bf16 %v5293, 1065369472
    %v5426 = vsub.bf16 %v5296, 1065369472
    %v5427 = vsub.bf16 %v5299, 1065369472
    %v5428 = vsub.bf16 %v5302, 1065369472
    %v5429 = vsub.bf16 %v5305, 1065369472
    %v5430 = vsub.bf16 %v5308, 1065369472
    %v5431 = vsub.bf16 %v5311, 1065369472
    %v5432 = vsub.bf16 %v5314, 1065369472
    %v5433 = vsub.bf16 %v5317, 1065369472
    %v5434 = vsub.bf16 %v5320, 1065369472
    %v5435 = vsub.bf16 %v5323, 1065369472
    %v5436 = vsub.bf16 %v5326, 1065369472
    %v5437 = vsub.bf16 %v5329, 1065369472
    %v5438 = vsub.bf16 %v5332, 1065369472
    %v5439 = vsub.bf16 %v5335, 1065369472
    %v5440 = vsub.bf16 %v5338, 1065369472
    %v5441 = vsub.bf16 %v5341, 1065369472
    %v5442 = vsub.bf16 %v5344, 1065369472
    %v5443 = vsub.bf16 %v5347, 1065369472
    %v5444 = vsel %vm4964, %v4868, %v5348
    %v5445 = vsel %vm4965, %v4869, %v5349
    %v5446 = vsel %vm4966, %v4870, %v5350
    %v5447 = vsel %vm4967, %v4871, %v5351
    %v5448 = vsel %vm4968, %v4872, %v5352
    %v5449 = vsel %vm4969, %v4873, %v5353
    %v5450 = vsel %vm4970, %v4874, %v5354
    %v5451 = vsel %vm4971, %v4875, %v5355
    %v5452 = vsel %vm4972, %v4876, %v5356
    %v5453 = vsel %vm4973, %v4877, %v5357
    %v5454 = vsel %vm4974, %v4878, %v5358
    %v5455 = vsel %vm4975, %v4879, %v5359
    %v5456 = vsel %vm4976, %v4880, %v5360
    %v5457 = vsel %vm4977, %v4881, %v5361
    %v5458 = vsel %vm4978, %v4882, %v5362
    %v5459 = vsel %vm4979, %v4883, %v5363
    %v5460 = vsel %vm4980, %v4884, %v5364
    %v5461 = vsel %vm4981, %v4885, %v5365
    %v5462 = vsel %vm4982, %v4886, %v5366
    %v5463 = vsel %vm4983, %v4887, %v5367
    %v5464 = vsel %vm4984, %v4888, %v5368
    %v5465 = vsel %vm4985, %v4889, %v5369
    %v5466 = vsel %vm4986, %v4890, %v5370
    %v5467 = vsel %vm4987, %v4891, %v5371
    %v5468 = vsel %vm4988, %v4892, %v5372
    %v5469 = vsel %vm4989, %v4893, %v5373
    %v5470 = vsel %vm4990, %v4894, %v5374
    %v5471 = vsel %vm4991, %v4895, %v5375
    %v5472 = vsel %vm4992, %v4896, %v5376
    %v5473 = vsel %vm4993, %v4897, %v5377
    %v5474 = vsel %vm4994, %v4898, %v5378
    %v5475 = vsel %vm4995, %v4899, %v5379
    %v5476 = vsel %vm4996, %v4900, %v5380
    %v5477 = vsel %vm4997, %v4901, %v5381
    %v5478 = vsel %vm4998, %v4902, %v5382
    %v5479 = vsel %vm4999, %v4903, %v5383
    %v5480 = vsel %vm5000, %v4904, %v5384
    %v5481 = vsel %vm5001, %v4905, %v5385
    %v5482 = vsel %vm5002, %v4906, %v5386
    %v5483 = vsel %vm5003, %v4907, %v5387
    %v5484 = vsel %vm5004, %v4908, %v5388
    %v5485 = vsel %vm5005, %v4909, %v5389
    %v5486 = vsel %vm5006, %v4910, %v5390
    %v5487 = vsel %vm5007, %v4911, %v5391
    %v5488 = vsel %vm5008, %v4912, %v5392
    %v5489 = vsel %vm5009, %v4913, %v5393
    %v5490 = vsel %vm5010, %v4914, %v5394
    %v5491 = vsel %vm5011, %v4915, %v5395
    %v5492 = vsel %vm5012, %v4916, %v5396
    %v5493 = vsel %vm5013, %v4917, %v5397
    %v5494 = vsel %vm5014, %v4918, %v5398
    %v5495 = vsel %vm5015, %v4919, %v5399
    %v5496 = vsel %vm5016, %v4920, %v5400
    %v5497 = vsel %vm5017, %v4921, %v5401
    %v5498 = vsel %vm5018, %v4922, %v5402
    %v5499 = vsel %vm5019, %v4923, %v5403
    %v5500 = vsel %vm5020, %v4924, %v5404
    %v5501 = vsel %vm5021, %v4925, %v5405
    %v5502 = vsel %vm5022, %v4926, %v5406
    %v5503 = vsel %vm5023, %v4927, %v5407
    %v5504 = vsel %vm5024, %v4928, %v5408
    %v5505 = vsel %vm5025, %v4929, %v5409
    %v5506 = vsel %vm5026, %v4930, %v5410
    %v5507 = vsel %vm5027, %v4931, %v5411
    %v5508 = vsel %vm5028, %v4932, %v5412
    %v5509 = vsel %vm5029, %v4933, %v5413
    %v5510 = vsel %vm5030, %v4934, %v5414
    %v5511 = vsel %vm5031, %v4935, %v5415
    %v5512 = vsel %vm5032, %v4936, %v5416
    %v5513 = vsel %vm5033, %v4937, %v5417
    %v5514 = vsel %vm5034, %v4938, %v5418
    %v5515 = vsel %vm5035, %v4939, %v5419
    %v5516 = vsel %vm5036, %v4940, %v5420
    %v5517 = vsel %vm5037, %v4941, %v5421
    %v5518 = vsel %vm5038, %v4942, %v5422
    %v5519 = vsel %vm5039, %v4943, %v5423
    %v5520 = vsel %vm5040, %v4944, %v5424
    %v5521 = vsel %vm5041, %v4945, %v5425
    %v5522 = vsel %vm5042, %v4946, %v5426
    %v5523 = vsel %vm5043, %v4947, %v5427
    %v5524 = vsel %vm5044, %v4948, %v5428
    %v5525 = vsel %vm5045, %v4949, %v5429
    %v5526 = vsel %vm5046, %v4950, %v5430
    %v5527 = vsel %vm5047, %v4951, %v5431
    %v5528 = vsel %vm5048, %v4952, %v5432
    %v5529 = vsel %vm5049, %v4953, %v5433
    %v5530 = vsel %vm5050, %v4954, %v5434
    %v5531 = vsel %vm5051, %v4955, %v5435
    %v5532 = vsel %vm5052, %v4956, %v5436
    %v5533 = vsel %vm5053, %v4957, %v5437
    %v5534 = vsel %vm5054, %v4958, %v5438
    %v5535 = vsel %vm5055, %v4959, %v5439
    %v5536 = vsel %vm5056, %v4960, %v5440
    %v5537 = vsel %vm5057, %v4961, %v5441
    %v5538 = vsel %vm5058, %v4962, %v5442
    %v5539 = vsel %vm5059, %v4963, %v5443
    %v5540 = vld [vmem:[%s4] sm:$0xff]
    %v5541 = vld [vmem:[%s4 + $0x8] sm:$0xff]
    %v5544 = vunpack.c.l.b16 %v5540
    %v5545 = vunpack.c.h.b16 %v5540
    %v5546 = vunpack.c.l.b16 %v5541
    %v5547 = vunpack.c.h.b16 %v5541
    %v5548 = vpack.c.b16 %v5544, %v5544
    %v5549 = vpack.c.b16 %v5545, %v5545
    %v5550 = vpack.c.b16 %v5546, %v5546
    %v5551 = vpack.c.b16 %v5547, %v5547
    %5556 = vmatprep.subr.bf16.mxu0 %v5466
    %5557 = vmatpush1.bf16.msra.mxu0 %v5465
    %5558 = vmatprep.subr.bf16.mxu0 %v5463
    %5559 = vmatpush1.bf16.msra.mxu0 %v5462
    %5560 = vmatprep.subr.bf16.mxu0 %v5460
    %5561 = vmatpush1.bf16.msra.mxu0 %v5459
    %5562 = vmatprep.subr.bf16.mxu0 %v5457
    %5563 = vmatpush1.bf16.msra.mxu0 %v5456
    %5564 = vmatprep.subr.bf16.mxu0 %v5454
    %5565 = vmatpush1.bf16.msra.mxu0 %v5453
    %5566 = vmatprep.subr.bf16.mxu0 %v5451
    %5567 = vmatpush1.bf16.msra.mxu0 %v5450
    %5568 = vmatprep.subr.bf16.mxu0 %v5448
    %5569 = vmatpush1.bf16.msra.mxu0 %v5447
    %5570 = vmatprep.subr.bf16.mxu0 %v5445
    %5571 = vmatpush1.bf16.msra.mxu0 %v5444
    %5572 = vmatprep.subr.bf16.mxu0 %v5490
    %5573 = vmatpush2.bf16.msra.mxu0 %v5489
    %5574 = vmatprep.subr.bf16.mxu0 %v5487
    %5575 = vmatpush2.bf16.msra.mxu0 %v5486
    %5576 = vmatprep.subr.bf16.mxu0 %v5484
    %5577 = vmatpush2.bf16.msra.mxu0 %v5483
    %5578 = vmatprep.subr.bf16.mxu0 %v5481
    %5579 = vmatpush2.bf16.msra.mxu0 %v5480
    %5580 = vmatprep.subr.bf16.mxu0 %v5478
    %5581 = vmatpush2.bf16.msra.mxu0 %v5477
    %5582 = vmatprep.subr.bf16.mxu0 %v5475
    %5583 = vmatpush2.bf16.msra.mxu0 %v5474
    %5584 = vmatprep.subr.bf16.mxu0 %v5472
    %5585 = vmatpush2.bf16.msra.mxu0 %v5471
    %5586 = vmatprep.subr.bf16.mxu0 %v5469
    %5587 = vmatpush2.bf16.msra.mxu0 %v5468
    %5588 = vmatprep.mubr.bf16.mxu0 %v5549
    %5589 = vmatmul.mubr.bf16.gmra.mxu0 %v5548
    %v5590 = vpop.f32.mrf.mxu0
    %v5591 = vadd.f32 0.0, %v5590
    %v5592 = vpop.f32.mrf.mxu0
    %v5593 = vadd.f32 0.0, %v5592
    %v5594 = vpop.f32.mrf.mxu0
    %v5595 = vpop.f32.mrf.mxu0
    %5596 = vdwg.mxu0
    %5597 = vmatprep.subr.bf16.mxu0 %v5514
    %5598 = vmatpush1.bf16.msra.mxu0 %v5513
    %5599 = vmatprep.subr.bf16.mxu0 %v5511
    %5600 = vmatpush1.bf16.msra.mxu0 %v5510
    %5601 = vmatprep.subr.bf16.mxu0 %v5508
    %5602 = vmatpush1.bf16.msra.mxu0 %v5507
    %5603 = vmatprep.subr.bf16.mxu0 %v5505
    %5604 = vmatpush1.bf16.msra.mxu0 %v5504
    %5605 = vmatprep.subr.bf16.mxu0 %v5502
    %5606 = vmatpush1.bf16.msra.mxu0 %v5501
    %5607 = vmatprep.subr.bf16.mxu0 %v5499
    %5608 = vmatpush1.bf16.msra.mxu0 %v5498
    %5609 = vmatprep.subr.bf16.mxu0 %v5496
    %5610 = vmatpush1.bf16.msra.mxu0 %v5495
    %5611 = vmatprep.subr.bf16.mxu0 %v5493
    %5612 = vmatpush1.bf16.msra.mxu0 %v5492
    %5613 = vmatprep.subr.bf16.mxu0 %v5538
    %5614 = vmatpush2.bf16.msra.mxu0 %v5537
    %5615 = vmatprep.subr.bf16.mxu0 %v5535
    %5616 = vmatpush2.bf16.msra.mxu0 %v5534
    %5617 = vmatprep.subr.bf16.mxu0 %v5532
    %5618 = vmatpush2.bf16.msra.mxu0 %v5531
    %5619 = vmatprep.subr.bf16.mxu0 %v5529
    %5620 = vmatpush2.bf16.msra.mxu0 %v5528
    %5621 = vmatprep.subr.bf16.mxu0 %v5526
    %5622 = vmatpush2.bf16.msra.mxu0 %v5525
    %5623 = vmatprep.subr.bf16.mxu0 %v5523
    %5624 = vmatpush2.bf16.msra.mxu0 %v5522
    %5625 = vmatprep.subr.bf16.mxu0 %v5520
    %5626 = vmatpush2.bf16.msra.mxu0 %v5519
    %5627 = vmatprep.subr.bf16.mxu0 %v5517
    %5628 = vmatpush2.bf16.msra.mxu0 %v5516
    %5629 = vmatprep.mubr.bf16.mxu0 %v5551
    %5630 = vmatmul.mubr.bf16.gmra.mxu0 %v5550
    %v5631 = vpop.f32.mrf.mxu0
    %v5632 = vadd.f32 %v5591, %v5631
    %v5633 = vpop.f32.mrf.mxu0
    %v5634 = vadd.f32 %v5593, %v5633
    %v5635 = vpop.f32.mrf.mxu0
    %v5636 = vpop.f32.mrf.mxu0
    %5637 = vdwg.mxu0
    %5638 = vmatprep.subr.bf16.mxu0 0
    %5639 = vmatpush1.bf16.msra.mxu0 %v5467
    %5640 = vmatprep.subr.bf16.mxu0 0
    %5641 = vmatpush1.bf16.msra.mxu0 %v5464
    %5642 = vmatprep.subr.bf16.mxu0 0
    %5643 = vmatpush1.bf16.msra.mxu0 %v5461
    %5644 = vmatprep.subr.bf16.mxu0 0
    %5645 = vmatpush1.bf16.msra.mxu0 %v5458
    %5646 = vmatprep.subr.bf16.mxu0 0
    %5647 = vmatpush1.bf16.msra.mxu0 %v5455
    %5648 = vmatprep.subr.bf16.mxu0 0
    %5649 = vmatpush1.bf16.msra.mxu0 %v5452
    %5650 = vmatprep.subr.bf16.mxu0 0
    %5651 = vmatpush1.bf16.msra.mxu0 %v5449
    %5652 = vmatprep.subr.bf16.mxu0 0
    %5653 = vmatpush1.bf16.msra.mxu0 %v5446
    %5654 = vmatprep.subr.bf16.mxu0 0
    %5655 = vmatpush2.bf16.msra.mxu0 %v5491
    %5656 = vmatprep.subr.bf16.mxu0 0
    %5657 = vmatpush2.bf16.msra.mxu0 %v5488
    %5658 = vmatprep.subr.bf16.mxu0 0
    %5659 = vmatpush2.bf16.msra.mxu0 %v5485
    %5660 = vmatprep.subr.bf16.mxu0 0
    %5661 = vmatpush2.bf16.msra.mxu0 %v5482
    %5662 = vmatprep.subr.bf16.mxu0 0
    %5663 = vmatpush2.bf16.msra.mxu0 %v5479
    %5664 = vmatprep.subr.bf16.mxu0 0
    %5665 = vmatpush2.bf16.msra.mxu0 %v5476
    %5666 = vmatprep.subr.bf16.mxu0 0
    %5667 = vmatpush2.bf16.msra.mxu0 %v5473
    %5668 = vmatprep.subr.bf16.mxu0 0
    %5669 = vmatpush2.bf16.msra.mxu0 %v5470
    %5670 = vmatprep.mubr.bf16.mxu0 %v5549
    %5671 = vmatmul.mubr.bf16.gmra.mxu0 %v5548
    %v5672 = vpop.f32.mrf.mxu0
    %v5673 = vadd.f32 0.0, %v5672
    %v5674 = vpop.f32.mrf.mxu0
    %v5675 = vpop.f32.mrf.mxu0
    %v5676 = vpop.f32.mrf.mxu0
    %5677 = vdwg.mxu0
    %5678 = vmatprep.subr.bf16.mxu0 0
    %5679 = vmatpush1.bf16.msra.mxu0 %v5515
    %5680 = vmatprep.subr.bf16.mxu0 0
    %5681 = vmatpush1.bf16.msra.mxu0 %v5512
    %5682 = vmatprep.subr.bf16.mxu0 0
    %5683 = vmatpush1.bf16.msra.mxu0 %v5509
    %5684 = vmatprep.subr.bf16.mxu0 0
    %5685 = vmatpush1.bf16.msra.mxu0 %v5506
    %5686 = vmatprep.subr.bf16.mxu0 0
    %5687 = vmatpush1.bf16.msra.mxu0 %v5503
    %5688 = vmatprep.subr.bf16.mxu0 0
    %5689 = vmatpush1.bf16.msra.mxu0 %v5500
    %5690 = vmatprep.subr.bf16.mxu0 0
    %5691 = vmatpush1.bf16.msra.mxu0 %v5497
    %5692 = vmatprep.subr.bf16.mxu0 0
    %5693 = vmatpush1.bf16.msra.mxu0 %v5494
    %5694 = vmatprep.subr.bf16.mxu0 0
    %5695 = vmatpush2.bf16.msra.mxu0 %v5539
    %5696 = vmatprep.subr.bf16.mxu0 0
    %5697 = vmatpush2.bf16.msra.mxu0 %v5536
    %5698 = vmatprep.subr.bf16.mxu0 0
    %5699 = vmatpush2.bf16.msra.mxu0 %v5533
    %5700 = vmatprep.subr.bf16.mxu0 0
    %5701 = vmatpush2.bf16.msra.mxu0 %v5530
    %5702 = vmatprep.subr.bf16.mxu0 0
    %5703 = vmatpush2.bf16.msra.mxu0 %v5527
    %5704 = vmatprep.subr.bf16.mxu0 0
    %5705 = vmatpush2.bf16.msra.mxu0 %v5524
    %5706 = vmatprep.subr.bf16.mxu0 0
    %5707 = vmatpush2.bf16.msra.mxu0 %v5521
    %5708 = vmatprep.subr.bf16.mxu0 0
    %5709 = vmatpush2.bf16.msra.mxu0 %v5518
    %5710 = vmatprep.mubr.bf16.mxu0 %v5551
    %5711 = vmatmul.mubr.bf16.gmra.mxu0 %v5550
    %v5712 = vpop.f32.mrf.mxu0
    %v5713 = vadd.f32 %v5673, %v5712
    %v5714 = vpop.f32.mrf.mxu0
    %v5715 = vpop.f32.mrf.mxu0
    %v5716 = vpop.f32.mrf.mxu0
    %5717 = vdwg.mxu0
    %s5718 = sld [smem:[#allocation2]]
    %v5719 = vstv %s5718
    %v5720 = vadd.f32 %v5632, %v5719
    %v5721 = vadd.f32 %v5634, %v5719
    %v5722 = vadd.f32 %v5713, %v5719
    %v5726 = vcombine.low %v5720, %v5721
    %v5728 = vunpack.c.l.s4 1966171168
    %v5729 = vunpack.c.0.s8 %v5728
    %v5730 = vlaneseq
    %v5731 = vshrl.u32 %v5730, 7
    %v5732 = vsub.s32 %v5729, %v5731
    %v5733 = vrot.slane %v5726, %v5732
    %v5735 = vunpack.c.l.s4 1966171168
    %v5736 = vunpack.c.0.s8 %v5735
    %v5737 = vlaneseq
    %v5738 = vshrl.u32 %v5737, 7
    %v5739 = vsub.s32 %v5736, %v5738
    %v5740 = vrot.slane %v5722, %v5739
    %v5741 = vcombine.low %v5733, %v5740
    %v5743 = vunpack.c.l.s4 1966171168
    %v5744 = vunpack.c.0.s8 %v5743
    %v5745 = vlaneseq
    %v5746 = vshrl.u32 %v5745, 7
    %v5747 = vsub.s32 %v5744, %v5746
    %v5748 = vrot.slane %v5741, %v5747
    %v5750 = vlaneseq
    %vm5751 = vcmp.ge.s32.totalorder %v5750, 0
    %vm5752 = vcmp.lt.s32.totalorder %v5750, 384
    %vm5753 = vmand %vm5751, %vm5752
    %5754 = vst.msk [vmem:[#allocation6] sm:$0x7] %vm5753, %v5748
    // Predicated region
    $region30: #{tpu_custom_call.1} parent=1 // pred_check
      _
    $region31: #{tpu_custom_call.1} parent=1 // pred_check_branch
      %5756 = sbr.rel (0) target = $region33
    $region32: #{tpu_custom_call.1} parent=1 // pred_region
      %s5758 = ssub.s32 48, 48
      %5759 = vsyncadd [#allocation5], %s5758
      %s5761 = sshll.u32 [#allocation6], 4
      %s5762 = int_to_ptr.vmem [resolvable:$true] %s5761
      %5764 = dma.vmem_to_hbm [thread:$0]  %s5762, 48, %s6, [#allocation5]
    $region33: #{tpu_custom_call.1} parent=1 // pred_fallthru
      _
    // Predicated region
    $region34: #{tpu_custom_call.1} parent=1 // pred_check
      _
    $region35: #{tpu_custom_call.1} parent=1 // pred_check_branch
      %5766 = sbr.rel (0) target = $region37
    $region36: #{tpu_custom_call.1} parent=1 // pred_region
      %5767 = dma.done [#allocation5], 48
    $region37: #{tpu_custom_call.1} parent=1 // pred_fallthru
      _
    %5768 = vsyncpa [#allocation4], 1
    %5769 = vsyncpa [#allocation5], 1

</llo_original>
